<compile_context>
chip_gen: v6e
topology: v6e:2x2x1
jax: 0.10.0
libtpu: 0.0.40
codegen_flags: <defaults>
</compile_context>

<pallas_src>
import math
import jax
import jax.numpy as jnp
from jax.experimental import pallas as pl
from jax.experimental.pallas import tpu as pltpu


# --------------------------------- helpers -----------------------------------

def _round_up(v, m):
    return ((v + m - 1) // m) * m


def _elu(x):
    # NaN/inf-safe ELU in f32 (exp on EUP, select on VPU).
    return jnp.where(x > 0, x, jnp.exp(jnp.minimum(x, 0.0)) - 1.0)


def sinusoidal_pos_emb(t, num_steps, dim, rescale=4):
    # faithful to the PyTorch helper: x / num_steps * num_steps * rescale
    t = t / num_steps * num_steps * rescale
    half_dim = dim // 2
    emb = math.log(10000.0) / (half_dim - 1)
    emb = jnp.exp(jnp.arange(half_dim, dtype=jnp.float32) * -emb)
    emb = t[:, None] * emb[None, :]
    return jnp.concatenate([jnp.sin(emb), jnp.cos(emb)], axis=-1)


# ------------------------------- Pallas kernel -------------------------------

def _make_kernel(depth, nfeat, nhid, pe_dim):
    """Kernel refs, in order:
       t(T,1) f32, x(T, nfeat+pe_dim) bf16, q(T, nhid) bf16, freqs(1,64) f32,
       tw1(128,128) bf16, tb1(1,128) f32, tw2(128,nhid) bf16, tb2(1,nhid) f32,
       w0x(nfeat,nhid) bf16, wq_all(nhid,L*nhid) bf16, wpe_all(pe_dim,L*nhid) bf16,
       b_all(1,L*nhid) f32, wh_1..wh_depth (nhid,nhid) bf16, out(T,nhid) f32
    where L = depth + 1.
    """
    f32 = jnp.float32
    bf16 = jnp.bfloat16

    def kernel(t_ref, x_ref, q_ref, freq_ref,
               tw1_ref, tb1_ref, tw2_ref, tb2_ref,
               w0x_ref, wq_ref, wpe_ref, ball_ref, *rest):
        out_ref = rest[-1]
        wh_refs = rest[:-1]                     # W1_h .. Wdepth_h
        T = out_ref.shape[0]

        # --- sinusoidal time embedding in-kernel (4 B/row streamed, not 512) ---
        emb = t_ref[...] * freq_ref[...]                                 # (T,64)
        temb = jnp.concatenate([jnp.sin(emb), jnp.cos(emb)], axis=-1)    # (T,128)

        # --- time MLP: Linear(128,128) -> ELU -> Linear(128, nhid) ---
        h = jnp.dot(temb.astype(bf16), tw1_ref[...],
                    preferred_element_type=f32) + tb1_ref[...]
        h = _elu(h)
        tvec = jnp.dot(h.astype(bf16), tw2_ref[...],
                       preferred_element_type=f32) + tb2_ref[...]        # (T,nhid)

        # --- streamed activations (already bf16) ---
        xq = x_ref[...]                       # (T, nfeat+pe_dim)
        xf = xq[:, :nfeat]
        pe = xq[:, nfeat:]
        q = q_ref[...]                        # (T, nhid)

        # --- hoisted loop-invariant contributions (one wide matmul each) ---
        qW = jnp.dot(q, wq_ref[...], preferred_element_type=f32)     # (T, L*nhid)
        peW = jnp.dot(pe, wpe_ref[...], preferred_element_type=f32)  # (T, L*nhid)
        b_all = ball_ref[...]
        inv_c = qW + peW + b_all              # conditional: x, pe active
        inv_u = qW + b_all                    # unconditional: x = 0, pe = 0

        # --- layer 0 (x piece runs on the T conditional rows only) ---
        h_c = (jnp.dot(xf, w0x_ref[...], preferred_element_type=f32)
               + inv_c[:, :nhid] + tvec)
        h_u = inv_u[:, :nhid] + tvec

        # --- row-stacked (cond|uncond) chain: one K=nhid matmul per layer ---
        h2 = jnp.concatenate([h_c, h_u], axis=0)          # (2T, nhid) f32
        tvec2 = jnp.concatenate([tvec, tvec], axis=0)
        inv2 = jnp.concatenate([inv_c, inv_u], axis=0)    # (2T, L*nhid)

        for i in range(1, depth):
            h2 = (jnp.dot(h2.astype(bf16), wh_refs[i - 1][...],
                          preferred_element_type=f32)
                  + inv2[:, i * nhid:(i + 1) * nhid] + tvec2)

        y2 = (jnp.dot(h2.astype(bf16), wh_refs[depth - 1][...],
                      preferred_element_type=f32)
              + inv2[:, depth * nhid:(depth + 1) * nhid])  # (2T, nhid), no tvec

        # guidance: 2*(y_cond - y_uncond) + y_uncond
        out_ref[...] = 2.0 * y2[:T, :] - y2[T:, :]

    return kernel


# --------------------------------- wrapper -----------------------------------

def denoising_forward(params, x_full, q_y_sample, adj, t, num_steps,
                      *, nfeat, nhid, pe_dim, depth,
                      tile_n=None, mxu_dtype=jnp.bfloat16, rescale=4):
    del adj  # unused by the PyTorch forward as well
    N = x_full.shape[0]
    L = depth + 1

    if tile_n is None:
        # Large tiles amortize the ~0.35 us/grid-step overhead (mem-bound kernel);
        # per-step working set at 512 rows is ~1-2 MiB, far below scoped VMEM on
        # v5e/v6e/v7x. On v7x, pass tile_n <= n_rows/2 explicitly to shard the
        # "parallel" axis over both TensorCores.
        tile_n = min(512, _round_up(max(N, 8), 8))
    tile_n = max(8, _round_up(tile_n, 8))     # (8,128) block-shape rule

    # pre-scaled t column (matches SinusoidalPosEmb's x/num_steps*num_steps*rescale)
    t_scaled = (t.astype(jnp.float32) / num_steps * num_steps * rescale)[:, None]
    half = 64
    freqs = jnp.exp(jnp.arange(half, dtype=jnp.float32)
                    * (-math.log(10000.0) / (half - 1)))[None, :]        # (1, 64)

    # pad rows so the row count is a multiple of tile_n (pad rows discarded)
    n_pad = (-N) % tile_n
    if n_pad:
        x_full = jnp.pad(x_full, ((0, n_pad), (0, 0)))
        q_y_sample = jnp.pad(q_y_sample, ((0, n_pad), (0, 0)))
        t_scaled = jnp.pad(t_scaled, ((0, n_pad), (0, 0)))
    n_rows = N + n_pad

    # streamed activations in bf16 (MXU operands only) -> half the HBM read bytes
    x_bf = x_full.astype(mxu_dtype)
    q_bf = q_y_sample.astype(mxu_dtype)

    tw1, tb1, tw2, tb2 = params["time_mlp"]
    tw1 = tw1.astype(mxu_dtype)
    tw2 = tw2.astype(mxu_dtype)

    # split each layer weight into [x/h | q | pe] row blocks; hoist q/pe/b columns
    Ws = params["layers"]
    w0x = Ws[0][0][:nfeat].astype(mxu_dtype)                 # (nfeat, nhid)
    wq_cols, wpe_cols, b_cols, wh_list = [], [], [], []
    for i in range(L):
        W, b = Ws[i]
        r0 = nfeat if i == 0 else nhid
        wq_cols.append(W[r0:r0 + nhid])
        wpe_cols.append(W[r0 + nhid:])
        b_cols.append(b)
        if i >= 1:
            wh_list.append(W[:nhid].astype(mxu_dtype))       # (nhid, nhid)
    wq_all = jnp.concatenate(wq_cols, axis=1).astype(mxu_dtype)    # (nhid, L*nhid)
    wpe_all = jnp.concatenate(wpe_cols, axis=1).astype(mxu_dtype)  # (pe_dim, L*nhid)
    b_all = jnp.concatenate(b_cols, axis=1)                        # (1, L*nhid) f32

    kernel = _make_kernel(depth, nfeat, nhid, pe_dim)

    def row_spec(d):
        return pl.BlockSpec((tile_n, d), lambda i: (i, 0))

    def full_spec(shape):
        # constant block index -> Pallas does not re-DMA these per grid step
        return pl.BlockSpec(shape, lambda i, _n=len(shape): (0,) * _n)

    in_specs = [
        row_spec(1), row_spec(nfeat + pe_dim), row_spec(nhid),
        full_spec(freqs.shape),
        full_spec(tw1.shape), full_spec(tb1.shape),
        full_spec(tw2.shape), full_spec(tb2.shape),
        full_spec(w0x.shape), full_spec(wq_all.shape),
        full_spec(wpe_all.shape), full_spec(b_all.shape),
    ]
    args = [t_scaled, x_bf, q_bf, freqs, tw1, tb1, tw2, tb2,
            w0x, wq_all, wpe_all, b_all]
    for wh in wh_list:
        in_specs.append(full_spec(wh.shape))
        args.append(wh)

    # advisory cost estimate for XLA scheduling of surrounding glue
    flops = int(n_rows) * 2 * (128 * 128 + 128 * nhid          # time MLP
                               + nhid * L * nhid               # q invariant
                               + pe_dim * L * nhid             # pe invariant
                               + nfeat * nhid                  # layer-0 x piece
                               + 2 * depth * nhid * nhid)      # stacked chain
    transcend = int(n_rows) * (2 * 64 + 128)                   # sin/cos + ELU exp
    weight_bytes = sum(int(a.size) * a.dtype.itemsize
                       for a in [freqs, tw1, tb1, tw2, tb2, w0x,
                                 wq_all, wpe_all, b_all] + wh_list)
    bytes_accessed = (int(n_rows) * (4 + 2 * (nfeat + pe_dim) + 2 * nhid + 4 * nhid)
                      + weight_bytes)
    ce = pl.CostEstimate(flops=flops, transcendentals=transcend,
                         bytes_accessed=bytes_accessed)

    out = pl.pallas_call(
        kernel,
        out_shape=jax.ShapeDtypeStruct((n_rows, nhid), jnp.float32),
        grid=(n_rows // tile_n,),
        in_specs=in_specs,
        out_specs=row_spec(nhid),
        compiler_params=pltpu.CompilerParams(
            dimension_semantics=("parallel",)),
        cost_estimate=ce,
    )(*args)
    return out[:N] if n_pad else out


# ----------------------------- parameter setup -------------------------------

def init_params(key, nfeat, nhid, pe_dim, depth):
    nlabel = nhid  # the module overrides nlabel = nhid in __init__

    def linear(key, fan_in, fan_out):
        k1, k2 = jax.random.split(key)
        a = math.sqrt(6.0 / (fan_in + fan_out))          # xavier_uniform_
        W = jax.random.uniform(k1, (fan_in, fan_out), jnp.float32, -a, a)
        bb = 1.0 / math.sqrt(fan_in)                     # default bias init
        b = jax.random.uniform(k2, (1, fan_out), jnp.float32, -bb, bb)
        return W, b

    keys = jax.random.split(key, depth + 1 + 2)
    layers = []
    for i in range(depth):
        fin = (nfeat if i == 0 else nhid) + nlabel + pe_dim
        layers.append(linear(keys[i], fin, nhid))
    layers.append(linear(keys[depth], nhid + nlabel + pe_dim, nlabel))

    tw1, tb1 = linear(keys[depth + 1], 128, 128)
    tw2, tb2 = linear(keys[depth + 2], 128, nhid)
    return {"layers": layers, "time_mlp": (tw1, tb1, tw2, tb2)}


# ----------------------------- pure-JAX reference ----------------------------

def reference_forward(params, x_full, q_y, t, num_steps, *, pe_dim, depth):
    temb = sinusoidal_pos_emb(t.astype(jnp.float32), num_steps, 128)
    tw1, tb1, tw2, tb2 = params["time_mlp"]
    tvec = _elu(temb @ tw1 + tb1) @ tw2 + tb2
    xf = x_full[:, :-pe_dim]
    pe = x_full[:, -pe_dim:]
    Ls = params["layers"]

    def branch(x0, pe_use):
        x = jnp.concatenate([x0, q_y, pe_use], axis=-1)
        for i in range(depth):
            h = x @ Ls[i][0] + Ls[i][1] + tvec
            x = jnp.concatenate([h, q_y, pe_use], axis=-1)
        return x @ Ls[depth][0] + Ls[depth][1]

    py = branch(xf, pe)
    pu = branch(jnp.zeros_like(xf), jnp.zeros_like(pe))
    return 2.0 * (py - pu) + pu


# ------------------------------------ main ------------------------------------

if __name__ == "__main__":
    # module config: model='GCNConv', data='citeseer' (-> pe_dim=64),
    # num_layers=2, nhid=32, nfeat=32, nlabel := nhid
    nfeat, nhid, pe_dim, depth = 32, 32, 64, 2
    N, num_steps = 128, 1000

    key = jax.random.PRNGKey(0)
    kp, kx, kq, kt = jax.random.split(key, 4)

    params = init_params(kp, nfeat, nhid, pe_dim, depth)
    x_full = jax.random.normal(kx, (N, nfeat + pe_dim), jnp.float32)
    q_y = jax.random.normal(kq, (N, nhid), jnp.float32)
    adj = jnp.zeros((N, N), jnp.float32)                     # unused by forward
    t = jax.random.randint(kt, (N,), 0, num_steps).astype(jnp.float32)

    out = denoising_forward(params, x_full, q_y, adj, t, num_steps,
                            nfeat=nfeat, nhid=nhid, pe_dim=pe_dim, depth=depth)
    out = jax.block_until_ready(out)

    ref = reference_forward(params, x_full, q_y, t, num_steps,
                            pe_dim=pe_dim, depth=depth)
    assert out.shape == (N, nhid)
    # tolerance reflects bf16 MXU inputs (f32 accumulation) vs. pure-f32 reference
    assert bool(jnp.allclose(out, ref, rtol=5e-2, atol=5e-2)), "mismatch vs reference"

    print("KERNEL_OK")
</pallas_src>

<mosaic_0001>
module attributes {stable_mosaic.version = 11 : i64} {
  func.func @kernel(%arg0: i32, %arg1: memref<128x1xf32, #tpu.memory_space<vmem>>, %arg2: memref<128x96xbf16, #tpu.memory_space<vmem>>, %arg3: memref<128x32xbf16, #tpu.memory_space<vmem>>, %arg4: memref<1x64xf32, #tpu.memory_space<vmem>>, %arg5: memref<128x128xbf16, #tpu.memory_space<vmem>>, %arg6: memref<1x128xf32, #tpu.memory_space<vmem>>, %arg7: memref<128x32xbf16, #tpu.memory_space<vmem>>, %arg8: memref<1x32xf32, #tpu.memory_space<vmem>>, %arg9: memref<32x32xbf16, #tpu.memory_space<vmem>>, %arg10: memref<32x96xbf16, #tpu.memory_space<vmem>>, %arg11: memref<64x96xbf16, #tpu.memory_space<vmem>>, %arg12: memref<1x96xf32, #tpu.memory_space<vmem>>, %arg13: memref<32x32xbf16, #tpu.memory_space<vmem>>, %arg14: memref<32x32xbf16, #tpu.memory_space<vmem>>, %arg15: memref<128x32xf32, #tpu.memory_space<vmem>>) attributes {dimension_semantics = [#tpu.dimension_semantics<parallel>], iteration_bounds = array<i64: 1>, scalar_prefetch = 0 : i64, scratch_operands = 0 : i64, tpu.core_type = #tpu.core_type<tc>, window_params = [{transform_indices = @transform_0, window_bounds = array<i64: 128, 1>}, {transform_indices = @transform_1, window_bounds = array<i64: 128, 96>}, {transform_indices = @transform_2, window_bounds = array<i64: 128, 32>}, {pipeline_mode = #tpu.pipeline_mode<synchronous>, transform_indices = @transform_3, window_bounds = array<i64: 1, 64>}, {pipeline_mode = #tpu.pipeline_mode<synchronous>, transform_indices = @transform_4, window_bounds = array<i64: 128, 128>}, {pipeline_mode = #tpu.pipeline_mode<synchronous>, transform_indices = @transform_5, window_bounds = array<i64: 1, 128>}, {pipeline_mode = #tpu.pipeline_mode<synchronous>, transform_indices = @transform_6, window_bounds = array<i64: 128, 32>}, {pipeline_mode = #tpu.pipeline_mode<synchronous>, transform_indices = @transform_7, window_bounds = array<i64: 1, 32>}, {pipeline_mode = #tpu.pipeline_mode<synchronous>, transform_indices = @transform_8, window_bounds = array<i64: 32, 32>}, {pipeline_mode = #tpu.pipeline_mode<synchronous>, transform_indices = @transform_9, window_bounds = array<i64: 32, 96>}, {pipeline_mode = #tpu.pipeline_mode<synchronous>, transform_indices = @transform_10, window_bounds = array<i64: 64, 96>}, {pipeline_mode = #tpu.pipeline_mode<synchronous>, transform_indices = @transform_11, window_bounds = array<i64: 1, 96>}, {pipeline_mode = #tpu.pipeline_mode<synchronous>, transform_indices = @transform_12, window_bounds = array<i64: 32, 32>}, {pipeline_mode = #tpu.pipeline_mode<synchronous>, transform_indices = @transform_13, window_bounds = array<i64: 32, 32>}, {transform_indices = @transform_14, window_bounds = array<i64: 128, 32>}]} {
    %c0 = arith.constant 0 : index
    %c0_0 = arith.constant 0 : index
    %0 = vector.load %arg1[%c0, %c0_0] : memref<128x1xf32, #tpu.memory_space<vmem>>, vector<128x1xf32>
    %c0_1 = arith.constant 0 : index
    %c0_2 = arith.constant 0 : index
    %1 = vector.load %arg4[%c0_1, %c0_2] : memref<1x64xf32, #tpu.memory_space<vmem>>, vector<1x64xf32>
    %2 = vector.broadcast %0 : vector<128x1xf32> to vector<128x64xf32>
    %3 = vector.broadcast %1 : vector<1x64xf32> to vector<128x64xf32>
    %4 = arith.mulf %2, %3 : vector<128x64xf32>
    %5 = math.sin %4 : vector<128x64xf32>
    %6 = math.cos %4 : vector<128x64xf32>
    %7 = tpu.concatenate %5, %6 in 1 : vector<128x64xf32>, vector<128x64xf32> -> vector<128x128xf32>
    %8 = arith.truncf %7 : vector<128x128xf32> to vector<128x128xbf16>
    %c0_3 = arith.constant 0 : index
    %c0_4 = arith.constant 0 : index
    %9 = vector.load %arg5[%c0_3, %c0_4] : memref<128x128xbf16, #tpu.memory_space<vmem>>, vector<128x128xbf16>
    %cst = arith.constant dense<0.000000e+00> : vector<128x128xf32>
    %10 = tpu.matmul %8, %9, %cst {dimension_numbers = #tpu.dot_dimension_numbers<[1], [0], [0], [1], [0, 0, 1, 1], [], []>} : vector<128x128xbf16>, vector<128x128xbf16>, vector<128x128xf32> -> vector<128x128xf32>
    %c0_5 = arith.constant 0 : index
    %c0_6 = arith.constant 0 : index
    %11 = vector.load %arg6[%c0_5, %c0_6] : memref<1x128xf32, #tpu.memory_space<vmem>>, vector<1x128xf32>
    %12 = vector.broadcast %11 : vector<1x128xf32> to vector<128x128xf32>
    %13 = arith.addf %10, %12 : vector<128x128xf32>
    %cst_7 = arith.constant 0.000000e+00 : f32
    %14 = vector.broadcast %cst_7 : f32 to vector<128x128xf32>
    %15 = arith.cmpf ogt, %13, %14 : vector<128x128xf32>
    %cst_8 = arith.constant 0.000000e+00 : f32
    %16 = vector.broadcast %cst_8 : f32 to vector<128x128xf32>
    %17 = arith.minimumf %13, %16 : vector<128x128xf32>
    %18 = math.exp %17 : vector<128x128xf32>
    %cst_9 = arith.constant 1.000000e+00 : f32
    %19 = vector.broadcast %cst_9 : f32 to vector<128x128xf32>
    %20 = arith.subf %18, %19 : vector<128x128xf32>
    %21 = arith.select %15, %13, %20 : vector<128x128xi1>, vector<128x128xf32>
    %22 = arith.truncf %21 : vector<128x128xf32> to vector<128x128xbf16>
    %c0_10 = arith.constant 0 : index
    %c0_11 = arith.constant 0 : index
    %23 = vector.load %arg7[%c0_10, %c0_11] : memref<128x32xbf16, #tpu.memory_space<vmem>>, vector<128x32xbf16>
    %cst_12 = arith.constant dense<0.000000e+00> : vector<128x32xf32>
    %24 = tpu.matmul %22, %23, %cst_12 {dimension_numbers = #tpu.dot_dimension_numbers<[1], [0], [0], [1], [0, 0, 1, 1], [], []>} : vector<128x128xbf16>, vector<128x32xbf16>, vector<128x32xf32> -> vector<128x32xf32>
    %c0_13 = arith.constant 0 : index
    %c0_14 = arith.constant 0 : index
    %25 = vector.load %arg8[%c0_13, %c0_14] : memref<1x32xf32, #tpu.memory_space<vmem>>, vector<1x32xf32>
    %26 = vector.broadcast %25 : vector<1x32xf32> to vector<128x32xf32>
    %27 = arith.addf %24, %26 : vector<128x32xf32>
    %c0_15 = arith.constant 0 : index
    %c0_16 = arith.constant 0 : index
    %28 = vector.load %arg2[%c0_15, %c0_16] : memref<128x96xbf16, #tpu.memory_space<vmem>>, vector<128x96xbf16>
    %29 = vector.extract_strided_slice %28 {offsets = [0, 0], sizes = [128, 32], strides = [1, 1]} : vector<128x96xbf16> to vector<128x32xbf16>
    %30 = vector.extract_strided_slice %28 {offsets = [0, 32], sizes = [128, 64], strides = [1, 1]} : vector<128x96xbf16> to vector<128x64xbf16>
    %c0_17 = arith.constant 0 : index
    %c0_18 = arith.constant 0 : index
    %31 = vector.load %arg3[%c0_17, %c0_18] : memref<128x32xbf16, #tpu.memory_space<vmem>>, vector<128x32xbf16>
    %c0_19 = arith.constant 0 : index
    %c0_20 = arith.constant 0 : index
    %32 = vector.load %arg10[%c0_19, %c0_20] : memref<32x96xbf16, #tpu.memory_space<vmem>>, vector<32x96xbf16>
    %cst_21 = arith.constant dense<0.000000e+00> : vector<128x96xf32>
    %33 = tpu.matmul %31, %32, %cst_21 {dimension_numbers = #tpu.dot_dimension_numbers<[1], [0], [0], [1], [0, 0, 1, 1], [], []>} : vector<128x32xbf16>, vector<32x96xbf16>, vector<128x96xf32> -> vector<128x96xf32>
    %c0_22 = arith.constant 0 : index
    %c0_23 = arith.constant 0 : index
    %34 = vector.load %arg11[%c0_22, %c0_23] : memref<64x96xbf16, #tpu.memory_space<vmem>>, vector<64x96xbf16>
    %cst_24 = arith.constant dense<0.000000e+00> : vector<128x96xf32>
    %35 = tpu.matmul %30, %34, %cst_24 {dimension_numbers = #tpu.dot_dimension_numbers<[1], [0], [0], [1], [0, 0, 1, 1], [], []>} : vector<128x64xbf16>, vector<64x96xbf16>, vector<128x96xf32> -> vector<128x96xf32>
    %c0_25 = arith.constant 0 : index
    %c0_26 = arith.constant 0 : index
    %36 = vector.load %arg12[%c0_25, %c0_26] : memref<1x96xf32, #tpu.memory_space<vmem>>, vector<1x96xf32>
    %37 = arith.addf %33, %35 : vector<128x96xf32>
    %38 = vector.broadcast %36 : vector<1x96xf32> to vector<128x96xf32>
    %39 = arith.addf %37, %38 : vector<128x96xf32>
    %40 = vector.broadcast %36 : vector<1x96xf32> to vector<128x96xf32>
    %41 = arith.addf %33, %40 : vector<128x96xf32>
    %c0_27 = arith.constant 0 : index
    %c0_28 = arith.constant 0 : index
    %42 = vector.load %arg9[%c0_27, %c0_28] : memref<32x32xbf16, #tpu.memory_space<vmem>>, vector<32x32xbf16>
    %cst_29 = arith.constant dense<0.000000e+00> : vector<128x32xf32>
    %43 = tpu.matmul %29, %42, %cst_29 {dimension_numbers = #tpu.dot_dimension_numbers<[1], [0], [0], [1], [0, 0, 1, 1], [], []>} : vector<128x32xbf16>, vector<32x32xbf16>, vector<128x32xf32> -> vector<128x32xf32>
    %44 = vector.extract_strided_slice %39 {offsets = [0, 0], sizes = [128, 32], strides = [1, 1]} : vector<128x96xf32> to vector<128x32xf32>
    %45 = arith.addf %43, %44 : vector<128x32xf32>
    %46 = arith.addf %45, %27 : vector<128x32xf32>
    %47 = vector.extract_strided_slice %41 {offsets = [0, 0], sizes = [128, 32], strides = [1, 1]} : vector<128x96xf32> to vector<128x32xf32>
    %48 = arith.addf %47, %27 : vector<128x32xf32>
    %49 = tpu.concatenate %46, %48 in 0 : vector<128x32xf32>, vector<128x32xf32> -> vector<256x32xf32>
    %50 = tpu.concatenate %27, %27 in 0 : vector<128x32xf32>, vector<128x32xf32> -> vector<256x32xf32>
    %51 = tpu.concatenate %39, %41 in 0 : vector<128x96xf32>, vector<128x96xf32> -> vector<256x96xf32>
    %52 = arith.truncf %49 : vector<256x32xf32> to vector<256x32xbf16>
    %c0_30 = arith.constant 0 : index
    %c0_31 = arith.constant 0 : index
    %53 = vector.load %arg13[%c0_30, %c0_31] : memref<32x32xbf16, #tpu.memory_space<vmem>>, vector<32x32xbf16>
    %cst_32 = arith.constant dense<0.000000e+00> : vector<256x32xf32>
    %54 = tpu.matmul %52, %53, %cst_32 {dimension_numbers = #tpu.dot_dimension_numbers<[1], [0], [0], [1], [0, 0, 1, 1], [], []>} : vector<256x32xbf16>, vector<32x32xbf16>, vector<256x32xf32> -> vector<256x32xf32>
    %55 = vector.extract_strided_slice %51 {offsets = [0, 32], sizes = [256, 32], strides = [1, 1]} : vector<256x96xf32> to vector<256x32xf32>
    %56 = arith.addf %54, %55 : vector<256x32xf32>
    %57 = arith.addf %56, %50 : vector<256x32xf32>
    %58 = arith.truncf %57 : vector<256x32xf32> to vector<256x32xbf16>
    %c0_33 = arith.constant 0 : index
    %c0_34 = arith.constant 0 : index
    %59 = vector.load %arg14[%c0_33, %c0_34] : memref<32x32xbf16, #tpu.memory_space<vmem>>, vector<32x32xbf16>
    %cst_35 = arith.constant dense<0.000000e+00> : vector<256x32xf32>
    %60 = tpu.matmul %58, %59, %cst_35 {dimension_numbers = #tpu.dot_dimension_numbers<[1], [0], [0], [1], [0, 0, 1, 1], [], []>} : vector<256x32xbf16>, vector<32x32xbf16>, vector<256x32xf32> -> vector<256x32xf32>
    %61 = vector.extract_strided_slice %51 {offsets = [0, 64], sizes = [256, 32], strides = [1, 1]} : vector<256x96xf32> to vector<256x32xf32>
    %62 = arith.addf %60, %61 : vector<256x32xf32>
    %63 = vector.extract_strided_slice %62 {offsets = [0, 0], sizes = [128, 32], strides = [1, 1]} : vector<256x32xf32> to vector<128x32xf32>
    %cst_36 = arith.constant 2.000000e+00 : f32
    %64 = vector.broadcast %cst_36 : f32 to vector<128x32xf32>
    %65 = arith.mulf %64, %63 : vector<128x32xf32>
    %66 = vector.extract_strided_slice %62 {offsets = [128, 0], sizes = [128, 32], strides = [1, 1]} : vector<256x32xf32> to vector<128x32xf32>
    %67 = arith.subf %65, %66 : vector<128x32xf32>
    %c0_37 = arith.constant 0 : index
    %c0_38 = arith.constant 0 : index
    %68 = vector.load %arg15[%c0_37, %c0_38] : memref<128x32xf32, #tpu.memory_space<vmem>>, vector<128x32xf32>
    tpu.vector_store %arg15[%c0_37, %c0_38], %67 {strides = array<i32>} : memref<128x32xf32, #tpu.memory_space<vmem>>, vector<128x32xf32>,
    return
  }
  func.func @transform_0(%arg0: i32) -> (i32, i32) {
    %c0_i32 = arith.constant 0 : i32
    %c0_i32_0 = arith.constant 0 : i32
    return %arg0, %c0_i32 : i32, i32
  }
  func.func @transform_1(%arg0: i32) -> (i32, i32) {
    %c0_i32 = arith.constant 0 : i32
    %c0_i32_0 = arith.constant 0 : i32
    return %arg0, %c0_i32 : i32, i32
  }
  func.func @transform_2(%arg0: i32) -> (i32, i32) {
    %c0_i32 = arith.constant 0 : i32
    %c0_i32_0 = arith.constant 0 : i32
    return %arg0, %c0_i32 : i32, i32
  }
  func.func @transform_3(%arg0: i32) -> (i32, i32) {
    %c0_i32 = arith.constant 0 : i32
    %c0_i32_0 = arith.constant 0 : i32
    %c0_i32_1 = arith.constant 0 : i32
    return %c0_i32, %c0_i32_0 : i32, i32
  }
  func.func @transform_4(%arg0: i32) -> (i32, i32) {
    %c0_i32 = arith.constant 0 : i32
    %c0_i32_0 = arith.constant 0 : i32
    %c0_i32_1 = arith.constant 0 : i32
    return %c0_i32, %c0_i32_0 : i32, i32
  }
  func.func @transform_5(%arg0: i32) -> (i32, i32) {
    %c0_i32 = arith.constant 0 : i32
    %c0_i32_0 = arith.constant 0 : i32
    %c0_i32_1 = arith.constant 0 : i32
    return %c0_i32, %c0_i32_0 : i32, i32
  }
  func.func @transform_6(%arg0: i32) -> (i32, i32) {
    %c0_i32 = arith.constant 0 : i32
    %c0_i32_0 = arith.constant 0 : i32
    %c0_i32_1 = arith.constant 0 : i32
    return %c0_i32, %c0_i32_0 : i32, i32
  }
  func.func @transform_7(%arg0: i32) -> (i32, i32) {
    %c0_i32 = arith.constant 0 : i32
    %c0_i32_0 = arith.constant 0 : i32
    %c0_i32_1 = arith.constant 0 : i32
    return %c0_i32, %c0_i32_0 : i32, i32
  }
  func.func @transform_8(%arg0: i32) -> (i32, i32) {
    %c0_i32 = arith.constant 0 : i32
    %c0_i32_0 = arith.constant 0 : i32
    %c0_i32_1 = arith.constant 0 : i32
    return %c0_i32, %c0_i32_0 : i32, i32
  }
  func.func @transform_9(%arg0: i32) -> (i32, i32) {
    %c0_i32 = arith.constant 0 : i32
    %c0_i32_0 = arith.constant 0 : i32
    %c0_i32_1 = arith.constant 0 : i32
    return %c0_i32, %c0_i32_0 : i32, i32
  }
  func.func @transform_10(%arg0: i32) -> (i32, i32) {
    %c0_i32 = arith.constant 0 : i32
    %c0_i32_0 = arith.constant 0 : i32
    %c0_i32_1 = arith.constant 0 : i32
    return %c0_i32, %c0_i32_0 : i32, i32
  }
  func.func @transform_11(%arg0: i32) -> (i32, i32) {
    %c0_i32 = arith.constant 0 : i32
    %c0_i32_0 = arith.constant 0 : i32
    %c0_i32_1 = arith.constant 0 : i32
    return %c0_i32, %c0_i32_0 : i32, i32
  }
  func.func @transform_12(%arg0: i32) -> (i32, i32) {
    %c0_i32 = arith.constant 0 : i32
    %c0_i32_0 = arith.constant 0 : i32
    %c0_i32_1 = arith.constant 0 : i32
    return %c0_i32, %c0_i32_0 : i32, i32
  }
  func.func @transform_13(%arg0: i32) -> (i32, i32) {
    %c0_i32 = arith.constant 0 : i32
    %c0_i32_0 = arith.constant 0 : i32
    %c0_i32_1 = arith.constant 0 : i32
    return %c0_i32, %c0_i32_0 : i32, i32
  }
  func.func @transform_14(%arg0: i32) -> (i32, i32) {
    %c0_i32 = arith.constant 0 : i32
    %c0_i32_0 = arith.constant 0 : i32
    return %arg0, %c0_i32 : i32, i32
  }
}

</mosaic_0001>

<llo_original>
// kernel: tpu_custom_call.1
$region0: #{tpu_custom_call.1}
  #allocation0 [shape = 'u32[]', space=smem, size = 0x4, offset = 0x4, fixed_abs, tag = 'smem constant byte address 0x4 - core index']
  #allocation1 [shape = 'u32[144,128]{1,0:T(1,128)}', space=vmem, size = 0x12000, scoped, tag = 'internal scratch']
  %s0 = inlined_call_operand.vmem [shape: f32[128,1], index: 0, kind: input, shape index: {}]
  %s1 = inlined_call_operand.vmem [shape: bf16[128,96], index: 1, kind: input, shape index: {}]
  %s2 = inlined_call_operand.vmem [shape: bf16[128,32], index: 2, kind: input, shape index: {}]
  %s3 = inlined_call_operand.vmem [shape: f32[1,64], index: 3, kind: input, shape index: {}]
  %s4 = inlined_call_operand.vmem [shape: bf16[128,128], index: 4, kind: input, shape index: {}]
  %s5 = inlined_call_operand.vmem [shape: f32[1,128], index: 5, kind: input, shape index: {}]
  %s6 = inlined_call_operand.vmem [shape: bf16[128,32], index: 6, kind: input, shape index: {}]
  %s7 = inlined_call_operand.vmem [shape: f32[1,32], index: 7, kind: input, shape index: {}]
  %s8 = inlined_call_operand.vmem [shape: bf16[32,32], index: 8, kind: input, shape index: {}]
  %s9 = inlined_call_operand.vmem [shape: bf16[32,96], index: 9, kind: input, shape index: {}]
  %s10 = inlined_call_operand.vmem [shape: bf16[64,96], index: 10, kind: input, shape index: {}]
  %s11 = inlined_call_operand.vmem [shape: f32[1,96], index: 11, kind: input, shape index: {}]
  %s12 = inlined_call_operand.vmem [shape: bf16[32,32], index: 12, kind: input, shape index: {}]
  %s13 = inlined_call_operand.vmem [shape: bf16[32,32], index: 13, kind: input, shape index: {}]
  %s14 = inlined_call_operand.vmem [shape: f32[128,32], index: 14, kind: output, shape index: {}]
  %s15 = sld [smem:[#allocation0]]
  $region66: #{tpu_custom_call.1} parent=0
    _
  %s17 = ssub.s32 1, %s15
  %s18 = scalar_select 0, %s17, %s15
  // Predicated region
  $region2: #{tpu_custom_call.1} parent=0 // pred_check
    _
  $region3: #{tpu_custom_call.1} parent=0 // pred_check_branch
    %20 = sbr.rel (0) target = $region5
  $region4: #{tpu_custom_call.1} parent=0 // pred_region
    _
  $region5: #{tpu_custom_call.1} parent=0 // pred_fallthru
    _
  // Predicated region
  $region6: #{tpu_custom_call.1} parent=0 // pred_check
    _
  $region7: #{tpu_custom_call.1} parent=0 // pred_check_branch
    %22 = sbr.rel (0) target = $region9
  $region8: #{tpu_custom_call.1} parent=0 // pred_region
    _
  $region9: #{tpu_custom_call.1} parent=0 // pred_fallthru
    _
  // Predicated region
  $region10: #{tpu_custom_call.1} parent=0 // pred_check
    _
  $region11: #{tpu_custom_call.1} parent=0 // pred_check_branch
    %24 = sbr.rel (0) target = $region13
  $region12: #{tpu_custom_call.1} parent=0 // pred_region
    _
  $region13: #{tpu_custom_call.1} parent=0 // pred_fallthru
    _
  // Predicated region
  $region14: #{tpu_custom_call.1} parent=0 // pred_check
    _
  $region15: #{tpu_custom_call.1} parent=0 // pred_check_branch
    %26 = sbr.rel (0) target = $region17
  $region16: #{tpu_custom_call.1} parent=0 // pred_region
    _
  $region17: #{tpu_custom_call.1} parent=0 // pred_fallthru
    _
  // Predicated region
  $region18: #{tpu_custom_call.1} parent=0 // pred_check
    _
  $region19: #{tpu_custom_call.1} parent=0 // pred_check_branch
    %28 = sbr.rel (0) target = $region21
  $region20: #{tpu_custom_call.1} parent=0 // pred_region
    _
  $region21: #{tpu_custom_call.1} parent=0 // pred_fallthru
    _
  // Predicated region
  $region22: #{tpu_custom_call.1} parent=0 // pred_check
    _
  $region23: #{tpu_custom_call.1} parent=0 // pred_check_branch
    %30 = sbr.rel (0) target = $region25
  $region24: #{tpu_custom_call.1} parent=0 // pred_region
    _
  $region25: #{tpu_custom_call.1} parent=0 // pred_fallthru
    _
  // Predicated region
  $region26: #{tpu_custom_call.1} parent=0 // pred_check
    _
  $region27: #{tpu_custom_call.1} parent=0 // pred_check_branch
    %32 = sbr.rel (0) target = $region29
  $region28: #{tpu_custom_call.1} parent=0 // pred_region
    _
  $region29: #{tpu_custom_call.1} parent=0 // pred_fallthru
    _
  // Predicated region
  $region30: #{tpu_custom_call.1} parent=0 // pred_check
    _
  $region31: #{tpu_custom_call.1} parent=0 // pred_check_branch
    %34 = sbr.rel (0) target = $region33
  $region32: #{tpu_custom_call.1} parent=0 // pred_region
    _
  $region33: #{tpu_custom_call.1} parent=0 // pred_fallthru
    _
  // Predicated region
  $region34: #{tpu_custom_call.1} parent=0 // pred_check
    _
  $region35: #{tpu_custom_call.1} parent=0 // pred_check_branch
    %36 = sbr.rel (0) target = $region37
  $region36: #{tpu_custom_call.1} parent=0 // pred_region
    _
  $region37: #{tpu_custom_call.1} parent=0 // pred_fallthru
    _
  // Predicated region
  $region38: #{tpu_custom_call.1} parent=0 // pred_check
    _
  $region39: #{tpu_custom_call.1} parent=0 // pred_check_branch
    %38 = sbr.rel (0) target = $region41
  $region40: #{tpu_custom_call.1} parent=0 // pred_region
    _
  $region41: #{tpu_custom_call.1} parent=0 // pred_fallthru
    _
  // Predicated region
  $region42: #{tpu_custom_call.1} parent=0 // pred_check
    _
  $region43: #{tpu_custom_call.1} parent=0 // pred_check_branch
    %40 = sbr.rel (0) target = $region45
  $region44: #{tpu_custom_call.1} parent=0 // pred_region
    _
  $region45: #{tpu_custom_call.1} parent=0 // pred_fallthru
    _
  // Predicated region
  $region46: #{tpu_custom_call.1} parent=0 // pred_check
    _
  $region47: #{tpu_custom_call.1} parent=0 // pred_check_branch
    %42 = sbr.rel (0) target = $region49
  $region48: #{tpu_custom_call.1} parent=0 // pred_region
    _
  $region49: #{tpu_custom_call.1} parent=0 // pred_fallthru
    _
  // Predicated region
  $region50: #{tpu_custom_call.1} parent=0 // pred_check
    _
  $region51: #{tpu_custom_call.1} parent=0 // pred_check_branch
    %44 = sbr.rel (0) target = $region53
  $region52: #{tpu_custom_call.1} parent=0 // pred_region
    _
  $region53: #{tpu_custom_call.1} parent=0 // pred_fallthru
    _
  // Predicated region
  $region54: #{tpu_custom_call.1} parent=0 // pred_check
    _
  $region55: #{tpu_custom_call.1} parent=0 // pred_check_branch
    %46 = sbr.rel (0) target = $region57
  $region56: #{tpu_custom_call.1} parent=0 // pred_region
    _
  $region57: #{tpu_custom_call.1} parent=0 // pred_fallthru
    _
  %v48 = vld [vmem:[%s0] sm:$0xff]
  %v49 = vld [vmem:[%s0 + $0x8] sm:$0xff]
  %v50 = vld [vmem:[%s0 + $0x10] sm:$0xff]
  %v51 = vld [vmem:[%s0 + $0x18] sm:$0xff]
  %v52 = vld [vmem:[%s0 + $0x20] sm:$0xff]
  %v53 = vld [vmem:[%s0 + $0x28] sm:$0xff]
  %v54 = vld [vmem:[%s0 + $0x30] sm:$0xff]
  %v55 = vld [vmem:[%s0 + $0x38] sm:$0xff]
  %v56 = vld [vmem:[%s0 + $0x40] sm:$0xff]
  %v57 = vld [vmem:[%s0 + $0x48] sm:$0xff]
  %v58 = vld [vmem:[%s0 + $0x50] sm:$0xff]
  %v59 = vld [vmem:[%s0 + $0x58] sm:$0xff]
  %v60 = vld [vmem:[%s0 + $0x60] sm:$0xff]
  %v61 = vld [vmem:[%s0 + $0x68] sm:$0xff]
  %v62 = vld [vmem:[%s0 + $0x70] sm:$0xff]
  %v63 = vld [vmem:[%s0 + $0x78] sm:$0xff]
  %v64 = vld [vmem:[%s3] sm:$0x1]
  %66 = vset.pattern.permute.xlu0 0
  %67 = vperm.xlu0 %66, %v48
  %v68 = vpop.permute.xlu0 %67
  %71 = vset.pattern.permute.xlu0 0
  %72 = vperm.xlu0 %71, %v49
  %v73 = vpop.permute.xlu0 %72
  %76 = vset.pattern.permute.xlu0 0
  %77 = vperm.xlu0 %76, %v50
  %v78 = vpop.permute.xlu0 %77
  %81 = vset.pattern.permute.xlu0 0
  %82 = vperm.xlu0 %81, %v51
  %v83 = vpop.permute.xlu0 %82
  %86 = vset.pattern.permute.xlu0 0
  %87 = vperm.xlu0 %86, %v52
  %v88 = vpop.permute.xlu0 %87
  %91 = vset.pattern.permute.xlu0 0
  %92 = vperm.xlu0 %91, %v53
  %v93 = vpop.permute.xlu0 %92
  %96 = vset.pattern.permute.xlu0 0
  %97 = vperm.xlu0 %96, %v54
  %v98 = vpop.permute.xlu0 %97
  %101 = vset.pattern.permute.xlu0 0
  %102 = vperm.xlu0 %101, %v55
  %v103 = vpop.permute.xlu0 %102
  %106 = vset.pattern.permute.xlu0 0
  %107 = vperm.xlu0 %106, %v56
  %v108 = vpop.permute.xlu0 %107
  %111 = vset.pattern.permute.xlu0 0
  %112 = vperm.xlu0 %111, %v57
  %v113 = vpop.permute.xlu0 %112
  %116 = vset.pattern.permute.xlu0 0
  %117 = vperm.xlu0 %116, %v58
  %v118 = vpop.permute.xlu0 %117
  %121 = vset.pattern.permute.xlu0 0
  %122 = vperm.xlu0 %121, %v59
  %v123 = vpop.permute.xlu0 %122
  %126 = vset.pattern.permute.xlu0 0
  %127 = vperm.xlu0 %126, %v60
  %v128 = vpop.permute.xlu0 %127
  %131 = vset.pattern.permute.xlu0 0
  %132 = vperm.xlu0 %131, %v61
  %v133 = vpop.permute.xlu0 %132
  %136 = vset.pattern.permute.xlu0 0
  %137 = vperm.xlu0 %136, %v62
  %v138 = vpop.permute.xlu0 %137
  %141 = vset.pattern.permute.xlu0 0
  %142 = vperm.xlu0 %141, %v63
  %v143 = vpop.permute.xlu0 %142
  %v146 = vlaneseq
  %v147 = vshrl.u32 %v146, 7
  %v148 = vsub.s32 0, %v147
  %v149 = vrot.slane %v64, %v148
  %v151 = vmul.f32 %v68, %v149
  %v152 = vmul.f32 %v73, %v149
  %v153 = vmul.f32 %v78, %v149
  %v154 = vmul.f32 %v83, %v149
  %v155 = vmul.f32 %v88, %v149
  %v156 = vmul.f32 %v93, %v149
  %v157 = vmul.f32 %v98, %v149
  %v158 = vmul.f32 %v103, %v149
  %v159 = vmul.f32 %v108, %v149
  %v160 = vmul.f32 %v113, %v149
  %v161 = vmul.f32 %v118, %v149
  %v162 = vmul.f32 %v123, %v149
  %v163 = vmul.f32 %v128, %v149
  %v164 = vmul.f32 %v133, %v149
  %v165 = vmul.f32 %v138, %v149
  %v166 = vmul.f32 %v143, %v149
  %v167 = vand.u32 2147483647, %v151
  %vm168 = vcmp.le.f32.partialorder %v167, 0.7853982
  %vm169 = vcmp.lt.s32.totalorder %v151, 0
  %v170 = vand.u32 %v151, 2139095040
  %v171 = vshrl.u32 %v170, 23
  %v172 = vsub.s32 %v171, 127
  %v173 = vand.u32 2147483647, %v151
  %v174 = vand.u32 %v173, 8388607
  %v175 = vor.u32 %v174, 8388608
  %v176 = vsub.s32 0, %v175
  %v177 = vadd.s32 %v172, 1
  %vm178 = vcmp.gt.s32.totalorder %v177, 0
  %v179 = vsel %vm178, %v177, 0
  %v180 = vshrl.u32 %v179, 5
  %v181 = vand.u32 %v179, 31
  %v182 = vsub.s32 32, %v181
  %v183 = vshrl.u32 683565275, %v182
  %v184 = vshll.u32 683565275, %v181
  %v185 = vshrl.u32 2475754826, %v182
  %v186 = vor.u32 %v184, %v185
  %v187 = vshll.u32 2475754826, %v181
  %v188 = vshrl.u32 2131351028, %v182
  %v189 = vor.u32 %v187, %v188
  %v190 = vshll.u32 2131351028, %v181
  %v191 = vshrl.u32 2102212464, %v182
  %v192 = vor.u32 %v190, %v191
  %v193 = vshll.u32 2102212464, %v181
  %v194 = vshrl.u32 920167782, %v182
  %v195 = vor.u32 %v193, %v194
  %v196 = vshll.u32 920167782, %v181
  %v197 = vshrl.u32 1326507024, %v182
  %v198 = vor.u32 %v196, %v197
  %vm199 = vcmp.lt.s32.totalorder %v180, 1
  %vm200 = vcmp.lt.s32.totalorder %v180, 2
  %vm201 = vcmp.lt.s32.totalorder %v180, 3
  %vm202 = vcmp.lt.s32.totalorder %v180, 4
  %v203 = vsel %vm199, %v183, %v186
  %v204 = vsel %vm202, %v192, 2102212464
  %v205 = vsel %vm201, %v189, %v204
  %v206 = vsel %vm200, %v203, %v205
  %v207 = vsel %vm199, %v186, %v189
  %v208 = vsel %vm202, %v195, 920167782
  %v209 = vsel %vm201, %v192, %v208
  %v210 = vsel %vm200, %v207, %v209
  %v211 = vsel %vm199, %v189, %v192
  %v212 = vsel %vm202, %v198, 1326507024
  %v213 = vsel %vm201, %v195, %v212
  %v214 = vsel %vm200, %v211, %v213
  %v215 = vshll.u32 %v175, 8
  %v216 = vmul.u32.u64.compose %v215, %v214
  %v217 = vextract.low.u32 %v216
  %v218 = vextract.high.u32 %v216
  %v219 = vmul.u32.u64.compose %v215, %v210
  %v220 = vextract.low.u32 %v219
  %v221 = vextract.high.u32 %v219
  %v222 = vmul.u32 %v215, %v206
  %v223 = vadd.s32 %v218, %v220
  %vm224 = vc.u32 %v218, %v220
  %v225 = vadd.s32 %v221, 1
  %v226 = vsel %vm224, %v225, %v221
  %v227 = vadd.s32 %v222, %v226
  %v228 = vadd.s32 %v227, 536870912
  %v229 = vshrl.u32 %v228, 30
  %v230 = vshll.u32 %v229, 30
  %v231 = vsub.s32 %v227, %v230
  %vm232 = vcmp.lt.s32.totalorder %v231, 0
  %v233 = vsub.s32 0, %v231
  %v234 = vsel %vm232, %v233, %v231
  %v235 = vclz %v234
  %v236 = vsub.s32 %v235, 2
  %vm237 = vcmp.gt.s32.totalorder 0, %v236
  %v238 = vsel %vm237, 0, %v236
  %v239 = vsub.s32 32, %v238
  %v240 = vshll.u32 %v231, %v238
  %v241 = vshrl.u32 %v223, %v239
  %v242 = vor.u32 %v240, %v241
  %v243 = vsub.s32 4294967266, %v238
  %v244 = vadd.s32 %v243, 127
  %v245 = vshll.u32 %v244, 23
  %v246 = vor.u32 4788187, %v245
  %v247 = vand.u32 2147483647, %v246
  %v249 = vcvt.s32.f32 %v242
  %v250 = vmul.f32 %v249, %v247
  %v251 = vxor.u32 %v250, 2147483648
  %v252 = vsel %vm169, %v251, %v250
  %v253 = vsub.s32 4, %v229
  %v254 = vsel %vm169, %v253, %v229
  %v255 = vsel %vm168, %v151, %v252
  %v256 = vsel %vm168, 0, %v254
  %v257 = vcosq.f32.pop %v255
  %v258 = vsinq.f32.pop %v255
  %vm259 = vweird.f32 %v151
  %v260 = vadd.s32 %v256, 3
  %v261 = vand.u32 %v260, 3
  %vm262 = vcmp.lt.s32.totalorder %v261, 2
  %vm263 = vcmp.eq.s32.totalorder %v261, 0
  %v264 = vxor.u32 %v258, 2147483648
  %v265 = vsel %vm263, %v257, %v264
  %vm266 = vcmp.eq.s32.totalorder %v261, 2
  %v267 = vxor.u32 %v257, 2147483648
  %v268 = vsel %vm266, %v267, %v258
  %v269 = vsel %vm262, %v265, %v268
  %v270 = vsel %vm259, nan, %v269
  %v271 = vand.u32 2147483647, %v152
  %vm272 = vcmp.le.f32.partialorder %v271, 0.7853982
  %vm273 = vcmp.lt.s32.totalorder %v152, 0
  %v274 = vand.u32 %v152, 2139095040
  %v275 = vshrl.u32 %v274, 23
  %v276 = vsub.s32 %v275, 127
  %v277 = vand.u32 2147483647, %v152
  %v278 = vand.u32 %v277, 8388607
  %v279 = vor.u32 %v278, 8388608
  %v280 = vsub.s32 0, %v279
  %v281 = vadd.s32 %v276, 1
  %vm282 = vcmp.gt.s32.totalorder %v281, 0
  %v283 = vsel %vm282, %v281, 0
  %v284 = vshrl.u32 %v283, 5
  %v285 = vand.u32 %v283, 31
  %v286 = vsub.s32 32, %v285
  %v287 = vshrl.u32 683565275, %v286
  %v288 = vshll.u32 683565275, %v285
  %v289 = vshrl.u32 2475754826, %v286
  %v290 = vor.u32 %v288, %v289
  %v291 = vshll.u32 2475754826, %v285
  %v292 = vshrl.u32 2131351028, %v286
  %v293 = vor.u32 %v291, %v292
  %v294 = vshll.u32 2131351028, %v285
  %v295 = vshrl.u32 2102212464, %v286
  %v296 = vor.u32 %v294, %v295
  %v297 = vshll.u32 2102212464, %v285
  %v298 = vshrl.u32 920167782, %v286
  %v299 = vor.u32 %v297, %v298
  %v300 = vshll.u32 920167782, %v285
  %v301 = vshrl.u32 1326507024, %v286
  %v302 = vor.u32 %v300, %v301
  %vm303 = vcmp.lt.s32.totalorder %v284, 1
  %vm304 = vcmp.lt.s32.totalorder %v284, 2
  %vm305 = vcmp.lt.s32.totalorder %v284, 3
  %vm306 = vcmp.lt.s32.totalorder %v284, 4
  %v307 = vsel %vm303, %v287, %v290
  %v308 = vsel %vm306, %v296, 2102212464
  %v309 = vsel %vm305, %v293, %v308
  %v310 = vsel %vm304, %v307, %v309
  %v311 = vsel %vm303, %v290, %v293
  %v312 = vsel %vm306, %v299, 920167782
  %v313 = vsel %vm305, %v296, %v312
  %v314 = vsel %vm304, %v311, %v313
  %v315 = vsel %vm303, %v293, %v296
  %v316 = vsel %vm306, %v302, 1326507024
  %v317 = vsel %vm305, %v299, %v316
  %v318 = vsel %vm304, %v315, %v317
  %v319 = vshll.u32 %v279, 8
  %v320 = vmul.u32.u64.compose %v319, %v318
  %v321 = vextract.low.u32 %v320
  %v322 = vextract.high.u32 %v320
  %v323 = vmul.u32.u64.compose %v319, %v314
  %v324 = vextract.low.u32 %v323
  %v325 = vextract.high.u32 %v323
  %v326 = vmul.u32 %v319, %v310
  %v327 = vadd.s32 %v322, %v324
  %vm328 = vc.u32 %v322, %v324
  %v329 = vadd.s32 %v325, 1
  %v330 = vsel %vm328, %v329, %v325
  %v331 = vadd.s32 %v326, %v330
  %v332 = vadd.s32 %v331, 536870912
  %v333 = vshrl.u32 %v332, 30
  %v334 = vshll.u32 %v333, 30
  %v335 = vsub.s32 %v331, %v334
  %vm336 = vcmp.lt.s32.totalorder %v335, 0
  %v337 = vsub.s32 0, %v335
  %v338 = vsel %vm336, %v337, %v335
  %v339 = vclz %v338
  %v340 = vsub.s32 %v339, 2
  %vm341 = vcmp.gt.s32.totalorder 0, %v340
  %v342 = vsel %vm341, 0, %v340
  %v343 = vsub.s32 32, %v342
  %v344 = vshll.u32 %v335, %v342
  %v345 = vshrl.u32 %v327, %v343
  %v346 = vor.u32 %v344, %v345
  %v347 = vsub.s32 4294967266, %v342
  %v348 = vadd.s32 %v347, 127
  %v349 = vshll.u32 %v348, 23
  %v350 = vor.u32 4788187, %v349
  %v351 = vand.u32 2147483647, %v350
  %v353 = vcvt.s32.f32 %v346
  %v354 = vmul.f32 %v353, %v351
  %v355 = vxor.u32 %v354, 2147483648
  %v356 = vsel %vm273, %v355, %v354
  %v357 = vsub.s32 4, %v333
  %v358 = vsel %vm273, %v357, %v333
  %v359 = vsel %vm272, %v152, %v356
  %v360 = vsel %vm272, 0, %v358
  %v361 = vcosq.f32.pop %v359
  %v362 = vsinq.f32.pop %v359
  %vm363 = vweird.f32 %v152
  %v364 = vadd.s32 %v360, 3
  %v365 = vand.u32 %v364, 3
  %vm366 = vcmp.lt.s32.totalorder %v365, 2
  %vm367 = vcmp.eq.s32.totalorder %v365, 0
  %v368 = vxor.u32 %v362, 2147483648
  %v369 = vsel %vm367, %v361, %v368
  %vm370 = vcmp.eq.s32.totalorder %v365, 2
  %v371 = vxor.u32 %v361, 2147483648
  %v372 = vsel %vm370, %v371, %v362
  %v373 = vsel %vm366, %v369, %v372
  %v374 = vsel %vm363, nan, %v373
  %v375 = vand.u32 2147483647, %v153
  %vm376 = vcmp.le.f32.partialorder %v375, 0.7853982
  %vm377 = vcmp.lt.s32.totalorder %v153, 0
  %v378 = vand.u32 %v153, 2139095040
  %v379 = vshrl.u32 %v378, 23
  %v380 = vsub.s32 %v379, 127
  %v381 = vand.u32 2147483647, %v153
  %v382 = vand.u32 %v381, 8388607
  %v383 = vor.u32 %v382, 8388608
  %v384 = vsub.s32 0, %v383
  %v385 = vadd.s32 %v380, 1
  %vm386 = vcmp.gt.s32.totalorder %v385, 0
  %v387 = vsel %vm386, %v385, 0
  %v388 = vshrl.u32 %v387, 5
  %v389 = vand.u32 %v387, 31
  %v390 = vsub.s32 32, %v389
  %v391 = vshrl.u32 683565275, %v390
  %v392 = vshll.u32 683565275, %v389
  %v393 = vshrl.u32 2475754826, %v390
  %v394 = vor.u32 %v392, %v393
  %v395 = vshll.u32 2475754826, %v389
  %v396 = vshrl.u32 2131351028, %v390
  %v397 = vor.u32 %v395, %v396
  %v398 = vshll.u32 2131351028, %v389
  %v399 = vshrl.u32 2102212464, %v390
  %v400 = vor.u32 %v398, %v399
  %v401 = vshll.u32 2102212464, %v389
  %v402 = vshrl.u32 920167782, %v390
  %v403 = vor.u32 %v401, %v402
  %v404 = vshll.u32 920167782, %v389
  %v405 = vshrl.u32 1326507024, %v390
  %v406 = vor.u32 %v404, %v405
  %vm407 = vcmp.lt.s32.totalorder %v388, 1
  %vm408 = vcmp.lt.s32.totalorder %v388, 2
  %vm409 = vcmp.lt.s32.totalorder %v388, 3
  %vm410 = vcmp.lt.s32.totalorder %v388, 4
  %v411 = vsel %vm407, %v391, %v394
  %v412 = vsel %vm410, %v400, 2102212464
  %v413 = vsel %vm409, %v397, %v412
  %v414 = vsel %vm408, %v411, %v413
  %v415 = vsel %vm407, %v394, %v397
  %v416 = vsel %vm410, %v403, 920167782
  %v417 = vsel %vm409, %v400, %v416
  %v418 = vsel %vm408, %v415, %v417
  %v419 = vsel %vm407, %v397, %v400
  %v420 = vsel %vm410, %v406, 1326507024
  %v421 = vsel %vm409, %v403, %v420
  %v422 = vsel %vm408, %v419, %v421
  %v423 = vshll.u32 %v383, 8
  %v424 = vmul.u32.u64.compose %v423, %v422
  %v425 = vextract.low.u32 %v424
  %v426 = vextract.high.u32 %v424
  %v427 = vmul.u32.u64.compose %v423, %v418
  %v428 = vextract.low.u32 %v427
  %v429 = vextract.high.u32 %v427
  %v430 = vmul.u32 %v423, %v414
  %v431 = vadd.s32 %v426, %v428
  %vm432 = vc.u32 %v426, %v428
  %v433 = vadd.s32 %v429, 1
  %v434 = vsel %vm432, %v433, %v429
  %v435 = vadd.s32 %v430, %v434
  %v436 = vadd.s32 %v435, 536870912
  %v437 = vshrl.u32 %v436, 30
  %v438 = vshll.u32 %v437, 30
  %v439 = vsub.s32 %v435, %v438
  %vm440 = vcmp.lt.s32.totalorder %v439, 0
  %v441 = vsub.s32 0, %v439
  %v442 = vsel %vm440, %v441, %v439
  %v443 = vclz %v442
  %v444 = vsub.s32 %v443, 2
  %vm445 = vcmp.gt.s32.totalorder 0, %v444
  %v446 = vsel %vm445, 0, %v444
  %v447 = vsub.s32 32, %v446
  %v448 = vshll.u32 %v439, %v446
  %v449 = vshrl.u32 %v431, %v447
  %v450 = vor.u32 %v448, %v449
  %v451 = vsub.s32 4294967266, %v446
  %v452 = vadd.s32 %v451, 127
  %v453 = vshll.u32 %v452, 23
  %v454 = vor.u32 4788187, %v453
  %v455 = vand.u32 2147483647, %v454
  %v457 = vcvt.s32.f32 %v450
  %v458 = vmul.f32 %v457, %v455
  %v459 = vxor.u32 %v458, 2147483648
  %v460 = vsel %vm377, %v459, %v458
  %v461 = vsub.s32 4, %v437
  %v462 = vsel %vm377, %v461, %v437
  %v463 = vsel %vm376, %v153, %v460
  %v464 = vsel %vm376, 0, %v462
  %v465 = vcosq.f32.pop %v463
  %v466 = vsinq.f32.pop %v463
  %vm467 = vweird.f32 %v153
  %v468 = vadd.s32 %v464, 3
  %v469 = vand.u32 %v468, 3
  %vm470 = vcmp.lt.s32.totalorder %v469, 2
  %vm471 = vcmp.eq.s32.totalorder %v469, 0
  %v472 = vxor.u32 %v466, 2147483648
  %v473 = vsel %vm471, %v465, %v472
  %vm474 = vcmp.eq.s32.totalorder %v469, 2
  %v475 = vxor.u32 %v465, 2147483648
  %v476 = vsel %vm474, %v475, %v466
  %v477 = vsel %vm470, %v473, %v476
  %v478 = vsel %vm467, nan, %v477
  %v479 = vand.u32 2147483647, %v154
  %vm480 = vcmp.le.f32.partialorder %v479, 0.7853982
  %vm481 = vcmp.lt.s32.totalorder %v154, 0
  %v482 = vand.u32 %v154, 2139095040
  %v483 = vshrl.u32 %v482, 23
  %v484 = vsub.s32 %v483, 127
  %v485 = vand.u32 2147483647, %v154
  %v486 = vand.u32 %v485, 8388607
  %v487 = vor.u32 %v486, 8388608
  %v488 = vsub.s32 0, %v487
  %v489 = vadd.s32 %v484, 1
  %vm490 = vcmp.gt.s32.totalorder %v489, 0
  %v491 = vsel %vm490, %v489, 0
  %v492 = vshrl.u32 %v491, 5
  %v493 = vand.u32 %v491, 31
  %v494 = vsub.s32 32, %v493
  %v495 = vshrl.u32 683565275, %v494
  %v496 = vshll.u32 683565275, %v493
  %v497 = vshrl.u32 2475754826, %v494
  %v498 = vor.u32 %v496, %v497
  %v499 = vshll.u32 2475754826, %v493
  %v500 = vshrl.u32 2131351028, %v494
  %v501 = vor.u32 %v499, %v500
  %v502 = vshll.u32 2131351028, %v493
  %v503 = vshrl.u32 2102212464, %v494
  %v504 = vor.u32 %v502, %v503
  %v505 = vshll.u32 2102212464, %v493
  %v506 = vshrl.u32 920167782, %v494
  %v507 = vor.u32 %v505, %v506
  %v508 = vshll.u32 920167782, %v493
  %v509 = vshrl.u32 1326507024, %v494
  %v510 = vor.u32 %v508, %v509
  %vm511 = vcmp.lt.s32.totalorder %v492, 1
  %vm512 = vcmp.lt.s32.totalorder %v492, 2
  %vm513 = vcmp.lt.s32.totalorder %v492, 3
  %vm514 = vcmp.lt.s32.totalorder %v492, 4
  %v515 = vsel %vm511, %v495, %v498
  %v516 = vsel %vm514, %v504, 2102212464
  %v517 = vsel %vm513, %v501, %v516
  %v518 = vsel %vm512, %v515, %v517
  %v519 = vsel %vm511, %v498, %v501
  %v520 = vsel %vm514, %v507, 920167782
  %v521 = vsel %vm513, %v504, %v520
  %v522 = vsel %vm512, %v519, %v521
  %v523 = vsel %vm511, %v501, %v504
  %v524 = vsel %vm514, %v510, 1326507024
  %v525 = vsel %vm513, %v507, %v524
  %v526 = vsel %vm512, %v523, %v525
  %v527 = vshll.u32 %v487, 8
  %v528 = vmul.u32.u64.compose %v527, %v526
  %v529 = vextract.low.u32 %v528
  %v530 = vextract.high.u32 %v528
  %v531 = vmul.u32.u64.compose %v527, %v522
  %v532 = vextract.low.u32 %v531
  %v533 = vextract.high.u32 %v531
  %v534 = vmul.u32 %v527, %v518
  %v535 = vadd.s32 %v530, %v532
  %vm536 = vc.u32 %v530, %v532
  %v537 = vadd.s32 %v533, 1
  %v538 = vsel %vm536, %v537, %v533
  %v539 = vadd.s32 %v534, %v538
  %v540 = vadd.s32 %v539, 536870912
  %v541 = vshrl.u32 %v540, 30
  %v542 = vshll.u32 %v541, 30
  %v543 = vsub.s32 %v539, %v542
  %vm544 = vcmp.lt.s32.totalorder %v543, 0
  %v545 = vsub.s32 0, %v543
  %v546 = vsel %vm544, %v545, %v543
  %v547 = vclz %v546
  %v548 = vsub.s32 %v547, 2
  %vm549 = vcmp.gt.s32.totalorder 0, %v548
  %v550 = vsel %vm549, 0, %v548
  %v551 = vsub.s32 32, %v550
  %v552 = vshll.u32 %v543, %v550
  %v553 = vshrl.u32 %v535, %v551
  %v554 = vor.u32 %v552, %v553
  %v555 = vsub.s32 4294967266, %v550
  %v556 = vadd.s32 %v555, 127
  %v557 = vshll.u32 %v556, 23
  %v558 = vor.u32 4788187, %v557
  %v559 = vand.u32 2147483647, %v558
  %v561 = vcvt.s32.f32 %v554
  %v562 = vmul.f32 %v561, %v559
  %v563 = vxor.u32 %v562, 2147483648
  %v564 = vsel %vm481, %v563, %v562
  %v565 = vsub.s32 4, %v541
  %v566 = vsel %vm481, %v565, %v541
  %v567 = vsel %vm480, %v154, %v564
  %v568 = vsel %vm480, 0, %v566
  %v569 = vcosq.f32.pop %v567
  %v570 = vsinq.f32.pop %v567
  %vm571 = vweird.f32 %v154
  %v572 = vadd.s32 %v568, 3
  %v573 = vand.u32 %v572, 3
  %vm574 = vcmp.lt.s32.totalorder %v573, 2
  %vm575 = vcmp.eq.s32.totalorder %v573, 0
  %v576 = vxor.u32 %v570, 2147483648
  %v577 = vsel %vm575, %v569, %v576
  %vm578 = vcmp.eq.s32.totalorder %v573, 2
  %v579 = vxor.u32 %v569, 2147483648
  %v580 = vsel %vm578, %v579, %v570
  %v581 = vsel %vm574, %v577, %v580
  %v582 = vsel %vm571, nan, %v581
  %v583 = vand.u32 2147483647, %v155
  %vm584 = vcmp.le.f32.partialorder %v583, 0.7853982
  %vm585 = vcmp.lt.s32.totalorder %v155, 0
  %v586 = vand.u32 %v155, 2139095040
  %v587 = vshrl.u32 %v586, 23
  %v588 = vsub.s32 %v587, 127
  %v589 = vand.u32 2147483647, %v155
  %v590 = vand.u32 %v589, 8388607
  %v591 = vor.u32 %v590, 8388608
  %v592 = vsub.s32 0, %v591
  %v593 = vadd.s32 %v588, 1
  %vm594 = vcmp.gt.s32.totalorder %v593, 0
  %v595 = vsel %vm594, %v593, 0
  %v596 = vshrl.u32 %v595, 5
  %v597 = vand.u32 %v595, 31
  %v598 = vsub.s32 32, %v597
  %v599 = vshrl.u32 683565275, %v598
  %v600 = vshll.u32 683565275, %v597
  %v601 = vshrl.u32 2475754826, %v598
  %v602 = vor.u32 %v600, %v601
  %v603 = vshll.u32 2475754826, %v597
  %v604 = vshrl.u32 2131351028, %v598
  %v605 = vor.u32 %v603, %v604
  %v606 = vshll.u32 2131351028, %v597
  %v607 = vshrl.u32 2102212464, %v598
  %v608 = vor.u32 %v606, %v607
  %v609 = vshll.u32 2102212464, %v597
  %v610 = vshrl.u32 920167782, %v598
  %v611 = vor.u32 %v609, %v610
  %v612 = vshll.u32 920167782, %v597
  %v613 = vshrl.u32 1326507024, %v598
  %v614 = vor.u32 %v612, %v613
  %vm615 = vcmp.lt.s32.totalorder %v596, 1
  %vm616 = vcmp.lt.s32.totalorder %v596, 2
  %vm617 = vcmp.lt.s32.totalorder %v596, 3
  %vm618 = vcmp.lt.s32.totalorder %v596, 4
  %v619 = vsel %vm615, %v599, %v602
  %v620 = vsel %vm618, %v608, 2102212464
  %v621 = vsel %vm617, %v605, %v620
  %v622 = vsel %vm616, %v619, %v621
  %v623 = vsel %vm615, %v602, %v605
  %v624 = vsel %vm618, %v611, 920167782
  %v625 = vsel %vm617, %v608, %v624
  %v626 = vsel %vm616, %v623, %v625
  %v627 = vsel %vm615, %v605, %v608
  %v628 = vsel %vm618, %v614, 1326507024
  %v629 = vsel %vm617, %v611, %v628
  %v630 = vsel %vm616, %v627, %v629
  %v631 = vshll.u32 %v591, 8
  %v632 = vmul.u32.u64.compose %v631, %v630
  %v633 = vextract.low.u32 %v632
  %v634 = vextract.high.u32 %v632
  %v635 = vmul.u32.u64.compose %v631, %v626
  %v636 = vextract.low.u32 %v635
  %v637 = vextract.high.u32 %v635
  %v638 = vmul.u32 %v631, %v622
  %v639 = vadd.s32 %v634, %v636
  %vm640 = vc.u32 %v634, %v636
  %v641 = vadd.s32 %v637, 1
  %v642 = vsel %vm640, %v641, %v637
  %v643 = vadd.s32 %v638, %v642
  %v644 = vadd.s32 %v643, 536870912
  %v645 = vshrl.u32 %v644, 30
  %v646 = vshll.u32 %v645, 30
  %v647 = vsub.s32 %v643, %v646
  %vm648 = vcmp.lt.s32.totalorder %v647, 0
  %v649 = vsub.s32 0, %v647
  %v650 = vsel %vm648, %v649, %v647
  %v651 = vclz %v650
  %v652 = vsub.s32 %v651, 2
  %vm653 = vcmp.gt.s32.totalorder 0, %v652
  %v654 = vsel %vm653, 0, %v652
  %v655 = vsub.s32 32, %v654
  %v656 = vshll.u32 %v647, %v654
  %v657 = vshrl.u32 %v639, %v655
  %v658 = vor.u32 %v656, %v657
  %v659 = vsub.s32 4294967266, %v654
  %v660 = vadd.s32 %v659, 127
  %v661 = vshll.u32 %v660, 23
  %v662 = vor.u32 4788187, %v661
  %v663 = vand.u32 2147483647, %v662
  %v665 = vcvt.s32.f32 %v658
  %v666 = vmul.f32 %v665, %v663
  %v667 = vxor.u32 %v666, 2147483648
  %v668 = vsel %vm585, %v667, %v666
  %v669 = vsub.s32 4, %v645
  %v670 = vsel %vm585, %v669, %v645
  %v671 = vsel %vm584, %v155, %v668
  %v672 = vsel %vm584, 0, %v670
  %v673 = vcosq.f32.pop %v671
  %v674 = vsinq.f32.pop %v671
  %vm675 = vweird.f32 %v155
  %v676 = vadd.s32 %v672, 3
  %v677 = vand.u32 %v676, 3
  %vm678 = vcmp.lt.s32.totalorder %v677, 2
  %vm679 = vcmp.eq.s32.totalorder %v677, 0
  %v680 = vxor.u32 %v674, 2147483648
  %v681 = vsel %vm679, %v673, %v680
  %vm682 = vcmp.eq.s32.totalorder %v677, 2
  %v683 = vxor.u32 %v673, 2147483648
  %v684 = vsel %vm682, %v683, %v674
  %v685 = vsel %vm678, %v681, %v684
  %v686 = vsel %vm675, nan, %v685
  %v687 = vand.u32 2147483647, %v156
  %vm688 = vcmp.le.f32.partialorder %v687, 0.7853982
  %vm689 = vcmp.lt.s32.totalorder %v156, 0
  %v690 = vand.u32 %v156, 2139095040
  %v691 = vshrl.u32 %v690, 23
  %v692 = vsub.s32 %v691, 127
  %v693 = vand.u32 2147483647, %v156
  %v694 = vand.u32 %v693, 8388607
  %v695 = vor.u32 %v694, 8388608
  %v696 = vsub.s32 0, %v695
  %v697 = vadd.s32 %v692, 1
  %vm698 = vcmp.gt.s32.totalorder %v697, 0
  %v699 = vsel %vm698, %v697, 0
  %v700 = vshrl.u32 %v699, 5
  %v701 = vand.u32 %v699, 31
  %v702 = vsub.s32 32, %v701
  %v703 = vshrl.u32 683565275, %v702
  %v704 = vshll.u32 683565275, %v701
  %v705 = vshrl.u32 2475754826, %v702
  %v706 = vor.u32 %v704, %v705
  %v707 = vshll.u32 2475754826, %v701
  %v708 = vshrl.u32 2131351028, %v702
  %v709 = vor.u32 %v707, %v708
  %v710 = vshll.u32 2131351028, %v701
  %v711 = vshrl.u32 2102212464, %v702
  %v712 = vor.u32 %v710, %v711
  %v713 = vshll.u32 2102212464, %v701
  %v714 = vshrl.u32 920167782, %v702
  %v715 = vor.u32 %v713, %v714
  %v716 = vshll.u32 920167782, %v701
  %v717 = vshrl.u32 1326507024, %v702
  %v718 = vor.u32 %v716, %v717
  %vm719 = vcmp.lt.s32.totalorder %v700, 1
  %vm720 = vcmp.lt.s32.totalorder %v700, 2
  %vm721 = vcmp.lt.s32.totalorder %v700, 3
  %vm722 = vcmp.lt.s32.totalorder %v700, 4
  %v723 = vsel %vm719, %v703, %v706
  %v724 = vsel %vm722, %v712, 2102212464
  %v725 = vsel %vm721, %v709, %v724
  %v726 = vsel %vm720, %v723, %v725
  %v727 = vsel %vm719, %v706, %v709
  %v728 = vsel %vm722, %v715, 920167782
  %v729 = vsel %vm721, %v712, %v728
  %v730 = vsel %vm720, %v727, %v729
  %v731 = vsel %vm719, %v709, %v712
  %v732 = vsel %vm722, %v718, 1326507024
  %v733 = vsel %vm721, %v715, %v732
  %v734 = vsel %vm720, %v731, %v733
  %v735 = vshll.u32 %v695, 8
  %v736 = vmul.u32.u64.compose %v735, %v734
  %v737 = vextract.low.u32 %v736
  %v738 = vextract.high.u32 %v736
  %v739 = vmul.u32.u64.compose %v735, %v730
  %v740 = vextract.low.u32 %v739
  %v741 = vextract.high.u32 %v739
  %v742 = vmul.u32 %v735, %v726
  %v743 = vadd.s32 %v738, %v740
  %vm744 = vc.u32 %v738, %v740
  %v745 = vadd.s32 %v741, 1
  %v746 = vsel %vm744, %v745, %v741
  %v747 = vadd.s32 %v742, %v746
  %v748 = vadd.s32 %v747, 536870912
  %v749 = vshrl.u32 %v748, 30
  %v750 = vshll.u32 %v749, 30
  %v751 = vsub.s32 %v747, %v750
  %vm752 = vcmp.lt.s32.totalorder %v751, 0
  %v753 = vsub.s32 0, %v751
  %v754 = vsel %vm752, %v753, %v751
  %v755 = vclz %v754
  %v756 = vsub.s32 %v755, 2
  %vm757 = vcmp.gt.s32.totalorder 0, %v756
  %v758 = vsel %vm757, 0, %v756
  %v759 = vsub.s32 32, %v758
  %v760 = vshll.u32 %v751, %v758
  %v761 = vshrl.u32 %v743, %v759
  %v762 = vor.u32 %v760, %v761
  %v763 = vsub.s32 4294967266, %v758
  %v764 = vadd.s32 %v763, 127
  %v765 = vshll.u32 %v764, 23
  %v766 = vor.u32 4788187, %v765
  %v767 = vand.u32 2147483647, %v766
  %v769 = vcvt.s32.f32 %v762
  %v770 = vmul.f32 %v769, %v767
  %v771 = vxor.u32 %v770, 2147483648
  %v772 = vsel %vm689, %v771, %v770
  %v773 = vsub.s32 4, %v749
  %v774 = vsel %vm689, %v773, %v749
  %v775 = vsel %vm688, %v156, %v772
  %v776 = vsel %vm688, 0, %v774
  %v777 = vcosq.f32.pop %v775
  %v778 = vsinq.f32.pop %v775
  %vm779 = vweird.f32 %v156
  %v780 = vadd.s32 %v776, 3
  %v781 = vand.u32 %v780, 3
  %vm782 = vcmp.lt.s32.totalorder %v781, 2
  %vm783 = vcmp.eq.s32.totalorder %v781, 0
  %v784 = vxor.u32 %v778, 2147483648
  %v785 = vsel %vm783, %v777, %v784
  %vm786 = vcmp.eq.s32.totalorder %v781, 2
  %v787 = vxor.u32 %v777, 2147483648
  %v788 = vsel %vm786, %v787, %v778
  %v789 = vsel %vm782, %v785, %v788
  %v790 = vsel %vm779, nan, %v789
  %v791 = vand.u32 2147483647, %v157
  %vm792 = vcmp.le.f32.partialorder %v791, 0.7853982
  %vm793 = vcmp.lt.s32.totalorder %v157, 0
  %v794 = vand.u32 %v157, 2139095040
  %v795 = vshrl.u32 %v794, 23
  %v796 = vsub.s32 %v795, 127
  %v797 = vand.u32 2147483647, %v157
  %v798 = vand.u32 %v797, 8388607
  %v799 = vor.u32 %v798, 8388608
  %v800 = vsub.s32 0, %v799
  %v801 = vadd.s32 %v796, 1
  %vm802 = vcmp.gt.s32.totalorder %v801, 0
  %v803 = vsel %vm802, %v801, 0
  %v804 = vshrl.u32 %v803, 5
  %v805 = vand.u32 %v803, 31
  %v806 = vsub.s32 32, %v805
  %v807 = vshrl.u32 683565275, %v806
  %v808 = vshll.u32 683565275, %v805
  %v809 = vshrl.u32 2475754826, %v806
  %v810 = vor.u32 %v808, %v809
  %v811 = vshll.u32 2475754826, %v805
  %v812 = vshrl.u32 2131351028, %v806
  %v813 = vor.u32 %v811, %v812
  %v814 = vshll.u32 2131351028, %v805
  %v815 = vshrl.u32 2102212464, %v806
  %v816 = vor.u32 %v814, %v815
  %v817 = vshll.u32 2102212464, %v805
  %v818 = vshrl.u32 920167782, %v806
  %v819 = vor.u32 %v817, %v818
  %v820 = vshll.u32 920167782, %v805
  %v821 = vshrl.u32 1326507024, %v806
  %v822 = vor.u32 %v820, %v821
  %vm823 = vcmp.lt.s32.totalorder %v804, 1
  %vm824 = vcmp.lt.s32.totalorder %v804, 2
  %vm825 = vcmp.lt.s32.totalorder %v804, 3
  %vm826 = vcmp.lt.s32.totalorder %v804, 4
  %v827 = vsel %vm823, %v807, %v810
  %v828 = vsel %vm826, %v816, 2102212464
  %v829 = vsel %vm825, %v813, %v828
  %v830 = vsel %vm824, %v827, %v829
  %v831 = vsel %vm823, %v810, %v813
  %v832 = vsel %vm826, %v819, 920167782
  %v833 = vsel %vm825, %v816, %v832
  %v834 = vsel %vm824, %v831, %v833
  %v835 = vsel %vm823, %v813, %v816
  %v836 = vsel %vm826, %v822, 1326507024
  %v837 = vsel %vm825, %v819, %v836
  %v838 = vsel %vm824, %v835, %v837
  %v839 = vshll.u32 %v799, 8
  %v840 = vmul.u32.u64.compose %v839, %v838
  %v841 = vextract.low.u32 %v840
  %v842 = vextract.high.u32 %v840
  %v843 = vmul.u32.u64.compose %v839, %v834
  %v844 = vextract.low.u32 %v843
  %v845 = vextract.high.u32 %v843
  %v846 = vmul.u32 %v839, %v830
  %v847 = vadd.s32 %v842, %v844
  %vm848 = vc.u32 %v842, %v844
  %v849 = vadd.s32 %v845, 1
  %v850 = vsel %vm848, %v849, %v845
  %v851 = vadd.s32 %v846, %v850
  %v852 = vadd.s32 %v851, 536870912
  %v853 = vshrl.u32 %v852, 30
  %v854 = vshll.u32 %v853, 30
  %v855 = vsub.s32 %v851, %v854
  %vm856 = vcmp.lt.s32.totalorder %v855, 0
  %v857 = vsub.s32 0, %v855
  %v858 = vsel %vm856, %v857, %v855
  %v859 = vclz %v858
  %v860 = vsub.s32 %v859, 2
  %vm861 = vcmp.gt.s32.totalorder 0, %v860
  %v862 = vsel %vm861, 0, %v860
  %v863 = vsub.s32 32, %v862
  %v864 = vshll.u32 %v855, %v862
  %v865 = vshrl.u32 %v847, %v863
  %v866 = vor.u32 %v864, %v865
  %v867 = vsub.s32 4294967266, %v862
  %v868 = vadd.s32 %v867, 127
  %v869 = vshll.u32 %v868, 23
  %v870 = vor.u32 4788187, %v869
  %v871 = vand.u32 2147483647, %v870
  %v873 = vcvt.s32.f32 %v866
  %v874 = vmul.f32 %v873, %v871
  %v875 = vxor.u32 %v874, 2147483648
  %v876 = vsel %vm793, %v875, %v874
  %v877 = vsub.s32 4, %v853
  %v878 = vsel %vm793, %v877, %v853
  %v879 = vsel %vm792, %v157, %v876
  %v880 = vsel %vm792, 0, %v878
  %v881 = vcosq.f32.pop %v879
  %v882 = vsinq.f32.pop %v879
  %vm883 = vweird.f32 %v157
  %v884 = vadd.s32 %v880, 3
  %v885 = vand.u32 %v884, 3
  %vm886 = vcmp.lt.s32.totalorder %v885, 2
  %vm887 = vcmp.eq.s32.totalorder %v885, 0
  %v888 = vxor.u32 %v882, 2147483648
  %v889 = vsel %vm887, %v881, %v888
  %vm890 = vcmp.eq.s32.totalorder %v885, 2
  %v891 = vxor.u32 %v881, 2147483648
  %v892 = vsel %vm890, %v891, %v882
  %v893 = vsel %vm886, %v889, %v892
  %v894 = vsel %vm883, nan, %v893
  %v895 = vand.u32 2147483647, %v158
  %vm896 = vcmp.le.f32.partialorder %v895, 0.7853982
  %vm897 = vcmp.lt.s32.totalorder %v158, 0
  %v898 = vand.u32 %v158, 2139095040
  %v899 = vshrl.u32 %v898, 23
  %v900 = vsub.s32 %v899, 127
  %v901 = vand.u32 2147483647, %v158
  %v902 = vand.u32 %v901, 8388607
  %v903 = vor.u32 %v902, 8388608
  %v904 = vsub.s32 0, %v903
  %v905 = vadd.s32 %v900, 1
  %vm906 = vcmp.gt.s32.totalorder %v905, 0
  %v907 = vsel %vm906, %v905, 0
  %v908 = vshrl.u32 %v907, 5
  %v909 = vand.u32 %v907, 31
  %v910 = vsub.s32 32, %v909
  %v911 = vshrl.u32 683565275, %v910
  %v912 = vshll.u32 683565275, %v909
  %v913 = vshrl.u32 2475754826, %v910
  %v914 = vor.u32 %v912, %v913
  %v915 = vshll.u32 2475754826, %v909
  %v916 = vshrl.u32 2131351028, %v910
  %v917 = vor.u32 %v915, %v916
  %v918 = vshll.u32 2131351028, %v909
  %v919 = vshrl.u32 2102212464, %v910
  %v920 = vor.u32 %v918, %v919
  %v921 = vshll.u32 2102212464, %v909
  %v922 = vshrl.u32 920167782, %v910
  %v923 = vor.u32 %v921, %v922
  %v924 = vshll.u32 920167782, %v909
  %v925 = vshrl.u32 1326507024, %v910
  %v926 = vor.u32 %v924, %v925
  %vm927 = vcmp.lt.s32.totalorder %v908, 1
  %vm928 = vcmp.lt.s32.totalorder %v908, 2
  %vm929 = vcmp.lt.s32.totalorder %v908, 3
  %vm930 = vcmp.lt.s32.totalorder %v908, 4
  %v931 = vsel %vm927, %v911, %v914
  %v932 = vsel %vm930, %v920, 2102212464
  %v933 = vsel %vm929, %v917, %v932
  %v934 = vsel %vm928, %v931, %v933
  %v935 = vsel %vm927, %v914, %v917
  %v936 = vsel %vm930, %v923, 920167782
  %v937 = vsel %vm929, %v920, %v936
  %v938 = vsel %vm928, %v935, %v937
  %v939 = vsel %vm927, %v917, %v920
  %v940 = vsel %vm930, %v926, 1326507024
  %v941 = vsel %vm929, %v923, %v940
  %v942 = vsel %vm928, %v939, %v941
  %v943 = vshll.u32 %v903, 8
  %v944 = vmul.u32.u64.compose %v943, %v942
  %v945 = vextract.low.u32 %v944
  %v946 = vextract.high.u32 %v944
  %v947 = vmul.u32.u64.compose %v943, %v938
  %v948 = vextract.low.u32 %v947
  %v949 = vextract.high.u32 %v947
  %v950 = vmul.u32 %v943, %v934
  %v951 = vadd.s32 %v946, %v948
  %vm952 = vc.u32 %v946, %v948
  %v953 = vadd.s32 %v949, 1
  %v954 = vsel %vm952, %v953, %v949
  %v955 = vadd.s32 %v950, %v954
  %v956 = vadd.s32 %v955, 536870912
  %v957 = vshrl.u32 %v956, 30
  %v958 = vshll.u32 %v957, 30
  %v959 = vsub.s32 %v955, %v958
  %vm960 = vcmp.lt.s32.totalorder %v959, 0
  %v961 = vsub.s32 0, %v959
  %v962 = vsel %vm960, %v961, %v959
  %v963 = vclz %v962
  %v964 = vsub.s32 %v963, 2
  %vm965 = vcmp.gt.s32.totalorder 0, %v964
  %v966 = vsel %vm965, 0, %v964
  %v967 = vsub.s32 32, %v966
  %v968 = vshll.u32 %v959, %v966
  %v969 = vshrl.u32 %v951, %v967
  %v970 = vor.u32 %v968, %v969
  %v971 = vsub.s32 4294967266, %v966
  %v972 = vadd.s32 %v971, 127
  %v973 = vshll.u32 %v972, 23
  %v974 = vor.u32 4788187, %v973
  %v975 = vand.u32 2147483647, %v974
  %v977 = vcvt.s32.f32 %v970
  %v978 = vmul.f32 %v977, %v975
  %v979 = vxor.u32 %v978, 2147483648
  %v980 = vsel %vm897, %v979, %v978
  %v981 = vsub.s32 4, %v957
  %v982 = vsel %vm897, %v981, %v957
  %v983 = vsel %vm896, %v158, %v980
  %v984 = vsel %vm896, 0, %v982
  %v985 = vcosq.f32.pop %v983
  %v986 = vsinq.f32.pop %v983
  %vm987 = vweird.f32 %v158
  %v988 = vadd.s32 %v984, 3
  %v989 = vand.u32 %v988, 3
  %vm990 = vcmp.lt.s32.totalorder %v989, 2
  %vm991 = vcmp.eq.s32.totalorder %v989, 0
  %v992 = vxor.u32 %v986, 2147483648
  %v993 = vsel %vm991, %v985, %v992
  %vm994 = vcmp.eq.s32.totalorder %v989, 2
  %v995 = vxor.u32 %v985, 2147483648
  %v996 = vsel %vm994, %v995, %v986
  %v997 = vsel %vm990, %v993, %v996
  %v998 = vsel %vm987, nan, %v997
  %v999 = vand.u32 2147483647, %v159
  %vm1000 = vcmp.le.f32.partialorder %v999, 0.7853982
  %vm1001 = vcmp.lt.s32.totalorder %v159, 0
  %v1002 = vand.u32 %v159, 2139095040
  %v1003 = vshrl.u32 %v1002, 23
  %v1004 = vsub.s32 %v1003, 127
  %v1005 = vand.u32 2147483647, %v159
  %v1006 = vand.u32 %v1005, 8388607
  %v1007 = vor.u32 %v1006, 8388608
  %v1008 = vsub.s32 0, %v1007
  %v1009 = vadd.s32 %v1004, 1
  %vm1010 = vcmp.gt.s32.totalorder %v1009, 0
  %v1011 = vsel %vm1010, %v1009, 0
  %v1012 = vshrl.u32 %v1011, 5
  %v1013 = vand.u32 %v1011, 31
  %v1014 = vsub.s32 32, %v1013
  %v1015 = vshrl.u32 683565275, %v1014
  %v1016 = vshll.u32 683565275, %v1013
  %v1017 = vshrl.u32 2475754826, %v1014
  %v1018 = vor.u32 %v1016, %v1017
  %v1019 = vshll.u32 2475754826, %v1013
  %v1020 = vshrl.u32 2131351028, %v1014
  %v1021 = vor.u32 %v1019, %v1020
  %v1022 = vshll.u32 2131351028, %v1013
  %v1023 = vshrl.u32 2102212464, %v1014
  %v1024 = vor.u32 %v1022, %v1023
  %v1025 = vshll.u32 2102212464, %v1013
  %v1026 = vshrl.u32 920167782, %v1014
  %v1027 = vor.u32 %v1025, %v1026
  %v1028 = vshll.u32 920167782, %v1013
  %v1029 = vshrl.u32 1326507024, %v1014
  %v1030 = vor.u32 %v1028, %v1029
  %vm1031 = vcmp.lt.s32.totalorder %v1012, 1
  %vm1032 = vcmp.lt.s32.totalorder %v1012, 2
  %vm1033 = vcmp.lt.s32.totalorder %v1012, 3
  %vm1034 = vcmp.lt.s32.totalorder %v1012, 4
  %v1035 = vsel %vm1031, %v1015, %v1018
  %v1036 = vsel %vm1034, %v1024, 2102212464
  %v1037 = vsel %vm1033, %v1021, %v1036
  %v1038 = vsel %vm1032, %v1035, %v1037
  %v1039 = vsel %vm1031, %v1018, %v1021
  %v1040 = vsel %vm1034, %v1027, 920167782
  %v1041 = vsel %vm1033, %v1024, %v1040
  %v1042 = vsel %vm1032, %v1039, %v1041
  %v1043 = vsel %vm1031, %v1021, %v1024
  %v1044 = vsel %vm1034, %v1030, 1326507024
  %v1045 = vsel %vm1033, %v1027, %v1044
  %v1046 = vsel %vm1032, %v1043, %v1045
  %v1047 = vshll.u32 %v1007, 8
  %v1048 = vmul.u32.u64.compose %v1047, %v1046
  %v1049 = vextract.low.u32 %v1048
  %v1050 = vextract.high.u32 %v1048
  %v1051 = vmul.u32.u64.compose %v1047, %v1042
  %v1052 = vextract.low.u32 %v1051
  %v1053 = vextract.high.u32 %v1051
  %v1054 = vmul.u32 %v1047, %v1038
  %v1055 = vadd.s32 %v1050, %v1052
  %vm1056 = vc.u32 %v1050, %v1052
  %v1057 = vadd.s32 %v1053, 1
  %v1058 = vsel %vm1056, %v1057, %v1053
  %v1059 = vadd.s32 %v1054, %v1058
  %v1060 = vadd.s32 %v1059, 536870912
  %v1061 = vshrl.u32 %v1060, 30
  %v1062 = vshll.u32 %v1061, 30
  %v1063 = vsub.s32 %v1059, %v1062
  %vm1064 = vcmp.lt.s32.totalorder %v1063, 0
  %v1065 = vsub.s32 0, %v1063
  %v1066 = vsel %vm1064, %v1065, %v1063
  %v1067 = vclz %v1066
  %v1068 = vsub.s32 %v1067, 2
  %vm1069 = vcmp.gt.s32.totalorder 0, %v1068
  %v1070 = vsel %vm1069, 0, %v1068
  %v1071 = vsub.s32 32, %v1070
  %v1072 = vshll.u32 %v1063, %v1070
  %v1073 = vshrl.u32 %v1055, %v1071
  %v1074 = vor.u32 %v1072, %v1073
  %v1075 = vsub.s32 4294967266, %v1070
  %v1076 = vadd.s32 %v1075, 127
  %v1077 = vshll.u32 %v1076, 23
  %v1078 = vor.u32 4788187, %v1077
  %v1079 = vand.u32 2147483647, %v1078
  %v1081 = vcvt.s32.f32 %v1074
  %v1082 = vmul.f32 %v1081, %v1079
  %v1083 = vxor.u32 %v1082, 2147483648
  %v1084 = vsel %vm1001, %v1083, %v1082
  %v1085 = vsub.s32 4, %v1061
  %v1086 = vsel %vm1001, %v1085, %v1061
  %v1087 = vsel %vm1000, %v159, %v1084
  %v1088 = vsel %vm1000, 0, %v1086
  %v1089 = vcosq.f32.pop %v1087
  %v1090 = vsinq.f32.pop %v1087
  %vm1091 = vweird.f32 %v159
  %v1092 = vadd.s32 %v1088, 3
  %v1093 = vand.u32 %v1092, 3
  %vm1094 = vcmp.lt.s32.totalorder %v1093, 2
  %vm1095 = vcmp.eq.s32.totalorder %v1093, 0
  %v1096 = vxor.u32 %v1090, 2147483648
  %v1097 = vsel %vm1095, %v1089, %v1096
  %vm1098 = vcmp.eq.s32.totalorder %v1093, 2
  %v1099 = vxor.u32 %v1089, 2147483648
  %v1100 = vsel %vm1098, %v1099, %v1090
  %v1101 = vsel %vm1094, %v1097, %v1100
  %v1102 = vsel %vm1091, nan, %v1101
  %v1103 = vand.u32 2147483647, %v160
  %vm1104 = vcmp.le.f32.partialorder %v1103, 0.7853982
  %vm1105 = vcmp.lt.s32.totalorder %v160, 0
  %v1106 = vand.u32 %v160, 2139095040
  %v1107 = vshrl.u32 %v1106, 23
  %v1108 = vsub.s32 %v1107, 127
  %v1109 = vand.u32 2147483647, %v160
  %v1110 = vand.u32 %v1109, 8388607
  %v1111 = vor.u32 %v1110, 8388608
  %v1112 = vsub.s32 0, %v1111
  %v1113 = vadd.s32 %v1108, 1
  %vm1114 = vcmp.gt.s32.totalorder %v1113, 0
  %v1115 = vsel %vm1114, %v1113, 0
  %v1116 = vshrl.u32 %v1115, 5
  %v1117 = vand.u32 %v1115, 31
  %v1118 = vsub.s32 32, %v1117
  %v1119 = vshrl.u32 683565275, %v1118
  %v1120 = vshll.u32 683565275, %v1117
  %v1121 = vshrl.u32 2475754826, %v1118
  %v1122 = vor.u32 %v1120, %v1121
  %v1123 = vshll.u32 2475754826, %v1117
  %v1124 = vshrl.u32 2131351028, %v1118
  %v1125 = vor.u32 %v1123, %v1124
  %v1126 = vshll.u32 2131351028, %v1117
  %v1127 = vshrl.u32 2102212464, %v1118
  %v1128 = vor.u32 %v1126, %v1127
  %v1129 = vshll.u32 2102212464, %v1117
  %v1130 = vshrl.u32 920167782, %v1118
  %v1131 = vor.u32 %v1129, %v1130
  %v1132 = vshll.u32 920167782, %v1117
  %v1133 = vshrl.u32 1326507024, %v1118
  %v1134 = vor.u32 %v1132, %v1133
  %vm1135 = vcmp.lt.s32.totalorder %v1116, 1
  %vm1136 = vcmp.lt.s32.totalorder %v1116, 2
  %vm1137 = vcmp.lt.s32.totalorder %v1116, 3
  %vm1138 = vcmp.lt.s32.totalorder %v1116, 4
  %v1139 = vsel %vm1135, %v1119, %v1122
  %v1140 = vsel %vm1138, %v1128, 2102212464
  %v1141 = vsel %vm1137, %v1125, %v1140
  %v1142 = vsel %vm1136, %v1139, %v1141
  %v1143 = vsel %vm1135, %v1122, %v1125
  %v1144 = vsel %vm1138, %v1131, 920167782
  %v1145 = vsel %vm1137, %v1128, %v1144
  %v1146 = vsel %vm1136, %v1143, %v1145
  %v1147 = vsel %vm1135, %v1125, %v1128
  %v1148 = vsel %vm1138, %v1134, 1326507024
  %v1149 = vsel %vm1137, %v1131, %v1148
  %v1150 = vsel %vm1136, %v1147, %v1149
  %v1151 = vshll.u32 %v1111, 8
  %v1152 = vmul.u32.u64.compose %v1151, %v1150
  %v1153 = vextract.low.u32 %v1152
  %v1154 = vextract.high.u32 %v1152
  %v1155 = vmul.u32.u64.compose %v1151, %v1146
  %v1156 = vextract.low.u32 %v1155
  %v1157 = vextract.high.u32 %v1155
  %v1158 = vmul.u32 %v1151, %v1142
  %v1159 = vadd.s32 %v1154, %v1156
  %vm1160 = vc.u32 %v1154, %v1156
  %v1161 = vadd.s32 %v1157, 1
  %v1162 = vsel %vm1160, %v1161, %v1157
  %v1163 = vadd.s32 %v1158, %v1162
  %v1164 = vadd.s32 %v1163, 536870912
  %v1165 = vshrl.u32 %v1164, 30
  %v1166 = vshll.u32 %v1165, 30
  %v1167 = vsub.s32 %v1163, %v1166
  %vm1168 = vcmp.lt.s32.totalorder %v1167, 0
  %v1169 = vsub.s32 0, %v1167
  %v1170 = vsel %vm1168, %v1169, %v1167
  %v1171 = vclz %v1170
  %v1172 = vsub.s32 %v1171, 2
  %vm1173 = vcmp.gt.s32.totalorder 0, %v1172
  %v1174 = vsel %vm1173, 0, %v1172
  %v1175 = vsub.s32 32, %v1174
  %v1176 = vshll.u32 %v1167, %v1174
  %v1177 = vshrl.u32 %v1159, %v1175
  %v1178 = vor.u32 %v1176, %v1177
  %v1179 = vsub.s32 4294967266, %v1174
  %v1180 = vadd.s32 %v1179, 127
  %v1181 = vshll.u32 %v1180, 23
  %v1182 = vor.u32 4788187, %v1181
  %v1183 = vand.u32 2147483647, %v1182
  %v1185 = vcvt.s32.f32 %v1178
  %v1186 = vmul.f32 %v1185, %v1183
  %v1187 = vxor.u32 %v1186, 2147483648
  %v1188 = vsel %vm1105, %v1187, %v1186
  %v1189 = vsub.s32 4, %v1165
  %v1190 = vsel %vm1105, %v1189, %v1165
  %v1191 = vsel %vm1104, %v160, %v1188
  %v1192 = vsel %vm1104, 0, %v1190
  %v1193 = vcosq.f32.pop %v1191
  %v1194 = vsinq.f32.pop %v1191
  %vm1195 = vweird.f32 %v160
  %v1196 = vadd.s32 %v1192, 3
  %v1197 = vand.u32 %v1196, 3
  %vm1198 = vcmp.lt.s32.totalorder %v1197, 2
  %vm1199 = vcmp.eq.s32.totalorder %v1197, 0
  %v1200 = vxor.u32 %v1194, 2147483648
  %v1201 = vsel %vm1199, %v1193, %v1200
  %vm1202 = vcmp.eq.s32.totalorder %v1197, 2
  %v1203 = vxor.u32 %v1193, 2147483648
  %v1204 = vsel %vm1202, %v1203, %v1194
  %v1205 = vsel %vm1198, %v1201, %v1204
  %v1206 = vsel %vm1195, nan, %v1205
  %v1207 = vand.u32 2147483647, %v161
  %vm1208 = vcmp.le.f32.partialorder %v1207, 0.7853982
  %vm1209 = vcmp.lt.s32.totalorder %v161, 0
  %v1210 = vand.u32 %v161, 2139095040
  %v1211 = vshrl.u32 %v1210, 23
  %v1212 = vsub.s32 %v1211, 127
  %v1213 = vand.u32 2147483647, %v161
  %v1214 = vand.u32 %v1213, 8388607
  %v1215 = vor.u32 %v1214, 8388608
  %v1216 = vsub.s32 0, %v1215
  %v1217 = vadd.s32 %v1212, 1
  %vm1218 = vcmp.gt.s32.totalorder %v1217, 0
  %v1219 = vsel %vm1218, %v1217, 0
  %v1220 = vshrl.u32 %v1219, 5
  %v1221 = vand.u32 %v1219, 31
  %v1222 = vsub.s32 32, %v1221
  %v1223 = vshrl.u32 683565275, %v1222
  %v1224 = vshll.u32 683565275, %v1221
  %v1225 = vshrl.u32 2475754826, %v1222
  %v1226 = vor.u32 %v1224, %v1225
  %v1227 = vshll.u32 2475754826, %v1221
  %v1228 = vshrl.u32 2131351028, %v1222
  %v1229 = vor.u32 %v1227, %v1228
  %v1230 = vshll.u32 2131351028, %v1221
  %v1231 = vshrl.u32 2102212464, %v1222
  %v1232 = vor.u32 %v1230, %v1231
  %v1233 = vshll.u32 2102212464, %v1221
  %v1234 = vshrl.u32 920167782, %v1222
  %v1235 = vor.u32 %v1233, %v1234
  %v1236 = vshll.u32 920167782, %v1221
  %v1237 = vshrl.u32 1326507024, %v1222
  %v1238 = vor.u32 %v1236, %v1237
  %vm1239 = vcmp.lt.s32.totalorder %v1220, 1
  %vm1240 = vcmp.lt.s32.totalorder %v1220, 2
  %vm1241 = vcmp.lt.s32.totalorder %v1220, 3
  %vm1242 = vcmp.lt.s32.totalorder %v1220, 4
  %v1243 = vsel %vm1239, %v1223, %v1226
  %v1244 = vsel %vm1242, %v1232, 2102212464
  %v1245 = vsel %vm1241, %v1229, %v1244
  %v1246 = vsel %vm1240, %v1243, %v1245
  %v1247 = vsel %vm1239, %v1226, %v1229
  %v1248 = vsel %vm1242, %v1235, 920167782
  %v1249 = vsel %vm1241, %v1232, %v1248
  %v1250 = vsel %vm1240, %v1247, %v1249
  %v1251 = vsel %vm1239, %v1229, %v1232
  %v1252 = vsel %vm1242, %v1238, 1326507024
  %v1253 = vsel %vm1241, %v1235, %v1252
  %v1254 = vsel %vm1240, %v1251, %v1253
  %v1255 = vshll.u32 %v1215, 8
  %v1256 = vmul.u32.u64.compose %v1255, %v1254
  %v1257 = vextract.low.u32 %v1256
  %v1258 = vextract.high.u32 %v1256
  %v1259 = vmul.u32.u64.compose %v1255, %v1250
  %v1260 = vextract.low.u32 %v1259
  %v1261 = vextract.high.u32 %v1259
  %v1262 = vmul.u32 %v1255, %v1246
  %v1263 = vadd.s32 %v1258, %v1260
  %vm1264 = vc.u32 %v1258, %v1260
  %v1265 = vadd.s32 %v1261, 1
  %v1266 = vsel %vm1264, %v1265, %v1261
  %v1267 = vadd.s32 %v1262, %v1266
  %v1268 = vadd.s32 %v1267, 536870912
  %v1269 = vshrl.u32 %v1268, 30
  %v1270 = vshll.u32 %v1269, 30
  %v1271 = vsub.s32 %v1267, %v1270
  %vm1272 = vcmp.lt.s32.totalorder %v1271, 0
  %v1273 = vsub.s32 0, %v1271
  %v1274 = vsel %vm1272, %v1273, %v1271
  %v1275 = vclz %v1274
  %v1276 = vsub.s32 %v1275, 2
  %vm1277 = vcmp.gt.s32.totalorder 0, %v1276
  %v1278 = vsel %vm1277, 0, %v1276
  %v1279 = vsub.s32 32, %v1278
  %v1280 = vshll.u32 %v1271, %v1278
  %v1281 = vshrl.u32 %v1263, %v1279
  %v1282 = vor.u32 %v1280, %v1281
  %v1283 = vsub.s32 4294967266, %v1278
  %v1284 = vadd.s32 %v1283, 127
  %v1285 = vshll.u32 %v1284, 23
  %v1286 = vor.u32 4788187, %v1285
  %v1287 = vand.u32 2147483647, %v1286
  %v1289 = vcvt.s32.f32 %v1282
  %v1290 = vmul.f32 %v1289, %v1287
  %v1291 = vxor.u32 %v1290, 2147483648
  %v1292 = vsel %vm1209, %v1291, %v1290
  %v1293 = vsub.s32 4, %v1269
  %v1294 = vsel %vm1209, %v1293, %v1269
  %v1295 = vsel %vm1208, %v161, %v1292
  %v1296 = vsel %vm1208, 0, %v1294
  %v1297 = vcosq.f32.pop %v1295
  %v1298 = vsinq.f32.pop %v1295
  %vm1299 = vweird.f32 %v161
  %v1300 = vadd.s32 %v1296, 3
  %v1301 = vand.u32 %v1300, 3
  %vm1302 = vcmp.lt.s32.totalorder %v1301, 2
  %vm1303 = vcmp.eq.s32.totalorder %v1301, 0
  %v1304 = vxor.u32 %v1298, 2147483648
  %v1305 = vsel %vm1303, %v1297, %v1304
  %vm1306 = vcmp.eq.s32.totalorder %v1301, 2
  %v1307 = vxor.u32 %v1297, 2147483648
  %v1308 = vsel %vm1306, %v1307, %v1298
  %v1309 = vsel %vm1302, %v1305, %v1308
  %v1310 = vsel %vm1299, nan, %v1309
  %v1311 = vand.u32 2147483647, %v162
  %vm1312 = vcmp.le.f32.partialorder %v1311, 0.7853982
  %vm1313 = vcmp.lt.s32.totalorder %v162, 0
  %v1314 = vand.u32 %v162, 2139095040
  %v1315 = vshrl.u32 %v1314, 23
  %v1316 = vsub.s32 %v1315, 127
  %v1317 = vand.u32 2147483647, %v162
  %v1318 = vand.u32 %v1317, 8388607
  %v1319 = vor.u32 %v1318, 8388608
  %v1320 = vsub.s32 0, %v1319
  %v1321 = vadd.s32 %v1316, 1
  %vm1322 = vcmp.gt.s32.totalorder %v1321, 0
  %v1323 = vsel %vm1322, %v1321, 0
  %v1324 = vshrl.u32 %v1323, 5
  %v1325 = vand.u32 %v1323, 31
  %v1326 = vsub.s32 32, %v1325
  %v1327 = vshrl.u32 683565275, %v1326
  %v1328 = vshll.u32 683565275, %v1325
  %v1329 = vshrl.u32 2475754826, %v1326
  %v1330 = vor.u32 %v1328, %v1329
  %v1331 = vshll.u32 2475754826, %v1325
  %v1332 = vshrl.u32 2131351028, %v1326
  %v1333 = vor.u32 %v1331, %v1332
  %v1334 = vshll.u32 2131351028, %v1325
  %v1335 = vshrl.u32 2102212464, %v1326
  %v1336 = vor.u32 %v1334, %v1335
  %v1337 = vshll.u32 2102212464, %v1325
  %v1338 = vshrl.u32 920167782, %v1326
  %v1339 = vor.u32 %v1337, %v1338
  %v1340 = vshll.u32 920167782, %v1325
  %v1341 = vshrl.u32 1326507024, %v1326
  %v1342 = vor.u32 %v1340, %v1341
  %vm1343 = vcmp.lt.s32.totalorder %v1324, 1
  %vm1344 = vcmp.lt.s32.totalorder %v1324, 2
  %vm1345 = vcmp.lt.s32.totalorder %v1324, 3
  %vm1346 = vcmp.lt.s32.totalorder %v1324, 4
  %v1347 = vsel %vm1343, %v1327, %v1330
  %v1348 = vsel %vm1346, %v1336, 2102212464
  %v1349 = vsel %vm1345, %v1333, %v1348
  %v1350 = vsel %vm1344, %v1347, %v1349
  %v1351 = vsel %vm1343, %v1330, %v1333
  %v1352 = vsel %vm1346, %v1339, 920167782
  %v1353 = vsel %vm1345, %v1336, %v1352
  %v1354 = vsel %vm1344, %v1351, %v1353
  %v1355 = vsel %vm1343, %v1333, %v1336
  %v1356 = vsel %vm1346, %v1342, 1326507024
  %v1357 = vsel %vm1345, %v1339, %v1356
  %v1358 = vsel %vm1344, %v1355, %v1357
  %v1359 = vshll.u32 %v1319, 8
  %v1360 = vmul.u32.u64.compose %v1359, %v1358
  %v1361 = vextract.low.u32 %v1360
  %v1362 = vextract.high.u32 %v1360
  %v1363 = vmul.u32.u64.compose %v1359, %v1354
  %v1364 = vextract.low.u32 %v1363
  %v1365 = vextract.high.u32 %v1363
  %v1366 = vmul.u32 %v1359, %v1350
  %v1367 = vadd.s32 %v1362, %v1364
  %vm1368 = vc.u32 %v1362, %v1364
  %v1369 = vadd.s32 %v1365, 1
  %v1370 = vsel %vm1368, %v1369, %v1365
  %v1371 = vadd.s32 %v1366, %v1370
  %v1372 = vadd.s32 %v1371, 536870912
  %v1373 = vshrl.u32 %v1372, 30
  %v1374 = vshll.u32 %v1373, 30
  %v1375 = vsub.s32 %v1371, %v1374
  %vm1376 = vcmp.lt.s32.totalorder %v1375, 0
  %v1377 = vsub.s32 0, %v1375
  %v1378 = vsel %vm1376, %v1377, %v1375
  %v1379 = vclz %v1378
  %v1380 = vsub.s32 %v1379, 2
  %vm1381 = vcmp.gt.s32.totalorder 0, %v1380
  %v1382 = vsel %vm1381, 0, %v1380
  %v1383 = vsub.s32 32, %v1382
  %v1384 = vshll.u32 %v1375, %v1382
  %v1385 = vshrl.u32 %v1367, %v1383
  %v1386 = vor.u32 %v1384, %v1385
  %v1387 = vsub.s32 4294967266, %v1382
  %v1388 = vadd.s32 %v1387, 127
  %v1389 = vshll.u32 %v1388, 23
  %v1390 = vor.u32 4788187, %v1389
  %v1391 = vand.u32 2147483647, %v1390
  %v1393 = vcvt.s32.f32 %v1386
  %v1394 = vmul.f32 %v1393, %v1391
  %v1395 = vxor.u32 %v1394, 2147483648
  %v1396 = vsel %vm1313, %v1395, %v1394
  %v1397 = vsub.s32 4, %v1373
  %v1398 = vsel %vm1313, %v1397, %v1373
  %v1399 = vsel %vm1312, %v162, %v1396
  %v1400 = vsel %vm1312, 0, %v1398
  %v1401 = vcosq.f32.pop %v1399
  %v1402 = vsinq.f32.pop %v1399
  %vm1403 = vweird.f32 %v162
  %v1404 = vadd.s32 %v1400, 3
  %v1405 = vand.u32 %v1404, 3
  %vm1406 = vcmp.lt.s32.totalorder %v1405, 2
  %vm1407 = vcmp.eq.s32.totalorder %v1405, 0
  %v1408 = vxor.u32 %v1402, 2147483648
  %v1409 = vsel %vm1407, %v1401, %v1408
  %vm1410 = vcmp.eq.s32.totalorder %v1405, 2
  %v1411 = vxor.u32 %v1401, 2147483648
  %v1412 = vsel %vm1410, %v1411, %v1402
  %v1413 = vsel %vm1406, %v1409, %v1412
  %v1414 = vsel %vm1403, nan, %v1413
  %v1415 = vand.u32 2147483647, %v163
  %vm1416 = vcmp.le.f32.partialorder %v1415, 0.7853982
  %vm1417 = vcmp.lt.s32.totalorder %v163, 0
  %v1418 = vand.u32 %v163, 2139095040
  %v1419 = vshrl.u32 %v1418, 23
  %v1420 = vsub.s32 %v1419, 127
  %v1421 = vand.u32 2147483647, %v163
  %v1422 = vand.u32 %v1421, 8388607
  %v1423 = vor.u32 %v1422, 8388608
  %v1424 = vsub.s32 0, %v1423
  %v1425 = vadd.s32 %v1420, 1
  %vm1426 = vcmp.gt.s32.totalorder %v1425, 0
  %v1427 = vsel %vm1426, %v1425, 0
  %v1428 = vshrl.u32 %v1427, 5
  %v1429 = vand.u32 %v1427, 31
  %v1430 = vsub.s32 32, %v1429
  %v1431 = vshrl.u32 683565275, %v1430
  %v1432 = vshll.u32 683565275, %v1429
  %v1433 = vshrl.u32 2475754826, %v1430
  %v1434 = vor.u32 %v1432, %v1433
  %v1435 = vshll.u32 2475754826, %v1429
  %v1436 = vshrl.u32 2131351028, %v1430
  %v1437 = vor.u32 %v1435, %v1436
  %v1438 = vshll.u32 2131351028, %v1429
  %v1439 = vshrl.u32 2102212464, %v1430
  %v1440 = vor.u32 %v1438, %v1439
  %v1441 = vshll.u32 2102212464, %v1429
  %v1442 = vshrl.u32 920167782, %v1430
  %v1443 = vor.u32 %v1441, %v1442
  %v1444 = vshll.u32 920167782, %v1429
  %v1445 = vshrl.u32 1326507024, %v1430
  %v1446 = vor.u32 %v1444, %v1445
  %vm1447 = vcmp.lt.s32.totalorder %v1428, 1
  %vm1448 = vcmp.lt.s32.totalorder %v1428, 2
  %vm1449 = vcmp.lt.s32.totalorder %v1428, 3
  %vm1450 = vcmp.lt.s32.totalorder %v1428, 4
  %v1451 = vsel %vm1447, %v1431, %v1434
  %v1452 = vsel %vm1450, %v1440, 2102212464
  %v1453 = vsel %vm1449, %v1437, %v1452
  %v1454 = vsel %vm1448, %v1451, %v1453
  %v1455 = vsel %vm1447, %v1434, %v1437
  %v1456 = vsel %vm1450, %v1443, 920167782
  %v1457 = vsel %vm1449, %v1440, %v1456
  %v1458 = vsel %vm1448, %v1455, %v1457
  %v1459 = vsel %vm1447, %v1437, %v1440
  %v1460 = vsel %vm1450, %v1446, 1326507024
  %v1461 = vsel %vm1449, %v1443, %v1460
  %v1462 = vsel %vm1448, %v1459, %v1461
  %v1463 = vshll.u32 %v1423, 8
  %v1464 = vmul.u32.u64.compose %v1463, %v1462
  %v1465 = vextract.low.u32 %v1464
  %v1466 = vextract.high.u32 %v1464
  %v1467 = vmul.u32.u64.compose %v1463, %v1458
  %v1468 = vextract.low.u32 %v1467
  %v1469 = vextract.high.u32 %v1467
  %v1470 = vmul.u32 %v1463, %v1454
  %v1471 = vadd.s32 %v1466, %v1468
  %vm1472 = vc.u32 %v1466, %v1468
  %v1473 = vadd.s32 %v1469, 1
  %v1474 = vsel %vm1472, %v1473, %v1469
  %v1475 = vadd.s32 %v1470, %v1474
  %v1476 = vadd.s32 %v1475, 536870912
  %v1477 = vshrl.u32 %v1476, 30
  %v1478 = vshll.u32 %v1477, 30
  %v1479 = vsub.s32 %v1475, %v1478
  %vm1480 = vcmp.lt.s32.totalorder %v1479, 0
  %v1481 = vsub.s32 0, %v1479
  %v1482 = vsel %vm1480, %v1481, %v1479
  %v1483 = vclz %v1482
  %v1484 = vsub.s32 %v1483, 2
  %vm1485 = vcmp.gt.s32.totalorder 0, %v1484
  %v1486 = vsel %vm1485, 0, %v1484
  %v1487 = vsub.s32 32, %v1486
  %v1488 = vshll.u32 %v1479, %v1486
  %v1489 = vshrl.u32 %v1471, %v1487
  %v1490 = vor.u32 %v1488, %v1489
  %v1491 = vsub.s32 4294967266, %v1486
  %v1492 = vadd.s32 %v1491, 127
  %v1493 = vshll.u32 %v1492, 23
  %v1494 = vor.u32 4788187, %v1493
  %v1495 = vand.u32 2147483647, %v1494
  %v1497 = vcvt.s32.f32 %v1490
  %v1498 = vmul.f32 %v1497, %v1495
  %v1499 = vxor.u32 %v1498, 2147483648
  %v1500 = vsel %vm1417, %v1499, %v1498
  %v1501 = vsub.s32 4, %v1477
  %v1502 = vsel %vm1417, %v1501, %v1477
  %v1503 = vsel %vm1416, %v163, %v1500
  %v1504 = vsel %vm1416, 0, %v1502
  %v1505 = vcosq.f32.pop %v1503
  %v1506 = vsinq.f32.pop %v1503
  %vm1507 = vweird.f32 %v163
  %v1508 = vadd.s32 %v1504, 3
  %v1509 = vand.u32 %v1508, 3
  %vm1510 = vcmp.lt.s32.totalorder %v1509, 2
  %vm1511 = vcmp.eq.s32.totalorder %v1509, 0
  %v1512 = vxor.u32 %v1506, 2147483648
  %v1513 = vsel %vm1511, %v1505, %v1512
  %vm1514 = vcmp.eq.s32.totalorder %v1509, 2
  %v1515 = vxor.u32 %v1505, 2147483648
  %v1516 = vsel %vm1514, %v1515, %v1506
  %v1517 = vsel %vm1510, %v1513, %v1516
  %v1518 = vsel %vm1507, nan, %v1517
  %v1519 = vand.u32 2147483647, %v164
  %vm1520 = vcmp.le.f32.partialorder %v1519, 0.7853982
  %vm1521 = vcmp.lt.s32.totalorder %v164, 0
  %v1522 = vand.u32 %v164, 2139095040
  %v1523 = vshrl.u32 %v1522, 23
  %v1524 = vsub.s32 %v1523, 127
  %v1525 = vand.u32 2147483647, %v164
  %v1526 = vand.u32 %v1525, 8388607
  %v1527 = vor.u32 %v1526, 8388608
  %v1528 = vsub.s32 0, %v1527
  %v1529 = vadd.s32 %v1524, 1
  %vm1530 = vcmp.gt.s32.totalorder %v1529, 0
  %v1531 = vsel %vm1530, %v1529, 0
  %v1532 = vshrl.u32 %v1531, 5
  %v1533 = vand.u32 %v1531, 31
  %v1534 = vsub.s32 32, %v1533
  %v1535 = vshrl.u32 683565275, %v1534
  %v1536 = vshll.u32 683565275, %v1533
  %v1537 = vshrl.u32 2475754826, %v1534
  %v1538 = vor.u32 %v1536, %v1537
  %v1539 = vshll.u32 2475754826, %v1533
  %v1540 = vshrl.u32 2131351028, %v1534
  %v1541 = vor.u32 %v1539, %v1540
  %v1542 = vshll.u32 2131351028, %v1533
  %v1543 = vshrl.u32 2102212464, %v1534
  %v1544 = vor.u32 %v1542, %v1543
  %v1545 = vshll.u32 2102212464, %v1533
  %v1546 = vshrl.u32 920167782, %v1534
  %v1547 = vor.u32 %v1545, %v1546
  %v1548 = vshll.u32 920167782, %v1533
  %v1549 = vshrl.u32 1326507024, %v1534
  %v1550 = vor.u32 %v1548, %v1549
  %vm1551 = vcmp.lt.s32.totalorder %v1532, 1
  %vm1552 = vcmp.lt.s32.totalorder %v1532, 2
  %vm1553 = vcmp.lt.s32.totalorder %v1532, 3
  %vm1554 = vcmp.lt.s32.totalorder %v1532, 4
  %v1555 = vsel %vm1551, %v1535, %v1538
  %v1556 = vsel %vm1554, %v1544, 2102212464
  %v1557 = vsel %vm1553, %v1541, %v1556
  %v1558 = vsel %vm1552, %v1555, %v1557
  %v1559 = vsel %vm1551, %v1538, %v1541
  %v1560 = vsel %vm1554, %v1547, 920167782
  %v1561 = vsel %vm1553, %v1544, %v1560
  %v1562 = vsel %vm1552, %v1559, %v1561
  %v1563 = vsel %vm1551, %v1541, %v1544
  %v1564 = vsel %vm1554, %v1550, 1326507024
  %v1565 = vsel %vm1553, %v1547, %v1564
  %v1566 = vsel %vm1552, %v1563, %v1565
  %v1567 = vshll.u32 %v1527, 8
  %v1568 = vmul.u32.u64.compose %v1567, %v1566
  %v1569 = vextract.low.u32 %v1568
  %v1570 = vextract.high.u32 %v1568
  %v1571 = vmul.u32.u64.compose %v1567, %v1562
  %v1572 = vextract.low.u32 %v1571
  %v1573 = vextract.high.u32 %v1571
  %v1574 = vmul.u32 %v1567, %v1558
  %v1575 = vadd.s32 %v1570, %v1572
  %vm1576 = vc.u32 %v1570, %v1572
  %v1577 = vadd.s32 %v1573, 1
  %v1578 = vsel %vm1576, %v1577, %v1573
  %v1579 = vadd.s32 %v1574, %v1578
  %v1580 = vadd.s32 %v1579, 536870912
  %v1581 = vshrl.u32 %v1580, 30
  %v1582 = vshll.u32 %v1581, 30
  %v1583 = vsub.s32 %v1579, %v1582
  %vm1584 = vcmp.lt.s32.totalorder %v1583, 0
  %v1585 = vsub.s32 0, %v1583
  %v1586 = vsel %vm1584, %v1585, %v1583
  %v1587 = vclz %v1586
  %v1588 = vsub.s32 %v1587, 2
  %vm1589 = vcmp.gt.s32.totalorder 0, %v1588
  %v1590 = vsel %vm1589, 0, %v1588
  %v1591 = vsub.s32 32, %v1590
  %v1592 = vshll.u32 %v1583, %v1590
  %v1593 = vshrl.u32 %v1575, %v1591
  %v1594 = vor.u32 %v1592, %v1593
  %v1595 = vsub.s32 4294967266, %v1590
  %v1596 = vadd.s32 %v1595, 127
  %v1597 = vshll.u32 %v1596, 23
  %v1598 = vor.u32 4788187, %v1597
  %v1599 = vand.u32 2147483647, %v1598
  %v1601 = vcvt.s32.f32 %v1594
  %v1602 = vmul.f32 %v1601, %v1599
  %v1603 = vxor.u32 %v1602, 2147483648
  %v1604 = vsel %vm1521, %v1603, %v1602
  %v1605 = vsub.s32 4, %v1581
  %v1606 = vsel %vm1521, %v1605, %v1581
  %v1607 = vsel %vm1520, %v164, %v1604
  %v1608 = vsel %vm1520, 0, %v1606
  %v1609 = vcosq.f32.pop %v1607
  %v1610 = vsinq.f32.pop %v1607
  %vm1611 = vweird.f32 %v164
  %v1612 = vadd.s32 %v1608, 3
  %v1613 = vand.u32 %v1612, 3
  %vm1614 = vcmp.lt.s32.totalorder %v1613, 2
  %vm1615 = vcmp.eq.s32.totalorder %v1613, 0
  %v1616 = vxor.u32 %v1610, 2147483648
  %v1617 = vsel %vm1615, %v1609, %v1616
  %vm1618 = vcmp.eq.s32.totalorder %v1613, 2
  %v1619 = vxor.u32 %v1609, 2147483648
  %v1620 = vsel %vm1618, %v1619, %v1610
  %v1621 = vsel %vm1614, %v1617, %v1620
  %v1622 = vsel %vm1611, nan, %v1621
  %v1623 = vand.u32 2147483647, %v165
  %vm1624 = vcmp.le.f32.partialorder %v1623, 0.7853982
  %vm1625 = vcmp.lt.s32.totalorder %v165, 0
  %v1626 = vand.u32 %v165, 2139095040
  %v1627 = vshrl.u32 %v1626, 23
  %v1628 = vsub.s32 %v1627, 127
  %v1629 = vand.u32 2147483647, %v165
  %v1630 = vand.u32 %v1629, 8388607
  %v1631 = vor.u32 %v1630, 8388608
  %v1632 = vsub.s32 0, %v1631
  %v1633 = vadd.s32 %v1628, 1
  %vm1634 = vcmp.gt.s32.totalorder %v1633, 0
  %v1635 = vsel %vm1634, %v1633, 0
  %v1636 = vshrl.u32 %v1635, 5
  %v1637 = vand.u32 %v1635, 31
  %v1638 = vsub.s32 32, %v1637
  %v1639 = vshrl.u32 683565275, %v1638
  %v1640 = vshll.u32 683565275, %v1637
  %v1641 = vshrl.u32 2475754826, %v1638
  %v1642 = vor.u32 %v1640, %v1641
  %v1643 = vshll.u32 2475754826, %v1637
  %v1644 = vshrl.u32 2131351028, %v1638
  %v1645 = vor.u32 %v1643, %v1644
  %v1646 = vshll.u32 2131351028, %v1637
  %v1647 = vshrl.u32 2102212464, %v1638
  %v1648 = vor.u32 %v1646, %v1647
  %v1649 = vshll.u32 2102212464, %v1637
  %v1650 = vshrl.u32 920167782, %v1638
  %v1651 = vor.u32 %v1649, %v1650
  %v1652 = vshll.u32 920167782, %v1637
  %v1653 = vshrl.u32 1326507024, %v1638
  %v1654 = vor.u32 %v1652, %v1653
  %vm1655 = vcmp.lt.s32.totalorder %v1636, 1
  %vm1656 = vcmp.lt.s32.totalorder %v1636, 2
  %vm1657 = vcmp.lt.s32.totalorder %v1636, 3
  %vm1658 = vcmp.lt.s32.totalorder %v1636, 4
  %v1659 = vsel %vm1655, %v1639, %v1642
  %v1660 = vsel %vm1658, %v1648, 2102212464
  %v1661 = vsel %vm1657, %v1645, %v1660
  %v1662 = vsel %vm1656, %v1659, %v1661
  %v1663 = vsel %vm1655, %v1642, %v1645
  %v1664 = vsel %vm1658, %v1651, 920167782
  %v1665 = vsel %vm1657, %v1648, %v1664
  %v1666 = vsel %vm1656, %v1663, %v1665
  %v1667 = vsel %vm1655, %v1645, %v1648
  %v1668 = vsel %vm1658, %v1654, 1326507024
  %v1669 = vsel %vm1657, %v1651, %v1668
  %v1670 = vsel %vm1656, %v1667, %v1669
  %v1671 = vshll.u32 %v1631, 8
  %v1672 = vmul.u32.u64.compose %v1671, %v1670
  %v1673 = vextract.low.u32 %v1672
  %v1674 = vextract.high.u32 %v1672
  %v1675 = vmul.u32.u64.compose %v1671, %v1666
  %v1676 = vextract.low.u32 %v1675
  %v1677 = vextract.high.u32 %v1675
  %v1678 = vmul.u32 %v1671, %v1662
  %v1679 = vadd.s32 %v1674, %v1676
  %vm1680 = vc.u32 %v1674, %v1676
  %v1681 = vadd.s32 %v1677, 1
  %v1682 = vsel %vm1680, %v1681, %v1677
  %v1683 = vadd.s32 %v1678, %v1682
  %v1684 = vadd.s32 %v1683, 536870912
  %v1685 = vshrl.u32 %v1684, 30
  %v1686 = vshll.u32 %v1685, 30
  %v1687 = vsub.s32 %v1683, %v1686
  %vm1688 = vcmp.lt.s32.totalorder %v1687, 0
  %v1689 = vsub.s32 0, %v1687
  %v1690 = vsel %vm1688, %v1689, %v1687
  %v1691 = vclz %v1690
  %v1692 = vsub.s32 %v1691, 2
  %vm1693 = vcmp.gt.s32.totalorder 0, %v1692
  %v1694 = vsel %vm1693, 0, %v1692
  %v1695 = vsub.s32 32, %v1694
  %v1696 = vshll.u32 %v1687, %v1694
  %v1697 = vshrl.u32 %v1679, %v1695
  %v1698 = vor.u32 %v1696, %v1697
  %v1699 = vsub.s32 4294967266, %v1694
  %v1700 = vadd.s32 %v1699, 127
  %v1701 = vshll.u32 %v1700, 23
  %v1702 = vor.u32 4788187, %v1701
  %v1703 = vand.u32 2147483647, %v1702
  %v1705 = vcvt.s32.f32 %v1698
  %v1706 = vmul.f32 %v1705, %v1703
  %v1707 = vxor.u32 %v1706, 2147483648
  %v1708 = vsel %vm1625, %v1707, %v1706
  %v1709 = vsub.s32 4, %v1685
  %v1710 = vsel %vm1625, %v1709, %v1685
  %v1711 = vsel %vm1624, %v165, %v1708
  %v1712 = vsel %vm1624, 0, %v1710
  %v1713 = vcosq.f32.pop %v1711
  %v1714 = vsinq.f32.pop %v1711
  %vm1715 = vweird.f32 %v165
  %v1716 = vadd.s32 %v1712, 3
  %v1717 = vand.u32 %v1716, 3
  %vm1718 = vcmp.lt.s32.totalorder %v1717, 2
  %vm1719 = vcmp.eq.s32.totalorder %v1717, 0
  %v1720 = vxor.u32 %v1714, 2147483648
  %v1721 = vsel %vm1719, %v1713, %v1720
  %vm1722 = vcmp.eq.s32.totalorder %v1717, 2
  %v1723 = vxor.u32 %v1713, 2147483648
  %v1724 = vsel %vm1722, %v1723, %v1714
  %v1725 = vsel %vm1718, %v1721, %v1724
  %v1726 = vsel %vm1715, nan, %v1725
  %v1727 = vand.u32 2147483647, %v166
  %vm1728 = vcmp.le.f32.partialorder %v1727, 0.7853982
  %vm1729 = vcmp.lt.s32.totalorder %v166, 0
  %v1730 = vand.u32 %v166, 2139095040
  %v1731 = vshrl.u32 %v1730, 23
  %v1732 = vsub.s32 %v1731, 127
  %v1733 = vand.u32 2147483647, %v166
  %v1734 = vand.u32 %v1733, 8388607
  %v1735 = vor.u32 %v1734, 8388608
  %v1736 = vsub.s32 0, %v1735
  %v1737 = vadd.s32 %v1732, 1
  %vm1738 = vcmp.gt.s32.totalorder %v1737, 0
  %v1739 = vsel %vm1738, %v1737, 0
  %v1740 = vshrl.u32 %v1739, 5
  %v1741 = vand.u32 %v1739, 31
  %v1742 = vsub.s32 32, %v1741
  %v1743 = vshrl.u32 683565275, %v1742
  %v1744 = vshll.u32 683565275, %v1741
  %v1745 = vshrl.u32 2475754826, %v1742
  %v1746 = vor.u32 %v1744, %v1745
  %v1747 = vshll.u32 2475754826, %v1741
  %v1748 = vshrl.u32 2131351028, %v1742
  %v1749 = vor.u32 %v1747, %v1748
  %v1750 = vshll.u32 2131351028, %v1741
  %v1751 = vshrl.u32 2102212464, %v1742
  %v1752 = vor.u32 %v1750, %v1751
  %v1753 = vshll.u32 2102212464, %v1741
  %v1754 = vshrl.u32 920167782, %v1742
  %v1755 = vor.u32 %v1753, %v1754
  %v1756 = vshll.u32 920167782, %v1741
  %v1757 = vshrl.u32 1326507024, %v1742
  %v1758 = vor.u32 %v1756, %v1757
  %vm1759 = vcmp.lt.s32.totalorder %v1740, 1
  %vm1760 = vcmp.lt.s32.totalorder %v1740, 2
  %vm1761 = vcmp.lt.s32.totalorder %v1740, 3
  %vm1762 = vcmp.lt.s32.totalorder %v1740, 4
  %v1763 = vsel %vm1759, %v1743, %v1746
  %v1764 = vsel %vm1762, %v1752, 2102212464
  %v1765 = vsel %vm1761, %v1749, %v1764
  %v1766 = vsel %vm1760, %v1763, %v1765
  %v1767 = vsel %vm1759, %v1746, %v1749
  %v1768 = vsel %vm1762, %v1755, 920167782
  %v1769 = vsel %vm1761, %v1752, %v1768
  %v1770 = vsel %vm1760, %v1767, %v1769
  %v1771 = vsel %vm1759, %v1749, %v1752
  %v1772 = vsel %vm1762, %v1758, 1326507024
  %v1773 = vsel %vm1761, %v1755, %v1772
  %v1774 = vsel %vm1760, %v1771, %v1773
  %v1775 = vshll.u32 %v1735, 8
  %v1776 = vmul.u32.u64.compose %v1775, %v1774
  %v1777 = vextract.low.u32 %v1776
  %v1778 = vextract.high.u32 %v1776
  %v1779 = vmul.u32.u64.compose %v1775, %v1770
  %v1780 = vextract.low.u32 %v1779
  %v1781 = vextract.high.u32 %v1779
  %v1782 = vmul.u32 %v1775, %v1766
  %v1783 = vadd.s32 %v1778, %v1780
  %vm1784 = vc.u32 %v1778, %v1780
  %v1785 = vadd.s32 %v1781, 1
  %v1786 = vsel %vm1784, %v1785, %v1781
  %v1787 = vadd.s32 %v1782, %v1786
  %v1788 = vadd.s32 %v1787, 536870912
  %v1789 = vshrl.u32 %v1788, 30
  %v1790 = vshll.u32 %v1789, 30
  %v1791 = vsub.s32 %v1787, %v1790
  %vm1792 = vcmp.lt.s32.totalorder %v1791, 0
  %v1793 = vsub.s32 0, %v1791
  %v1794 = vsel %vm1792, %v1793, %v1791
  %v1795 = vclz %v1794
  %v1796 = vsub.s32 %v1795, 2
  %vm1797 = vcmp.gt.s32.totalorder 0, %v1796
  %v1798 = vsel %vm1797, 0, %v1796
  %v1799 = vsub.s32 32, %v1798
  %v1800 = vshll.u32 %v1791, %v1798
  %v1801 = vshrl.u32 %v1783, %v1799
  %v1802 = vor.u32 %v1800, %v1801
  %v1803 = vsub.s32 4294967266, %v1798
  %v1804 = vadd.s32 %v1803, 127
  %v1805 = vshll.u32 %v1804, 23
  %v1806 = vor.u32 4788187, %v1805
  %v1807 = vand.u32 2147483647, %v1806
  %v1809 = vcvt.s32.f32 %v1802
  %v1810 = vmul.f32 %v1809, %v1807
  %v1811 = vxor.u32 %v1810, 2147483648
  %v1812 = vsel %vm1729, %v1811, %v1810
  %v1813 = vsub.s32 4, %v1789
  %v1814 = vsel %vm1729, %v1813, %v1789
  %v1815 = vsel %vm1728, %v166, %v1812
  %v1816 = vsel %vm1728, 0, %v1814
  %v1817 = vcosq.f32.pop %v1815
  %v1818 = vsinq.f32.pop %v1815
  %vm1819 = vweird.f32 %v166
  %v1820 = vadd.s32 %v1816, 3
  %v1821 = vand.u32 %v1820, 3
  %vm1822 = vcmp.lt.s32.totalorder %v1821, 2
  %vm1823 = vcmp.eq.s32.totalorder %v1821, 0
  %v1824 = vxor.u32 %v1818, 2147483648
  %v1825 = vsel %vm1823, %v1817, %v1824
  %vm1826 = vcmp.eq.s32.totalorder %v1821, 2
  %v1827 = vxor.u32 %v1817, 2147483648
  %v1828 = vsel %vm1826, %v1827, %v1818
  %v1829 = vsel %vm1822, %v1825, %v1828
  %v1830 = vsel %vm1819, nan, %v1829
  %v1831 = vand.u32 2147483647, %v151
  %vm1832 = vcmp.le.f32.partialorder %v1831, 0.7853982
  %vm1833 = vcmp.lt.s32.totalorder %v151, 0
  %v1834 = vand.u32 %v151, 2139095040
  %v1835 = vshrl.u32 %v1834, 23
  %v1836 = vsub.s32 %v1835, 127
  %v1837 = vand.u32 2147483647, %v151
  %v1838 = vand.u32 %v1837, 8388607
  %v1839 = vor.u32 %v1838, 8388608
  %v1840 = vsub.s32 0, %v1839
  %v1841 = vadd.s32 %v1836, 1
  %vm1842 = vcmp.gt.s32.totalorder %v1841, 0
  %v1843 = vsel %vm1842, %v1841, 0
  %v1844 = vshrl.u32 %v1843, 5
  %v1845 = vand.u32 %v1843, 31
  %v1846 = vsub.s32 32, %v1845
  %v1847 = vshrl.u32 683565275, %v1846
  %v1848 = vshll.u32 683565275, %v1845
  %v1849 = vshrl.u32 2475754826, %v1846
  %v1850 = vor.u32 %v1848, %v1849
  %v1851 = vshll.u32 2475754826, %v1845
  %v1852 = vshrl.u32 2131351028, %v1846
  %v1853 = vor.u32 %v1851, %v1852
  %v1854 = vshll.u32 2131351028, %v1845
  %v1855 = vshrl.u32 2102212464, %v1846
  %v1856 = vor.u32 %v1854, %v1855
  %v1857 = vshll.u32 2102212464, %v1845
  %v1858 = vshrl.u32 920167782, %v1846
  %v1859 = vor.u32 %v1857, %v1858
  %v1860 = vshll.u32 920167782, %v1845
  %v1861 = vshrl.u32 1326507024, %v1846
  %v1862 = vor.u32 %v1860, %v1861
  %vm1863 = vcmp.lt.s32.totalorder %v1844, 1
  %vm1864 = vcmp.lt.s32.totalorder %v1844, 2
  %vm1865 = vcmp.lt.s32.totalorder %v1844, 3
  %vm1866 = vcmp.lt.s32.totalorder %v1844, 4
  %v1867 = vsel %vm1863, %v1847, %v1850
  %v1868 = vsel %vm1866, %v1856, 2102212464
  %v1869 = vsel %vm1865, %v1853, %v1868
  %v1870 = vsel %vm1864, %v1867, %v1869
  %v1871 = vsel %vm1863, %v1850, %v1853
  %v1872 = vsel %vm1866, %v1859, 920167782
  %v1873 = vsel %vm1865, %v1856, %v1872
  %v1874 = vsel %vm1864, %v1871, %v1873
  %v1875 = vsel %vm1863, %v1853, %v1856
  %v1876 = vsel %vm1866, %v1862, 1326507024
  %v1877 = vsel %vm1865, %v1859, %v1876
  %v1878 = vsel %vm1864, %v1875, %v1877
  %v1879 = vshll.u32 %v1839, 8
  %v1880 = vmul.u32.u64.compose %v1879, %v1878
  %v1881 = vextract.low.u32 %v1880
  %v1882 = vextract.high.u32 %v1880
  %v1883 = vmul.u32.u64.compose %v1879, %v1874
  %v1884 = vextract.low.u32 %v1883
  %v1885 = vextract.high.u32 %v1883
  %v1886 = vmul.u32 %v1879, %v1870
  %v1887 = vadd.s32 %v1882, %v1884
  %vm1888 = vc.u32 %v1882, %v1884
  %v1889 = vadd.s32 %v1885, 1
  %v1890 = vsel %vm1888, %v1889, %v1885
  %v1891 = vadd.s32 %v1886, %v1890
  %v1892 = vadd.s32 %v1891, 536870912
  %v1893 = vshrl.u32 %v1892, 30
  %v1894 = vshll.u32 %v1893, 30
  %v1895 = vsub.s32 %v1891, %v1894
  %vm1896 = vcmp.lt.s32.totalorder %v1895, 0
  %v1897 = vsub.s32 0, %v1895
  %v1898 = vsel %vm1896, %v1897, %v1895
  %v1899 = vclz %v1898
  %v1900 = vsub.s32 %v1899, 2
  %vm1901 = vcmp.gt.s32.totalorder 0, %v1900
  %v1902 = vsel %vm1901, 0, %v1900
  %v1903 = vsub.s32 32, %v1902
  %v1904 = vshll.u32 %v1895, %v1902
  %v1905 = vshrl.u32 %v1887, %v1903
  %v1906 = vor.u32 %v1904, %v1905
  %v1907 = vsub.s32 4294967266, %v1902
  %v1908 = vadd.s32 %v1907, 127
  %v1909 = vshll.u32 %v1908, 23
  %v1910 = vor.u32 4788187, %v1909
  %v1911 = vand.u32 2147483647, %v1910
  %v1913 = vcvt.s32.f32 %v1906
  %v1914 = vmul.f32 %v1913, %v1911
  %v1915 = vxor.u32 %v1914, 2147483648
  %v1916 = vsel %vm1833, %v1915, %v1914
  %v1917 = vsub.s32 4, %v1893
  %v1918 = vsel %vm1833, %v1917, %v1893
  %v1919 = vsel %vm1832, %v151, %v1916
  %v1920 = vsel %vm1832, 0, %v1918
  %v1921 = vcosq.f32.pop %v1919
  %v1922 = vsinq.f32.pop %v1919
  %vm1923 = vweird.f32 %v151
  %v1924 = vand.u32 %v1920, 3
  %vm1925 = vcmp.lt.s32.totalorder %v1924, 2
  %vm1926 = vcmp.eq.s32.totalorder %v1924, 0
  %v1927 = vxor.u32 %v1922, 2147483648
  %v1928 = vsel %vm1926, %v1921, %v1927
  %vm1929 = vcmp.eq.s32.totalorder %v1924, 2
  %v1930 = vxor.u32 %v1921, 2147483648
  %v1931 = vsel %vm1929, %v1930, %v1922
  %v1932 = vsel %vm1925, %v1928, %v1931
  %v1933 = vsel %vm1923, nan, %v1932
  %v1934 = vand.u32 2147483647, %v152
  %vm1935 = vcmp.le.f32.partialorder %v1934, 0.7853982
  %vm1936 = vcmp.lt.s32.totalorder %v152, 0
  %v1937 = vand.u32 %v152, 2139095040
  %v1938 = vshrl.u32 %v1937, 23
  %v1939 = vsub.s32 %v1938, 127
  %v1940 = vand.u32 2147483647, %v152
  %v1941 = vand.u32 %v1940, 8388607
  %v1942 = vor.u32 %v1941, 8388608
  %v1943 = vsub.s32 0, %v1942
  %v1944 = vadd.s32 %v1939, 1
  %vm1945 = vcmp.gt.s32.totalorder %v1944, 0
  %v1946 = vsel %vm1945, %v1944, 0
  %v1947 = vshrl.u32 %v1946, 5
  %v1948 = vand.u32 %v1946, 31
  %v1949 = vsub.s32 32, %v1948
  %v1950 = vshrl.u32 683565275, %v1949
  %v1951 = vshll.u32 683565275, %v1948
  %v1952 = vshrl.u32 2475754826, %v1949
  %v1953 = vor.u32 %v1951, %v1952
  %v1954 = vshll.u32 2475754826, %v1948
  %v1955 = vshrl.u32 2131351028, %v1949
  %v1956 = vor.u32 %v1954, %v1955
  %v1957 = vshll.u32 2131351028, %v1948
  %v1958 = vshrl.u32 2102212464, %v1949
  %v1959 = vor.u32 %v1957, %v1958
  %v1960 = vshll.u32 2102212464, %v1948
  %v1961 = vshrl.u32 920167782, %v1949
  %v1962 = vor.u32 %v1960, %v1961
  %v1963 = vshll.u32 920167782, %v1948
  %v1964 = vshrl.u32 1326507024, %v1949
  %v1965 = vor.u32 %v1963, %v1964
  %vm1966 = vcmp.lt.s32.totalorder %v1947, 1
  %vm1967 = vcmp.lt.s32.totalorder %v1947, 2
  %vm1968 = vcmp.lt.s32.totalorder %v1947, 3
  %vm1969 = vcmp.lt.s32.totalorder %v1947, 4
  %v1970 = vsel %vm1966, %v1950, %v1953
  %v1971 = vsel %vm1969, %v1959, 2102212464
  %v1972 = vsel %vm1968, %v1956, %v1971
  %v1973 = vsel %vm1967, %v1970, %v1972
  %v1974 = vsel %vm1966, %v1953, %v1956
  %v1975 = vsel %vm1969, %v1962, 920167782
  %v1976 = vsel %vm1968, %v1959, %v1975
  %v1977 = vsel %vm1967, %v1974, %v1976
  %v1978 = vsel %vm1966, %v1956, %v1959
  %v1979 = vsel %vm1969, %v1965, 1326507024
  %v1980 = vsel %vm1968, %v1962, %v1979
  %v1981 = vsel %vm1967, %v1978, %v1980
  %v1982 = vshll.u32 %v1942, 8
  %v1983 = vmul.u32.u64.compose %v1982, %v1981
  %v1984 = vextract.low.u32 %v1983
  %v1985 = vextract.high.u32 %v1983
  %v1986 = vmul.u32.u64.compose %v1982, %v1977
  %v1987 = vextract.low.u32 %v1986
  %v1988 = vextract.high.u32 %v1986
  %v1989 = vmul.u32 %v1982, %v1973
  %v1990 = vadd.s32 %v1985, %v1987
  %vm1991 = vc.u32 %v1985, %v1987
  %v1992 = vadd.s32 %v1988, 1
  %v1993 = vsel %vm1991, %v1992, %v1988
  %v1994 = vadd.s32 %v1989, %v1993
  %v1995 = vadd.s32 %v1994, 536870912
  %v1996 = vshrl.u32 %v1995, 30
  %v1997 = vshll.u32 %v1996, 30
  %v1998 = vsub.s32 %v1994, %v1997
  %vm1999 = vcmp.lt.s32.totalorder %v1998, 0
  %v2000 = vsub.s32 0, %v1998
  %v2001 = vsel %vm1999, %v2000, %v1998
  %v2002 = vclz %v2001
  %v2003 = vsub.s32 %v2002, 2
  %vm2004 = vcmp.gt.s32.totalorder 0, %v2003
  %v2005 = vsel %vm2004, 0, %v2003
  %v2006 = vsub.s32 32, %v2005
  %v2007 = vshll.u32 %v1998, %v2005
  %v2008 = vshrl.u32 %v1990, %v2006
  %v2009 = vor.u32 %v2007, %v2008
  %v2010 = vsub.s32 4294967266, %v2005
  %v2011 = vadd.s32 %v2010, 127
  %v2012 = vshll.u32 %v2011, 23
  %v2013 = vor.u32 4788187, %v2012
  %v2014 = vand.u32 2147483647, %v2013
  %v2016 = vcvt.s32.f32 %v2009
  %v2017 = vmul.f32 %v2016, %v2014
  %v2018 = vxor.u32 %v2017, 2147483648
  %v2019 = vsel %vm1936, %v2018, %v2017
  %v2020 = vsub.s32 4, %v1996
  %v2021 = vsel %vm1936, %v2020, %v1996
  %v2022 = vsel %vm1935, %v152, %v2019
  %v2023 = vsel %vm1935, 0, %v2021
  %v2024 = vcosq.f32.pop %v2022
  %v2025 = vsinq.f32.pop %v2022
  %vm2026 = vweird.f32 %v152
  %v2027 = vand.u32 %v2023, 3
  %vm2028 = vcmp.lt.s32.totalorder %v2027, 2
  %vm2029 = vcmp.eq.s32.totalorder %v2027, 0
  %v2030 = vxor.u32 %v2025, 2147483648
  %v2031 = vsel %vm2029, %v2024, %v2030
  %vm2032 = vcmp.eq.s32.totalorder %v2027, 2
  %v2033 = vxor.u32 %v2024, 2147483648
  %v2034 = vsel %vm2032, %v2033, %v2025
  %v2035 = vsel %vm2028, %v2031, %v2034
  %v2036 = vsel %vm2026, nan, %v2035
  %v2037 = vand.u32 2147483647, %v153
  %vm2038 = vcmp.le.f32.partialorder %v2037, 0.7853982
  %vm2039 = vcmp.lt.s32.totalorder %v153, 0
  %v2040 = vand.u32 %v153, 2139095040
  %v2041 = vshrl.u32 %v2040, 23
  %v2042 = vsub.s32 %v2041, 127
  %v2043 = vand.u32 2147483647, %v153
  %v2044 = vand.u32 %v2043, 8388607
  %v2045 = vor.u32 %v2044, 8388608
  %v2046 = vsub.s32 0, %v2045
  %v2047 = vadd.s32 %v2042, 1
  %vm2048 = vcmp.gt.s32.totalorder %v2047, 0
  %v2049 = vsel %vm2048, %v2047, 0
  %v2050 = vshrl.u32 %v2049, 5
  %v2051 = vand.u32 %v2049, 31
  %v2052 = vsub.s32 32, %v2051
  %v2053 = vshrl.u32 683565275, %v2052
  %v2054 = vshll.u32 683565275, %v2051
  %v2055 = vshrl.u32 2475754826, %v2052
  %v2056 = vor.u32 %v2054, %v2055
  %v2057 = vshll.u32 2475754826, %v2051
  %v2058 = vshrl.u32 2131351028, %v2052
  %v2059 = vor.u32 %v2057, %v2058
  %v2060 = vshll.u32 2131351028, %v2051
  %v2061 = vshrl.u32 2102212464, %v2052
  %v2062 = vor.u32 %v2060, %v2061
  %v2063 = vshll.u32 2102212464, %v2051
  %v2064 = vshrl.u32 920167782, %v2052
  %v2065 = vor.u32 %v2063, %v2064
  %v2066 = vshll.u32 920167782, %v2051
  %v2067 = vshrl.u32 1326507024, %v2052
  %v2068 = vor.u32 %v2066, %v2067
  %vm2069 = vcmp.lt.s32.totalorder %v2050, 1
  %vm2070 = vcmp.lt.s32.totalorder %v2050, 2
  %vm2071 = vcmp.lt.s32.totalorder %v2050, 3
  %vm2072 = vcmp.lt.s32.totalorder %v2050, 4
  %v2073 = vsel %vm2069, %v2053, %v2056
  %v2074 = vsel %vm2072, %v2062, 2102212464
  %v2075 = vsel %vm2071, %v2059, %v2074
  %v2076 = vsel %vm2070, %v2073, %v2075
  %v2077 = vsel %vm2069, %v2056, %v2059
  %v2078 = vsel %vm2072, %v2065, 920167782
  %v2079 = vsel %vm2071, %v2062, %v2078
  %v2080 = vsel %vm2070, %v2077, %v2079
  %v2081 = vsel %vm2069, %v2059, %v2062
  %v2082 = vsel %vm2072, %v2068, 1326507024
  %v2083 = vsel %vm2071, %v2065, %v2082
  %v2084 = vsel %vm2070, %v2081, %v2083
  %v2085 = vshll.u32 %v2045, 8
  %v2086 = vmul.u32.u64.compose %v2085, %v2084
  %v2087 = vextract.low.u32 %v2086
  %v2088 = vextract.high.u32 %v2086
  %v2089 = vmul.u32.u64.compose %v2085, %v2080
  %v2090 = vextract.low.u32 %v2089
  %v2091 = vextract.high.u32 %v2089
  %v2092 = vmul.u32 %v2085, %v2076
  %v2093 = vadd.s32 %v2088, %v2090
  %vm2094 = vc.u32 %v2088, %v2090
  %v2095 = vadd.s32 %v2091, 1
  %v2096 = vsel %vm2094, %v2095, %v2091
  %v2097 = vadd.s32 %v2092, %v2096
  %v2098 = vadd.s32 %v2097, 536870912
  %v2099 = vshrl.u32 %v2098, 30
  %v2100 = vshll.u32 %v2099, 30
  %v2101 = vsub.s32 %v2097, %v2100
  %vm2102 = vcmp.lt.s32.totalorder %v2101, 0
  %v2103 = vsub.s32 0, %v2101
  %v2104 = vsel %vm2102, %v2103, %v2101
  %v2105 = vclz %v2104
  %v2106 = vsub.s32 %v2105, 2
  %vm2107 = vcmp.gt.s32.totalorder 0, %v2106
  %v2108 = vsel %vm2107, 0, %v2106
  %v2109 = vsub.s32 32, %v2108
  %v2110 = vshll.u32 %v2101, %v2108
  %v2111 = vshrl.u32 %v2093, %v2109
  %v2112 = vor.u32 %v2110, %v2111
  %v2113 = vsub.s32 4294967266, %v2108
  %v2114 = vadd.s32 %v2113, 127
  %v2115 = vshll.u32 %v2114, 23
  %v2116 = vor.u32 4788187, %v2115
  %v2117 = vand.u32 2147483647, %v2116
  %v2119 = vcvt.s32.f32 %v2112
  %v2120 = vmul.f32 %v2119, %v2117
  %v2121 = vxor.u32 %v2120, 2147483648
  %v2122 = vsel %vm2039, %v2121, %v2120
  %v2123 = vsub.s32 4, %v2099
  %v2124 = vsel %vm2039, %v2123, %v2099
  %v2125 = vsel %vm2038, %v153, %v2122
  %v2126 = vsel %vm2038, 0, %v2124
  %v2127 = vcosq.f32.pop %v2125
  %v2128 = vsinq.f32.pop %v2125
  %vm2129 = vweird.f32 %v153
  %v2130 = vand.u32 %v2126, 3
  %vm2131 = vcmp.lt.s32.totalorder %v2130, 2
  %vm2132 = vcmp.eq.s32.totalorder %v2130, 0
  %v2133 = vxor.u32 %v2128, 2147483648
  %v2134 = vsel %vm2132, %v2127, %v2133
  %vm2135 = vcmp.eq.s32.totalorder %v2130, 2
  %v2136 = vxor.u32 %v2127, 2147483648
  %v2137 = vsel %vm2135, %v2136, %v2128
  %v2138 = vsel %vm2131, %v2134, %v2137
  %v2139 = vsel %vm2129, nan, %v2138
  %v2140 = vand.u32 2147483647, %v154
  %vm2141 = vcmp.le.f32.partialorder %v2140, 0.7853982
  %vm2142 = vcmp.lt.s32.totalorder %v154, 0
  %v2143 = vand.u32 %v154, 2139095040
  %v2144 = vshrl.u32 %v2143, 23
  %v2145 = vsub.s32 %v2144, 127
  %v2146 = vand.u32 2147483647, %v154
  %v2147 = vand.u32 %v2146, 8388607
  %v2148 = vor.u32 %v2147, 8388608
  %v2149 = vsub.s32 0, %v2148
  %v2150 = vadd.s32 %v2145, 1
  %vm2151 = vcmp.gt.s32.totalorder %v2150, 0
  %v2152 = vsel %vm2151, %v2150, 0
  %v2153 = vshrl.u32 %v2152, 5
  %v2154 = vand.u32 %v2152, 31
  %v2155 = vsub.s32 32, %v2154
  %v2156 = vshrl.u32 683565275, %v2155
  %v2157 = vshll.u32 683565275, %v2154
  %v2158 = vshrl.u32 2475754826, %v2155
  %v2159 = vor.u32 %v2157, %v2158
  %v2160 = vshll.u32 2475754826, %v2154
  %v2161 = vshrl.u32 2131351028, %v2155
  %v2162 = vor.u32 %v2160, %v2161
  %v2163 = vshll.u32 2131351028, %v2154
  %v2164 = vshrl.u32 2102212464, %v2155
  %v2165 = vor.u32 %v2163, %v2164
  %v2166 = vshll.u32 2102212464, %v2154
  %v2167 = vshrl.u32 920167782, %v2155
  %v2168 = vor.u32 %v2166, %v2167
  %v2169 = vshll.u32 920167782, %v2154
  %v2170 = vshrl.u32 1326507024, %v2155
  %v2171 = vor.u32 %v2169, %v2170
  %vm2172 = vcmp.lt.s32.totalorder %v2153, 1
  %vm2173 = vcmp.lt.s32.totalorder %v2153, 2
  %vm2174 = vcmp.lt.s32.totalorder %v2153, 3
  %vm2175 = vcmp.lt.s32.totalorder %v2153, 4
  %v2176 = vsel %vm2172, %v2156, %v2159
  %v2177 = vsel %vm2175, %v2165, 2102212464
  %v2178 = vsel %vm2174, %v2162, %v2177
  %v2179 = vsel %vm2173, %v2176, %v2178
  %v2180 = vsel %vm2172, %v2159, %v2162
  %v2181 = vsel %vm2175, %v2168, 920167782
  %v2182 = vsel %vm2174, %v2165, %v2181
  %v2183 = vsel %vm2173, %v2180, %v2182
  %v2184 = vsel %vm2172, %v2162, %v2165
  %v2185 = vsel %vm2175, %v2171, 1326507024
  %v2186 = vsel %vm2174, %v2168, %v2185
  %v2187 = vsel %vm2173, %v2184, %v2186
  %v2188 = vshll.u32 %v2148, 8
  %v2189 = vmul.u32.u64.compose %v2188, %v2187
  %v2190 = vextract.low.u32 %v2189
  %v2191 = vextract.high.u32 %v2189
  %v2192 = vmul.u32.u64.compose %v2188, %v2183
  %v2193 = vextract.low.u32 %v2192
  %v2194 = vextract.high.u32 %v2192
  %v2195 = vmul.u32 %v2188, %v2179
  %v2196 = vadd.s32 %v2191, %v2193
  %vm2197 = vc.u32 %v2191, %v2193
  %v2198 = vadd.s32 %v2194, 1
  %v2199 = vsel %vm2197, %v2198, %v2194
  %v2200 = vadd.s32 %v2195, %v2199
  %v2201 = vadd.s32 %v2200, 536870912
  %v2202 = vshrl.u32 %v2201, 30
  %v2203 = vshll.u32 %v2202, 30
  %v2204 = vsub.s32 %v2200, %v2203
  %vm2205 = vcmp.lt.s32.totalorder %v2204, 0
  %v2206 = vsub.s32 0, %v2204
  %v2207 = vsel %vm2205, %v2206, %v2204
  %v2208 = vclz %v2207
  %v2209 = vsub.s32 %v2208, 2
  %vm2210 = vcmp.gt.s32.totalorder 0, %v2209
  %v2211 = vsel %vm2210, 0, %v2209
  %v2212 = vsub.s32 32, %v2211
  %v2213 = vshll.u32 %v2204, %v2211
  %v2214 = vshrl.u32 %v2196, %v2212
  %v2215 = vor.u32 %v2213, %v2214
  %v2216 = vsub.s32 4294967266, %v2211
  %v2217 = vadd.s32 %v2216, 127
  %v2218 = vshll.u32 %v2217, 23
  %v2219 = vor.u32 4788187, %v2218
  %v2220 = vand.u32 2147483647, %v2219
  %v2222 = vcvt.s32.f32 %v2215
  %v2223 = vmul.f32 %v2222, %v2220
  %v2224 = vxor.u32 %v2223, 2147483648
  %v2225 = vsel %vm2142, %v2224, %v2223
  %v2226 = vsub.s32 4, %v2202
  %v2227 = vsel %vm2142, %v2226, %v2202
  %v2228 = vsel %vm2141, %v154, %v2225
  %v2229 = vsel %vm2141, 0, %v2227
  %v2230 = vcosq.f32.pop %v2228
  %v2231 = vsinq.f32.pop %v2228
  %vm2232 = vweird.f32 %v154
  %v2233 = vand.u32 %v2229, 3
  %vm2234 = vcmp.lt.s32.totalorder %v2233, 2
  %vm2235 = vcmp.eq.s32.totalorder %v2233, 0
  %v2236 = vxor.u32 %v2231, 2147483648
  %v2237 = vsel %vm2235, %v2230, %v2236
  %vm2238 = vcmp.eq.s32.totalorder %v2233, 2
  %v2239 = vxor.u32 %v2230, 2147483648
  %v2240 = vsel %vm2238, %v2239, %v2231
  %v2241 = vsel %vm2234, %v2237, %v2240
  %v2242 = vsel %vm2232, nan, %v2241
  %v2243 = vand.u32 2147483647, %v155
  %vm2244 = vcmp.le.f32.partialorder %v2243, 0.7853982
  %vm2245 = vcmp.lt.s32.totalorder %v155, 0
  %v2246 = vand.u32 %v155, 2139095040
  %v2247 = vshrl.u32 %v2246, 23
  %v2248 = vsub.s32 %v2247, 127
  %v2249 = vand.u32 2147483647, %v155
  %v2250 = vand.u32 %v2249, 8388607
  %v2251 = vor.u32 %v2250, 8388608
  %v2252 = vsub.s32 0, %v2251
  %v2253 = vadd.s32 %v2248, 1
  %vm2254 = vcmp.gt.s32.totalorder %v2253, 0
  %v2255 = vsel %vm2254, %v2253, 0
  %v2256 = vshrl.u32 %v2255, 5
  %v2257 = vand.u32 %v2255, 31
  %v2258 = vsub.s32 32, %v2257
  %v2259 = vshrl.u32 683565275, %v2258
  %v2260 = vshll.u32 683565275, %v2257
  %v2261 = vshrl.u32 2475754826, %v2258
  %v2262 = vor.u32 %v2260, %v2261
  %v2263 = vshll.u32 2475754826, %v2257
  %v2264 = vshrl.u32 2131351028, %v2258
  %v2265 = vor.u32 %v2263, %v2264
  %v2266 = vshll.u32 2131351028, %v2257
  %v2267 = vshrl.u32 2102212464, %v2258
  %v2268 = vor.u32 %v2266, %v2267
  %v2269 = vshll.u32 2102212464, %v2257
  %v2270 = vshrl.u32 920167782, %v2258
  %v2271 = vor.u32 %v2269, %v2270
  %v2272 = vshll.u32 920167782, %v2257
  %v2273 = vshrl.u32 1326507024, %v2258
  %v2274 = vor.u32 %v2272, %v2273
  %vm2275 = vcmp.lt.s32.totalorder %v2256, 1
  %vm2276 = vcmp.lt.s32.totalorder %v2256, 2
  %vm2277 = vcmp.lt.s32.totalorder %v2256, 3
  %vm2278 = vcmp.lt.s32.totalorder %v2256, 4
  %v2279 = vsel %vm2275, %v2259, %v2262
  %v2280 = vsel %vm2278, %v2268, 2102212464
  %v2281 = vsel %vm2277, %v2265, %v2280
  %v2282 = vsel %vm2276, %v2279, %v2281
  %v2283 = vsel %vm2275, %v2262, %v2265
  %v2284 = vsel %vm2278, %v2271, 920167782
  %v2285 = vsel %vm2277, %v2268, %v2284
  %v2286 = vsel %vm2276, %v2283, %v2285
  %v2287 = vsel %vm2275, %v2265, %v2268
  %v2288 = vsel %vm2278, %v2274, 1326507024
  %v2289 = vsel %vm2277, %v2271, %v2288
  %v2290 = vsel %vm2276, %v2287, %v2289
  %v2291 = vshll.u32 %v2251, 8
  %v2292 = vmul.u32.u64.compose %v2291, %v2290
  %v2293 = vextract.low.u32 %v2292
  %v2294 = vextract.high.u32 %v2292
  %v2295 = vmul.u32.u64.compose %v2291, %v2286
  %v2296 = vextract.low.u32 %v2295
  %v2297 = vextract.high.u32 %v2295
  %v2298 = vmul.u32 %v2291, %v2282
  %v2299 = vadd.s32 %v2294, %v2296
  %vm2300 = vc.u32 %v2294, %v2296
  %v2301 = vadd.s32 %v2297, 1
  %v2302 = vsel %vm2300, %v2301, %v2297
  %v2303 = vadd.s32 %v2298, %v2302
  %v2304 = vadd.s32 %v2303, 536870912
  %v2305 = vshrl.u32 %v2304, 30
  %v2306 = vshll.u32 %v2305, 30
  %v2307 = vsub.s32 %v2303, %v2306
  %vm2308 = vcmp.lt.s32.totalorder %v2307, 0
  %v2309 = vsub.s32 0, %v2307
  %v2310 = vsel %vm2308, %v2309, %v2307
  %v2311 = vclz %v2310
  %v2312 = vsub.s32 %v2311, 2
  %vm2313 = vcmp.gt.s32.totalorder 0, %v2312
  %v2314 = vsel %vm2313, 0, %v2312
  %v2315 = vsub.s32 32, %v2314
  %v2316 = vshll.u32 %v2307, %v2314
  %v2317 = vshrl.u32 %v2299, %v2315
  %v2318 = vor.u32 %v2316, %v2317
  %v2319 = vsub.s32 4294967266, %v2314
  %v2320 = vadd.s32 %v2319, 127
  %v2321 = vshll.u32 %v2320, 23
  %v2322 = vor.u32 4788187, %v2321
  %v2323 = vand.u32 2147483647, %v2322
  %v2325 = vcvt.s32.f32 %v2318
  %v2326 = vmul.f32 %v2325, %v2323
  %v2327 = vxor.u32 %v2326, 2147483648
  %v2328 = vsel %vm2245, %v2327, %v2326
  %v2329 = vsub.s32 4, %v2305
  %v2330 = vsel %vm2245, %v2329, %v2305
  %v2331 = vsel %vm2244, %v155, %v2328
  %v2332 = vsel %vm2244, 0, %v2330
  %v2333 = vcosq.f32.pop %v2331
  %v2334 = vsinq.f32.pop %v2331
  %vm2335 = vweird.f32 %v155
  %v2336 = vand.u32 %v2332, 3
  %vm2337 = vcmp.lt.s32.totalorder %v2336, 2
  %vm2338 = vcmp.eq.s32.totalorder %v2336, 0
  %v2339 = vxor.u32 %v2334, 2147483648
  %v2340 = vsel %vm2338, %v2333, %v2339
  %vm2341 = vcmp.eq.s32.totalorder %v2336, 2
  %v2342 = vxor.u32 %v2333, 2147483648
  %v2343 = vsel %vm2341, %v2342, %v2334
  %v2344 = vsel %vm2337, %v2340, %v2343
  %v2345 = vsel %vm2335, nan, %v2344
  %v2346 = vand.u32 2147483647, %v156
  %vm2347 = vcmp.le.f32.partialorder %v2346, 0.7853982
  %vm2348 = vcmp.lt.s32.totalorder %v156, 0
  %v2349 = vand.u32 %v156, 2139095040
  %v2350 = vshrl.u32 %v2349, 23
  %v2351 = vsub.s32 %v2350, 127
  %v2352 = vand.u32 2147483647, %v156
  %v2353 = vand.u32 %v2352, 8388607
  %v2354 = vor.u32 %v2353, 8388608
  %v2355 = vsub.s32 0, %v2354
  %v2356 = vadd.s32 %v2351, 1
  %vm2357 = vcmp.gt.s32.totalorder %v2356, 0
  %v2358 = vsel %vm2357, %v2356, 0
  %v2359 = vshrl.u32 %v2358, 5
  %v2360 = vand.u32 %v2358, 31
  %v2361 = vsub.s32 32, %v2360
  %v2362 = vshrl.u32 683565275, %v2361
  %v2363 = vshll.u32 683565275, %v2360
  %v2364 = vshrl.u32 2475754826, %v2361
  %v2365 = vor.u32 %v2363, %v2364
  %v2366 = vshll.u32 2475754826, %v2360
  %v2367 = vshrl.u32 2131351028, %v2361
  %v2368 = vor.u32 %v2366, %v2367
  %v2369 = vshll.u32 2131351028, %v2360
  %v2370 = vshrl.u32 2102212464, %v2361
  %v2371 = vor.u32 %v2369, %v2370
  %v2372 = vshll.u32 2102212464, %v2360
  %v2373 = vshrl.u32 920167782, %v2361
  %v2374 = vor.u32 %v2372, %v2373
  %v2375 = vshll.u32 920167782, %v2360
  %v2376 = vshrl.u32 1326507024, %v2361
  %v2377 = vor.u32 %v2375, %v2376
  %vm2378 = vcmp.lt.s32.totalorder %v2359, 1
  %vm2379 = vcmp.lt.s32.totalorder %v2359, 2
  %vm2380 = vcmp.lt.s32.totalorder %v2359, 3
  %vm2381 = vcmp.lt.s32.totalorder %v2359, 4
  %v2382 = vsel %vm2378, %v2362, %v2365
  %v2383 = vsel %vm2381, %v2371, 2102212464
  %v2384 = vsel %vm2380, %v2368, %v2383
  %v2385 = vsel %vm2379, %v2382, %v2384
  %v2386 = vsel %vm2378, %v2365, %v2368
  %v2387 = vsel %vm2381, %v2374, 920167782
  %v2388 = vsel %vm2380, %v2371, %v2387
  %v2389 = vsel %vm2379, %v2386, %v2388
  %v2390 = vsel %vm2378, %v2368, %v2371
  %v2391 = vsel %vm2381, %v2377, 1326507024
  %v2392 = vsel %vm2380, %v2374, %v2391
  %v2393 = vsel %vm2379, %v2390, %v2392
  %v2394 = vshll.u32 %v2354, 8
  %v2395 = vmul.u32.u64.compose %v2394, %v2393
  %v2396 = vextract.low.u32 %v2395
  %v2397 = vextract.high.u32 %v2395
  %v2398 = vmul.u32.u64.compose %v2394, %v2389
  %v2399 = vextract.low.u32 %v2398
  %v2400 = vextract.high.u32 %v2398
  %v2401 = vmul.u32 %v2394, %v2385
  %v2402 = vadd.s32 %v2397, %v2399
  %vm2403 = vc.u32 %v2397, %v2399
  %v2404 = vadd.s32 %v2400, 1
  %v2405 = vsel %vm2403, %v2404, %v2400
  %v2406 = vadd.s32 %v2401, %v2405
  %v2407 = vadd.s32 %v2406, 536870912
  %v2408 = vshrl.u32 %v2407, 30
  %v2409 = vshll.u32 %v2408, 30
  %v2410 = vsub.s32 %v2406, %v2409
  %vm2411 = vcmp.lt.s32.totalorder %v2410, 0
  %v2412 = vsub.s32 0, %v2410
  %v2413 = vsel %vm2411, %v2412, %v2410
  %v2414 = vclz %v2413
  %v2415 = vsub.s32 %v2414, 2
  %vm2416 = vcmp.gt.s32.totalorder 0, %v2415
  %v2417 = vsel %vm2416, 0, %v2415
  %v2418 = vsub.s32 32, %v2417
  %v2419 = vshll.u32 %v2410, %v2417
  %v2420 = vshrl.u32 %v2402, %v2418
  %v2421 = vor.u32 %v2419, %v2420
  %v2422 = vsub.s32 4294967266, %v2417
  %v2423 = vadd.s32 %v2422, 127
  %v2424 = vshll.u32 %v2423, 23
  %v2425 = vor.u32 4788187, %v2424
  %v2426 = vand.u32 2147483647, %v2425
  %v2428 = vcvt.s32.f32 %v2421
  %v2429 = vmul.f32 %v2428, %v2426
  %v2430 = vxor.u32 %v2429, 2147483648
  %v2431 = vsel %vm2348, %v2430, %v2429
  %v2432 = vsub.s32 4, %v2408
  %v2433 = vsel %vm2348, %v2432, %v2408
  %v2434 = vsel %vm2347, %v156, %v2431
  %v2435 = vsel %vm2347, 0, %v2433
  %v2436 = vcosq.f32.pop %v2434
  %v2437 = vsinq.f32.pop %v2434
  %vm2438 = vweird.f32 %v156
  %v2439 = vand.u32 %v2435, 3
  %vm2440 = vcmp.lt.s32.totalorder %v2439, 2
  %vm2441 = vcmp.eq.s32.totalorder %v2439, 0
  %v2442 = vxor.u32 %v2437, 2147483648
  %v2443 = vsel %vm2441, %v2436, %v2442
  %vm2444 = vcmp.eq.s32.totalorder %v2439, 2
  %v2445 = vxor.u32 %v2436, 2147483648
  %v2446 = vsel %vm2444, %v2445, %v2437
  %v2447 = vsel %vm2440, %v2443, %v2446
  %v2448 = vsel %vm2438, nan, %v2447
  %v2449 = vand.u32 2147483647, %v157
  %vm2450 = vcmp.le.f32.partialorder %v2449, 0.7853982
  %vm2451 = vcmp.lt.s32.totalorder %v157, 0
  %v2452 = vand.u32 %v157, 2139095040
  %v2453 = vshrl.u32 %v2452, 23
  %v2454 = vsub.s32 %v2453, 127
  %v2455 = vand.u32 2147483647, %v157
  %v2456 = vand.u32 %v2455, 8388607
  %v2457 = vor.u32 %v2456, 8388608
  %v2458 = vsub.s32 0, %v2457
  %v2459 = vadd.s32 %v2454, 1
  %vm2460 = vcmp.gt.s32.totalorder %v2459, 0
  %v2461 = vsel %vm2460, %v2459, 0
  %v2462 = vshrl.u32 %v2461, 5
  %v2463 = vand.u32 %v2461, 31
  %v2464 = vsub.s32 32, %v2463
  %v2465 = vshrl.u32 683565275, %v2464
  %v2466 = vshll.u32 683565275, %v2463
  %v2467 = vshrl.u32 2475754826, %v2464
  %v2468 = vor.u32 %v2466, %v2467
  %v2469 = vshll.u32 2475754826, %v2463
  %v2470 = vshrl.u32 2131351028, %v2464
  %v2471 = vor.u32 %v2469, %v2470
  %v2472 = vshll.u32 2131351028, %v2463
  %v2473 = vshrl.u32 2102212464, %v2464
  %v2474 = vor.u32 %v2472, %v2473
  %v2475 = vshll.u32 2102212464, %v2463
  %v2476 = vshrl.u32 920167782, %v2464
  %v2477 = vor.u32 %v2475, %v2476
  %v2478 = vshll.u32 920167782, %v2463
  %v2479 = vshrl.u32 1326507024, %v2464
  %v2480 = vor.u32 %v2478, %v2479
  %vm2481 = vcmp.lt.s32.totalorder %v2462, 1
  %vm2482 = vcmp.lt.s32.totalorder %v2462, 2
  %vm2483 = vcmp.lt.s32.totalorder %v2462, 3
  %vm2484 = vcmp.lt.s32.totalorder %v2462, 4
  %v2485 = vsel %vm2481, %v2465, %v2468
  %v2486 = vsel %vm2484, %v2474, 2102212464
  %v2487 = vsel %vm2483, %v2471, %v2486
  %v2488 = vsel %vm2482, %v2485, %v2487
  %v2489 = vsel %vm2481, %v2468, %v2471
  %v2490 = vsel %vm2484, %v2477, 920167782
  %v2491 = vsel %vm2483, %v2474, %v2490
  %v2492 = vsel %vm2482, %v2489, %v2491
  %v2493 = vsel %vm2481, %v2471, %v2474
  %v2494 = vsel %vm2484, %v2480, 1326507024
  %v2495 = vsel %vm2483, %v2477, %v2494
  %v2496 = vsel %vm2482, %v2493, %v2495
  %v2497 = vshll.u32 %v2457, 8
  %v2498 = vmul.u32.u64.compose %v2497, %v2496
  %v2499 = vextract.low.u32 %v2498
  %v2500 = vextract.high.u32 %v2498
  %v2501 = vmul.u32.u64.compose %v2497, %v2492
  %v2502 = vextract.low.u32 %v2501
  %v2503 = vextract.high.u32 %v2501
  %v2504 = vmul.u32 %v2497, %v2488
  %v2505 = vadd.s32 %v2500, %v2502
  %vm2506 = vc.u32 %v2500, %v2502
  %v2507 = vadd.s32 %v2503, 1
  %v2508 = vsel %vm2506, %v2507, %v2503
  %v2509 = vadd.s32 %v2504, %v2508
  %v2510 = vadd.s32 %v2509, 536870912
  %v2511 = vshrl.u32 %v2510, 30
  %v2512 = vshll.u32 %v2511, 30
  %v2513 = vsub.s32 %v2509, %v2512
  %vm2514 = vcmp.lt.s32.totalorder %v2513, 0
  %v2515 = vsub.s32 0, %v2513
  %v2516 = vsel %vm2514, %v2515, %v2513
  %v2517 = vclz %v2516
  %v2518 = vsub.s32 %v2517, 2
  %vm2519 = vcmp.gt.s32.totalorder 0, %v2518
  %v2520 = vsel %vm2519, 0, %v2518
  %v2521 = vsub.s32 32, %v2520
  %v2522 = vshll.u32 %v2513, %v2520
  %v2523 = vshrl.u32 %v2505, %v2521
  %v2524 = vor.u32 %v2522, %v2523
  %v2525 = vsub.s32 4294967266, %v2520
  %v2526 = vadd.s32 %v2525, 127
  %v2527 = vshll.u32 %v2526, 23
  %v2528 = vor.u32 4788187, %v2527
  %v2529 = vand.u32 2147483647, %v2528
  %v2531 = vcvt.s32.f32 %v2524
  %v2532 = vmul.f32 %v2531, %v2529
  %v2533 = vxor.u32 %v2532, 2147483648
  %v2534 = vsel %vm2451, %v2533, %v2532
  %v2535 = vsub.s32 4, %v2511
  %v2536 = vsel %vm2451, %v2535, %v2511
  %v2537 = vsel %vm2450, %v157, %v2534
  %v2538 = vsel %vm2450, 0, %v2536
  %v2539 = vcosq.f32.pop %v2537
  %v2540 = vsinq.f32.pop %v2537
  %vm2541 = vweird.f32 %v157
  %v2542 = vand.u32 %v2538, 3
  %vm2543 = vcmp.lt.s32.totalorder %v2542, 2
  %vm2544 = vcmp.eq.s32.totalorder %v2542, 0
  %v2545 = vxor.u32 %v2540, 2147483648
  %v2546 = vsel %vm2544, %v2539, %v2545
  %vm2547 = vcmp.eq.s32.totalorder %v2542, 2
  %v2548 = vxor.u32 %v2539, 2147483648
  %v2549 = vsel %vm2547, %v2548, %v2540
  %v2550 = vsel %vm2543, %v2546, %v2549
  %v2551 = vsel %vm2541, nan, %v2550
  %v2552 = vand.u32 2147483647, %v158
  %vm2553 = vcmp.le.f32.partialorder %v2552, 0.7853982
  %vm2554 = vcmp.lt.s32.totalorder %v158, 0
  %v2555 = vand.u32 %v158, 2139095040
  %v2556 = vshrl.u32 %v2555, 23
  %v2557 = vsub.s32 %v2556, 127
  %v2558 = vand.u32 2147483647, %v158
  %v2559 = vand.u32 %v2558, 8388607
  %v2560 = vor.u32 %v2559, 8388608
  %v2561 = vsub.s32 0, %v2560
  %v2562 = vadd.s32 %v2557, 1
  %vm2563 = vcmp.gt.s32.totalorder %v2562, 0
  %v2564 = vsel %vm2563, %v2562, 0
  %v2565 = vshrl.u32 %v2564, 5
  %v2566 = vand.u32 %v2564, 31
  %v2567 = vsub.s32 32, %v2566
  %v2568 = vshrl.u32 683565275, %v2567
  %v2569 = vshll.u32 683565275, %v2566
  %v2570 = vshrl.u32 2475754826, %v2567
  %v2571 = vor.u32 %v2569, %v2570
  %v2572 = vshll.u32 2475754826, %v2566
  %v2573 = vshrl.u32 2131351028, %v2567
  %v2574 = vor.u32 %v2572, %v2573
  %v2575 = vshll.u32 2131351028, %v2566
  %v2576 = vshrl.u32 2102212464, %v2567
  %v2577 = vor.u32 %v2575, %v2576
  %v2578 = vshll.u32 2102212464, %v2566
  %v2579 = vshrl.u32 920167782, %v2567
  %v2580 = vor.u32 %v2578, %v2579
  %v2581 = vshll.u32 920167782, %v2566
  %v2582 = vshrl.u32 1326507024, %v2567
  %v2583 = vor.u32 %v2581, %v2582
  %vm2584 = vcmp.lt.s32.totalorder %v2565, 1
  %vm2585 = vcmp.lt.s32.totalorder %v2565, 2
  %vm2586 = vcmp.lt.s32.totalorder %v2565, 3
  %vm2587 = vcmp.lt.s32.totalorder %v2565, 4
  %v2588 = vsel %vm2584, %v2568, %v2571
  %v2589 = vsel %vm2587, %v2577, 2102212464
  %v2590 = vsel %vm2586, %v2574, %v2589
  %v2591 = vsel %vm2585, %v2588, %v2590
  %v2592 = vsel %vm2584, %v2571, %v2574
  %v2593 = vsel %vm2587, %v2580, 920167782
  %v2594 = vsel %vm2586, %v2577, %v2593
  %v2595 = vsel %vm2585, %v2592, %v2594
  %v2596 = vsel %vm2584, %v2574, %v2577
  %v2597 = vsel %vm2587, %v2583, 1326507024
  %v2598 = vsel %vm2586, %v2580, %v2597
  %v2599 = vsel %vm2585, %v2596, %v2598
  %v2600 = vshll.u32 %v2560, 8
  %v2601 = vmul.u32.u64.compose %v2600, %v2599
  %v2602 = vextract.low.u32 %v2601
  %v2603 = vextract.high.u32 %v2601
  %v2604 = vmul.u32.u64.compose %v2600, %v2595
  %v2605 = vextract.low.u32 %v2604
  %v2606 = vextract.high.u32 %v2604
  %v2607 = vmul.u32 %v2600, %v2591
  %v2608 = vadd.s32 %v2603, %v2605
  %vm2609 = vc.u32 %v2603, %v2605
  %v2610 = vadd.s32 %v2606, 1
  %v2611 = vsel %vm2609, %v2610, %v2606
  %v2612 = vadd.s32 %v2607, %v2611
  %v2613 = vadd.s32 %v2612, 536870912
  %v2614 = vshrl.u32 %v2613, 30
  %v2615 = vshll.u32 %v2614, 30
  %v2616 = vsub.s32 %v2612, %v2615
  %vm2617 = vcmp.lt.s32.totalorder %v2616, 0
  %v2618 = vsub.s32 0, %v2616
  %v2619 = vsel %vm2617, %v2618, %v2616
  %v2620 = vclz %v2619
  %v2621 = vsub.s32 %v2620, 2
  %vm2622 = vcmp.gt.s32.totalorder 0, %v2621
  %v2623 = vsel %vm2622, 0, %v2621
  %v2624 = vsub.s32 32, %v2623
  %v2625 = vshll.u32 %v2616, %v2623
  %v2626 = vshrl.u32 %v2608, %v2624
  %v2627 = vor.u32 %v2625, %v2626
  %v2628 = vsub.s32 4294967266, %v2623
  %v2629 = vadd.s32 %v2628, 127
  %v2630 = vshll.u32 %v2629, 23
  %v2631 = vor.u32 4788187, %v2630
  %v2632 = vand.u32 2147483647, %v2631
  %v2634 = vcvt.s32.f32 %v2627
  %v2635 = vmul.f32 %v2634, %v2632
  %v2636 = vxor.u32 %v2635, 2147483648
  %v2637 = vsel %vm2554, %v2636, %v2635
  %v2638 = vsub.s32 4, %v2614
  %v2639 = vsel %vm2554, %v2638, %v2614
  %v2640 = vsel %vm2553, %v158, %v2637
  %v2641 = vsel %vm2553, 0, %v2639
  %v2642 = vcosq.f32.pop %v2640
  %v2643 = vsinq.f32.pop %v2640
  %vm2644 = vweird.f32 %v158
  %v2645 = vand.u32 %v2641, 3
  %vm2646 = vcmp.lt.s32.totalorder %v2645, 2
  %vm2647 = vcmp.eq.s32.totalorder %v2645, 0
  %v2648 = vxor.u32 %v2643, 2147483648
  %v2649 = vsel %vm2647, %v2642, %v2648
  %vm2650 = vcmp.eq.s32.totalorder %v2645, 2
  %v2651 = vxor.u32 %v2642, 2147483648
  %v2652 = vsel %vm2650, %v2651, %v2643
  %v2653 = vsel %vm2646, %v2649, %v2652
  %v2654 = vsel %vm2644, nan, %v2653
  %v2655 = vand.u32 2147483647, %v159
  %vm2656 = vcmp.le.f32.partialorder %v2655, 0.7853982
  %vm2657 = vcmp.lt.s32.totalorder %v159, 0
  %v2658 = vand.u32 %v159, 2139095040
  %v2659 = vshrl.u32 %v2658, 23
  %v2660 = vsub.s32 %v2659, 127
  %v2661 = vand.u32 2147483647, %v159
  %v2662 = vand.u32 %v2661, 8388607
  %v2663 = vor.u32 %v2662, 8388608
  %v2664 = vsub.s32 0, %v2663
  %v2665 = vadd.s32 %v2660, 1
  %vm2666 = vcmp.gt.s32.totalorder %v2665, 0
  %v2667 = vsel %vm2666, %v2665, 0
  %v2668 = vshrl.u32 %v2667, 5
  %v2669 = vand.u32 %v2667, 31
  %v2670 = vsub.s32 32, %v2669
  %v2671 = vshrl.u32 683565275, %v2670
  %v2672 = vshll.u32 683565275, %v2669
  %v2673 = vshrl.u32 2475754826, %v2670
  %v2674 = vor.u32 %v2672, %v2673
  %v2675 = vshll.u32 2475754826, %v2669
  %v2676 = vshrl.u32 2131351028, %v2670
  %v2677 = vor.u32 %v2675, %v2676
  %v2678 = vshll.u32 2131351028, %v2669
  %v2679 = vshrl.u32 2102212464, %v2670
  %v2680 = vor.u32 %v2678, %v2679
  %v2681 = vshll.u32 2102212464, %v2669
  %v2682 = vshrl.u32 920167782, %v2670
  %v2683 = vor.u32 %v2681, %v2682
  %v2684 = vshll.u32 920167782, %v2669
  %v2685 = vshrl.u32 1326507024, %v2670
  %v2686 = vor.u32 %v2684, %v2685
  %vm2687 = vcmp.lt.s32.totalorder %v2668, 1
  %vm2688 = vcmp.lt.s32.totalorder %v2668, 2
  %vm2689 = vcmp.lt.s32.totalorder %v2668, 3
  %vm2690 = vcmp.lt.s32.totalorder %v2668, 4
  %v2691 = vsel %vm2687, %v2671, %v2674
  %v2692 = vsel %vm2690, %v2680, 2102212464
  %v2693 = vsel %vm2689, %v2677, %v2692
  %v2694 = vsel %vm2688, %v2691, %v2693
  %v2695 = vsel %vm2687, %v2674, %v2677
  %v2696 = vsel %vm2690, %v2683, 920167782
  %v2697 = vsel %vm2689, %v2680, %v2696
  %v2698 = vsel %vm2688, %v2695, %v2697
  %v2699 = vsel %vm2687, %v2677, %v2680
  %v2700 = vsel %vm2690, %v2686, 1326507024
  %v2701 = vsel %vm2689, %v2683, %v2700
  %v2702 = vsel %vm2688, %v2699, %v2701
  %v2703 = vshll.u32 %v2663, 8
  %v2704 = vmul.u32.u64.compose %v2703, %v2702
  %v2705 = vextract.low.u32 %v2704
  %v2706 = vextract.high.u32 %v2704
  %v2707 = vmul.u32.u64.compose %v2703, %v2698
  %v2708 = vextract.low.u32 %v2707
  %v2709 = vextract.high.u32 %v2707
  %v2710 = vmul.u32 %v2703, %v2694
  %v2711 = vadd.s32 %v2706, %v2708
  %vm2712 = vc.u32 %v2706, %v2708
  %v2713 = vadd.s32 %v2709, 1
  %v2714 = vsel %vm2712, %v2713, %v2709
  %v2715 = vadd.s32 %v2710, %v2714
  %v2716 = vadd.s32 %v2715, 536870912
  %v2717 = vshrl.u32 %v2716, 30
  %v2718 = vshll.u32 %v2717, 30
  %v2719 = vsub.s32 %v2715, %v2718
  %vm2720 = vcmp.lt.s32.totalorder %v2719, 0
  %v2721 = vsub.s32 0, %v2719
  %v2722 = vsel %vm2720, %v2721, %v2719
  %v2723 = vclz %v2722
  %v2724 = vsub.s32 %v2723, 2
  %vm2725 = vcmp.gt.s32.totalorder 0, %v2724
  %v2726 = vsel %vm2725, 0, %v2724
  %v2727 = vsub.s32 32, %v2726
  %v2728 = vshll.u32 %v2719, %v2726
  %v2729 = vshrl.u32 %v2711, %v2727
  %v2730 = vor.u32 %v2728, %v2729
  %v2731 = vsub.s32 4294967266, %v2726
  %v2732 = vadd.s32 %v2731, 127
  %v2733 = vshll.u32 %v2732, 23
  %v2734 = vor.u32 4788187, %v2733
  %v2735 = vand.u32 2147483647, %v2734
  %v2737 = vcvt.s32.f32 %v2730
  %v2738 = vmul.f32 %v2737, %v2735
  %v2739 = vxor.u32 %v2738, 2147483648
  %v2740 = vsel %vm2657, %v2739, %v2738
  %v2741 = vsub.s32 4, %v2717
  %v2742 = vsel %vm2657, %v2741, %v2717
  %v2743 = vsel %vm2656, %v159, %v2740
  %v2744 = vsel %vm2656, 0, %v2742
  %v2745 = vcosq.f32.pop %v2743
  %v2746 = vsinq.f32.pop %v2743
  %vm2747 = vweird.f32 %v159
  %v2748 = vand.u32 %v2744, 3
  %vm2749 = vcmp.lt.s32.totalorder %v2748, 2
  %vm2750 = vcmp.eq.s32.totalorder %v2748, 0
  %v2751 = vxor.u32 %v2746, 2147483648
  %v2752 = vsel %vm2750, %v2745, %v2751
  %vm2753 = vcmp.eq.s32.totalorder %v2748, 2
  %v2754 = vxor.u32 %v2745, 2147483648
  %v2755 = vsel %vm2753, %v2754, %v2746
  %v2756 = vsel %vm2749, %v2752, %v2755
  %v2757 = vsel %vm2747, nan, %v2756
  %v2758 = vand.u32 2147483647, %v160
  %vm2759 = vcmp.le.f32.partialorder %v2758, 0.7853982
  %vm2760 = vcmp.lt.s32.totalorder %v160, 0
  %v2761 = vand.u32 %v160, 2139095040
  %v2762 = vshrl.u32 %v2761, 23
  %v2763 = vsub.s32 %v2762, 127
  %v2764 = vand.u32 2147483647, %v160
  %v2765 = vand.u32 %v2764, 8388607
  %v2766 = vor.u32 %v2765, 8388608
  %v2767 = vsub.s32 0, %v2766
  %v2768 = vadd.s32 %v2763, 1
  %vm2769 = vcmp.gt.s32.totalorder %v2768, 0
  %v2770 = vsel %vm2769, %v2768, 0
  %v2771 = vshrl.u32 %v2770, 5
  %v2772 = vand.u32 %v2770, 31
  %v2773 = vsub.s32 32, %v2772
  %v2774 = vshrl.u32 683565275, %v2773
  %v2775 = vshll.u32 683565275, %v2772
  %v2776 = vshrl.u32 2475754826, %v2773
  %v2777 = vor.u32 %v2775, %v2776
  %v2778 = vshll.u32 2475754826, %v2772
  %v2779 = vshrl.u32 2131351028, %v2773
  %v2780 = vor.u32 %v2778, %v2779
  %v2781 = vshll.u32 2131351028, %v2772
  %v2782 = vshrl.u32 2102212464, %v2773
  %v2783 = vor.u32 %v2781, %v2782
  %v2784 = vshll.u32 2102212464, %v2772
  %v2785 = vshrl.u32 920167782, %v2773
  %v2786 = vor.u32 %v2784, %v2785
  %v2787 = vshll.u32 920167782, %v2772
  %v2788 = vshrl.u32 1326507024, %v2773
  %v2789 = vor.u32 %v2787, %v2788
  %vm2790 = vcmp.lt.s32.totalorder %v2771, 1
  %vm2791 = vcmp.lt.s32.totalorder %v2771, 2
  %vm2792 = vcmp.lt.s32.totalorder %v2771, 3
  %vm2793 = vcmp.lt.s32.totalorder %v2771, 4
  %v2794 = vsel %vm2790, %v2774, %v2777
  %v2795 = vsel %vm2793, %v2783, 2102212464
  %v2796 = vsel %vm2792, %v2780, %v2795
  %v2797 = vsel %vm2791, %v2794, %v2796
  %v2798 = vsel %vm2790, %v2777, %v2780
  %v2799 = vsel %vm2793, %v2786, 920167782
  %v2800 = vsel %vm2792, %v2783, %v2799
  %v2801 = vsel %vm2791, %v2798, %v2800
  %v2802 = vsel %vm2790, %v2780, %v2783
  %v2803 = vsel %vm2793, %v2789, 1326507024
  %v2804 = vsel %vm2792, %v2786, %v2803
  %v2805 = vsel %vm2791, %v2802, %v2804
  %v2806 = vshll.u32 %v2766, 8
  %v2807 = vmul.u32.u64.compose %v2806, %v2805
  %v2808 = vextract.low.u32 %v2807
  %v2809 = vextract.high.u32 %v2807
  %v2810 = vmul.u32.u64.compose %v2806, %v2801
  %v2811 = vextract.low.u32 %v2810
  %v2812 = vextract.high.u32 %v2810
  %v2813 = vmul.u32 %v2806, %v2797
  %v2814 = vadd.s32 %v2809, %v2811
  %vm2815 = vc.u32 %v2809, %v2811
  %v2816 = vadd.s32 %v2812, 1
  %v2817 = vsel %vm2815, %v2816, %v2812
  %v2818 = vadd.s32 %v2813, %v2817
  %v2819 = vadd.s32 %v2818, 536870912
  %v2820 = vshrl.u32 %v2819, 30
  %v2821 = vshll.u32 %v2820, 30
  %v2822 = vsub.s32 %v2818, %v2821
  %vm2823 = vcmp.lt.s32.totalorder %v2822, 0
  %v2824 = vsub.s32 0, %v2822
  %v2825 = vsel %vm2823, %v2824, %v2822
  %v2826 = vclz %v2825
  %v2827 = vsub.s32 %v2826, 2
  %vm2828 = vcmp.gt.s32.totalorder 0, %v2827
  %v2829 = vsel %vm2828, 0, %v2827
  %v2830 = vsub.s32 32, %v2829
  %v2831 = vshll.u32 %v2822, %v2829
  %v2832 = vshrl.u32 %v2814, %v2830
  %v2833 = vor.u32 %v2831, %v2832
  %v2834 = vsub.s32 4294967266, %v2829
  %v2835 = vadd.s32 %v2834, 127
  %v2836 = vshll.u32 %v2835, 23
  %v2837 = vor.u32 4788187, %v2836
  %v2838 = vand.u32 2147483647, %v2837
  %v2840 = vcvt.s32.f32 %v2833
  %v2841 = vmul.f32 %v2840, %v2838
  %v2842 = vxor.u32 %v2841, 2147483648
  %v2843 = vsel %vm2760, %v2842, %v2841
  %v2844 = vsub.s32 4, %v2820
  %v2845 = vsel %vm2760, %v2844, %v2820
  %v2846 = vsel %vm2759, %v160, %v2843
  %v2847 = vsel %vm2759, 0, %v2845
  %v2848 = vcosq.f32.pop %v2846
  %v2849 = vsinq.f32.pop %v2846
  %vm2850 = vweird.f32 %v160
  %v2851 = vand.u32 %v2847, 3
  %vm2852 = vcmp.lt.s32.totalorder %v2851, 2
  %vm2853 = vcmp.eq.s32.totalorder %v2851, 0
  %v2854 = vxor.u32 %v2849, 2147483648
  %v2855 = vsel %vm2853, %v2848, %v2854
  %vm2856 = vcmp.eq.s32.totalorder %v2851, 2
  %v2857 = vxor.u32 %v2848, 2147483648
  %v2858 = vsel %vm2856, %v2857, %v2849
  %v2859 = vsel %vm2852, %v2855, %v2858
  %v2860 = vsel %vm2850, nan, %v2859
  %v2861 = vand.u32 2147483647, %v161
  %vm2862 = vcmp.le.f32.partialorder %v2861, 0.7853982
  %vm2863 = vcmp.lt.s32.totalorder %v161, 0
  %v2864 = vand.u32 %v161, 2139095040
  %v2865 = vshrl.u32 %v2864, 23
  %v2866 = vsub.s32 %v2865, 127
  %v2867 = vand.u32 2147483647, %v161
  %v2868 = vand.u32 %v2867, 8388607
  %v2869 = vor.u32 %v2868, 8388608
  %v2870 = vsub.s32 0, %v2869
  %v2871 = vadd.s32 %v2866, 1
  %vm2872 = vcmp.gt.s32.totalorder %v2871, 0
  %v2873 = vsel %vm2872, %v2871, 0
  %v2874 = vshrl.u32 %v2873, 5
  %v2875 = vand.u32 %v2873, 31
  %v2876 = vsub.s32 32, %v2875
  %v2877 = vshrl.u32 683565275, %v2876
  %v2878 = vshll.u32 683565275, %v2875
  %v2879 = vshrl.u32 2475754826, %v2876
  %v2880 = vor.u32 %v2878, %v2879
  %v2881 = vshll.u32 2475754826, %v2875
  %v2882 = vshrl.u32 2131351028, %v2876
  %v2883 = vor.u32 %v2881, %v2882
  %v2884 = vshll.u32 2131351028, %v2875
  %v2885 = vshrl.u32 2102212464, %v2876
  %v2886 = vor.u32 %v2884, %v2885
  %v2887 = vshll.u32 2102212464, %v2875
  %v2888 = vshrl.u32 920167782, %v2876
  %v2889 = vor.u32 %v2887, %v2888
  %v2890 = vshll.u32 920167782, %v2875
  %v2891 = vshrl.u32 1326507024, %v2876
  %v2892 = vor.u32 %v2890, %v2891
  %vm2893 = vcmp.lt.s32.totalorder %v2874, 1
  %vm2894 = vcmp.lt.s32.totalorder %v2874, 2
  %vm2895 = vcmp.lt.s32.totalorder %v2874, 3
  %vm2896 = vcmp.lt.s32.totalorder %v2874, 4
  %v2897 = vsel %vm2893, %v2877, %v2880
  %v2898 = vsel %vm2896, %v2886, 2102212464
  %v2899 = vsel %vm2895, %v2883, %v2898
  %v2900 = vsel %vm2894, %v2897, %v2899
  %v2901 = vsel %vm2893, %v2880, %v2883
  %v2902 = vsel %vm2896, %v2889, 920167782
  %v2903 = vsel %vm2895, %v2886, %v2902
  %v2904 = vsel %vm2894, %v2901, %v2903
  %v2905 = vsel %vm2893, %v2883, %v2886
  %v2906 = vsel %vm2896, %v2892, 1326507024
  %v2907 = vsel %vm2895, %v2889, %v2906
  %v2908 = vsel %vm2894, %v2905, %v2907
  %v2909 = vshll.u32 %v2869, 8
  %v2910 = vmul.u32.u64.compose %v2909, %v2908
  %v2911 = vextract.low.u32 %v2910
  %v2912 = vextract.high.u32 %v2910
  %v2913 = vmul.u32.u64.compose %v2909, %v2904
  %v2914 = vextract.low.u32 %v2913
  %v2915 = vextract.high.u32 %v2913
  %v2916 = vmul.u32 %v2909, %v2900
  %v2917 = vadd.s32 %v2912, %v2914
  %vm2918 = vc.u32 %v2912, %v2914
  %v2919 = vadd.s32 %v2915, 1
  %v2920 = vsel %vm2918, %v2919, %v2915
  %v2921 = vadd.s32 %v2916, %v2920
  %v2922 = vadd.s32 %v2921, 536870912
  %v2923 = vshrl.u32 %v2922, 30
  %v2924 = vshll.u32 %v2923, 30
  %v2925 = vsub.s32 %v2921, %v2924
  %vm2926 = vcmp.lt.s32.totalorder %v2925, 0
  %v2927 = vsub.s32 0, %v2925
  %v2928 = vsel %vm2926, %v2927, %v2925
  %v2929 = vclz %v2928
  %v2930 = vsub.s32 %v2929, 2
  %vm2931 = vcmp.gt.s32.totalorder 0, %v2930
  %v2932 = vsel %vm2931, 0, %v2930
  %v2933 = vsub.s32 32, %v2932
  %v2934 = vshll.u32 %v2925, %v2932
  %v2935 = vshrl.u32 %v2917, %v2933
  %v2936 = vor.u32 %v2934, %v2935
  %v2937 = vsub.s32 4294967266, %v2932
  %v2938 = vadd.s32 %v2937, 127
  %v2939 = vshll.u32 %v2938, 23
  %v2940 = vor.u32 4788187, %v2939
  %v2941 = vand.u32 2147483647, %v2940
  %v2943 = vcvt.s32.f32 %v2936
  %v2944 = vmul.f32 %v2943, %v2941
  %v2945 = vxor.u32 %v2944, 2147483648
  %v2946 = vsel %vm2863, %v2945, %v2944
  %v2947 = vsub.s32 4, %v2923
  %v2948 = vsel %vm2863, %v2947, %v2923
  %v2949 = vsel %vm2862, %v161, %v2946
  %v2950 = vsel %vm2862, 0, %v2948
  %v2951 = vcosq.f32.pop %v2949
  %v2952 = vsinq.f32.pop %v2949
  %vm2953 = vweird.f32 %v161
  %v2954 = vand.u32 %v2950, 3
  %vm2955 = vcmp.lt.s32.totalorder %v2954, 2
  %vm2956 = vcmp.eq.s32.totalorder %v2954, 0
  %v2957 = vxor.u32 %v2952, 2147483648
  %v2958 = vsel %vm2956, %v2951, %v2957
  %vm2959 = vcmp.eq.s32.totalorder %v2954, 2
  %v2960 = vxor.u32 %v2951, 2147483648
  %v2961 = vsel %vm2959, %v2960, %v2952
  %v2962 = vsel %vm2955, %v2958, %v2961
  %v2963 = vsel %vm2953, nan, %v2962
  %v2964 = vand.u32 2147483647, %v162
  %vm2965 = vcmp.le.f32.partialorder %v2964, 0.7853982
  %vm2966 = vcmp.lt.s32.totalorder %v162, 0
  %v2967 = vand.u32 %v162, 2139095040
  %v2968 = vshrl.u32 %v2967, 23
  %v2969 = vsub.s32 %v2968, 127
  %v2970 = vand.u32 2147483647, %v162
  %v2971 = vand.u32 %v2970, 8388607
  %v2972 = vor.u32 %v2971, 8388608
  %v2973 = vsub.s32 0, %v2972
  %v2974 = vadd.s32 %v2969, 1
  %vm2975 = vcmp.gt.s32.totalorder %v2974, 0
  %v2976 = vsel %vm2975, %v2974, 0
  %v2977 = vshrl.u32 %v2976, 5
  %v2978 = vand.u32 %v2976, 31
  %v2979 = vsub.s32 32, %v2978
  %v2980 = vshrl.u32 683565275, %v2979
  %v2981 = vshll.u32 683565275, %v2978
  %v2982 = vshrl.u32 2475754826, %v2979
  %v2983 = vor.u32 %v2981, %v2982
  %v2984 = vshll.u32 2475754826, %v2978
  %v2985 = vshrl.u32 2131351028, %v2979
  %v2986 = vor.u32 %v2984, %v2985
  %v2987 = vshll.u32 2131351028, %v2978
  %v2988 = vshrl.u32 2102212464, %v2979
  %v2989 = vor.u32 %v2987, %v2988
  %v2990 = vshll.u32 2102212464, %v2978
  %v2991 = vshrl.u32 920167782, %v2979
  %v2992 = vor.u32 %v2990, %v2991
  %v2993 = vshll.u32 920167782, %v2978
  %v2994 = vshrl.u32 1326507024, %v2979
  %v2995 = vor.u32 %v2993, %v2994
  %vm2996 = vcmp.lt.s32.totalorder %v2977, 1
  %vm2997 = vcmp.lt.s32.totalorder %v2977, 2
  %vm2998 = vcmp.lt.s32.totalorder %v2977, 3
  %vm2999 = vcmp.lt.s32.totalorder %v2977, 4
  %v3000 = vsel %vm2996, %v2980, %v2983
  %v3001 = vsel %vm2999, %v2989, 2102212464
  %v3002 = vsel %vm2998, %v2986, %v3001
  %v3003 = vsel %vm2997, %v3000, %v3002
  %v3004 = vsel %vm2996, %v2983, %v2986
  %v3005 = vsel %vm2999, %v2992, 920167782
  %v3006 = vsel %vm2998, %v2989, %v3005
  %v3007 = vsel %vm2997, %v3004, %v3006
  %v3008 = vsel %vm2996, %v2986, %v2989
  %v3009 = vsel %vm2999, %v2995, 1326507024
  %v3010 = vsel %vm2998, %v2992, %v3009
  %v3011 = vsel %vm2997, %v3008, %v3010
  %v3012 = vshll.u32 %v2972, 8
  %v3013 = vmul.u32.u64.compose %v3012, %v3011
  %v3014 = vextract.low.u32 %v3013
  %v3015 = vextract.high.u32 %v3013
  %v3016 = vmul.u32.u64.compose %v3012, %v3007
  %v3017 = vextract.low.u32 %v3016
  %v3018 = vextract.high.u32 %v3016
  %v3019 = vmul.u32 %v3012, %v3003
  %v3020 = vadd.s32 %v3015, %v3017
  %vm3021 = vc.u32 %v3015, %v3017
  %v3022 = vadd.s32 %v3018, 1
  %v3023 = vsel %vm3021, %v3022, %v3018
  %v3024 = vadd.s32 %v3019, %v3023
  %v3025 = vadd.s32 %v3024, 536870912
  %v3026 = vshrl.u32 %v3025, 30
  %v3027 = vshll.u32 %v3026, 30
  %v3028 = vsub.s32 %v3024, %v3027
  %vm3029 = vcmp.lt.s32.totalorder %v3028, 0
  %v3030 = vsub.s32 0, %v3028
  %v3031 = vsel %vm3029, %v3030, %v3028
  %v3032 = vclz %v3031
  %v3033 = vsub.s32 %v3032, 2
  %vm3034 = vcmp.gt.s32.totalorder 0, %v3033
  %v3035 = vsel %vm3034, 0, %v3033
  %v3036 = vsub.s32 32, %v3035
  %v3037 = vshll.u32 %v3028, %v3035
  %v3038 = vshrl.u32 %v3020, %v3036
  %v3039 = vor.u32 %v3037, %v3038
  %v3040 = vsub.s32 4294967266, %v3035
  %v3041 = vadd.s32 %v3040, 127
  %v3042 = vshll.u32 %v3041, 23
  %v3043 = vor.u32 4788187, %v3042
  %v3044 = vand.u32 2147483647, %v3043
  %v3046 = vcvt.s32.f32 %v3039
  %v3047 = vmul.f32 %v3046, %v3044
  %v3048 = vxor.u32 %v3047, 2147483648
  %v3049 = vsel %vm2966, %v3048, %v3047
  %v3050 = vsub.s32 4, %v3026
  %v3051 = vsel %vm2966, %v3050, %v3026
  %v3052 = vsel %vm2965, %v162, %v3049
  %v3053 = vsel %vm2965, 0, %v3051
  %v3054 = vcosq.f32.pop %v3052
  %v3055 = vsinq.f32.pop %v3052
  %vm3056 = vweird.f32 %v162
  %v3057 = vand.u32 %v3053, 3
  %vm3058 = vcmp.lt.s32.totalorder %v3057, 2
  %vm3059 = vcmp.eq.s32.totalorder %v3057, 0
  %v3060 = vxor.u32 %v3055, 2147483648
  %v3061 = vsel %vm3059, %v3054, %v3060
  %vm3062 = vcmp.eq.s32.totalorder %v3057, 2
  %v3063 = vxor.u32 %v3054, 2147483648
  %v3064 = vsel %vm3062, %v3063, %v3055
  %v3065 = vsel %vm3058, %v3061, %v3064
  %v3066 = vsel %vm3056, nan, %v3065
  %v3067 = vand.u32 2147483647, %v163
  %vm3068 = vcmp.le.f32.partialorder %v3067, 0.7853982
  %vm3069 = vcmp.lt.s32.totalorder %v163, 0
  %v3070 = vand.u32 %v163, 2139095040
  %v3071 = vshrl.u32 %v3070, 23
  %v3072 = vsub.s32 %v3071, 127
  %v3073 = vand.u32 2147483647, %v163
  %v3074 = vand.u32 %v3073, 8388607
  %v3075 = vor.u32 %v3074, 8388608
  %v3076 = vsub.s32 0, %v3075
  %v3077 = vadd.s32 %v3072, 1
  %vm3078 = vcmp.gt.s32.totalorder %v3077, 0
  %v3079 = vsel %vm3078, %v3077, 0
  %v3080 = vshrl.u32 %v3079, 5
  %v3081 = vand.u32 %v3079, 31
  %v3082 = vsub.s32 32, %v3081
  %v3083 = vshrl.u32 683565275, %v3082
  %v3084 = vshll.u32 683565275, %v3081
  %v3085 = vshrl.u32 2475754826, %v3082
  %v3086 = vor.u32 %v3084, %v3085
  %v3087 = vshll.u32 2475754826, %v3081
  %v3088 = vshrl.u32 2131351028, %v3082
  %v3089 = vor.u32 %v3087, %v3088
  %v3090 = vshll.u32 2131351028, %v3081
  %v3091 = vshrl.u32 2102212464, %v3082
  %v3092 = vor.u32 %v3090, %v3091
  %v3093 = vshll.u32 2102212464, %v3081
  %v3094 = vshrl.u32 920167782, %v3082
  %v3095 = vor.u32 %v3093, %v3094
  %v3096 = vshll.u32 920167782, %v3081
  %v3097 = vshrl.u32 1326507024, %v3082
  %v3098 = vor.u32 %v3096, %v3097
  %vm3099 = vcmp.lt.s32.totalorder %v3080, 1
  %vm3100 = vcmp.lt.s32.totalorder %v3080, 2
  %vm3101 = vcmp.lt.s32.totalorder %v3080, 3
  %vm3102 = vcmp.lt.s32.totalorder %v3080, 4
  %v3103 = vsel %vm3099, %v3083, %v3086
  %v3104 = vsel %vm3102, %v3092, 2102212464
  %v3105 = vsel %vm3101, %v3089, %v3104
  %v3106 = vsel %vm3100, %v3103, %v3105
  %v3107 = vsel %vm3099, %v3086, %v3089
  %v3108 = vsel %vm3102, %v3095, 920167782
  %v3109 = vsel %vm3101, %v3092, %v3108
  %v3110 = vsel %vm3100, %v3107, %v3109
  %v3111 = vsel %vm3099, %v3089, %v3092
  %v3112 = vsel %vm3102, %v3098, 1326507024
  %v3113 = vsel %vm3101, %v3095, %v3112
  %v3114 = vsel %vm3100, %v3111, %v3113
  %v3115 = vshll.u32 %v3075, 8
  %v3116 = vmul.u32.u64.compose %v3115, %v3114
  %v3117 = vextract.low.u32 %v3116
  %v3118 = vextract.high.u32 %v3116
  %v3119 = vmul.u32.u64.compose %v3115, %v3110
  %v3120 = vextract.low.u32 %v3119
  %v3121 = vextract.high.u32 %v3119
  %v3122 = vmul.u32 %v3115, %v3106
  %v3123 = vadd.s32 %v3118, %v3120
  %vm3124 = vc.u32 %v3118, %v3120
  %v3125 = vadd.s32 %v3121, 1
  %v3126 = vsel %vm3124, %v3125, %v3121
  %v3127 = vadd.s32 %v3122, %v3126
  %v3128 = vadd.s32 %v3127, 536870912
  %v3129 = vshrl.u32 %v3128, 30
  %v3130 = vshll.u32 %v3129, 30
  %v3131 = vsub.s32 %v3127, %v3130
  %vm3132 = vcmp.lt.s32.totalorder %v3131, 0
  %v3133 = vsub.s32 0, %v3131
  %v3134 = vsel %vm3132, %v3133, %v3131
  %v3135 = vclz %v3134
  %v3136 = vsub.s32 %v3135, 2
  %vm3137 = vcmp.gt.s32.totalorder 0, %v3136
  %v3138 = vsel %vm3137, 0, %v3136
  %v3139 = vsub.s32 32, %v3138
  %v3140 = vshll.u32 %v3131, %v3138
  %v3141 = vshrl.u32 %v3123, %v3139
  %v3142 = vor.u32 %v3140, %v3141
  %v3143 = vsub.s32 4294967266, %v3138
  %v3144 = vadd.s32 %v3143, 127
  %v3145 = vshll.u32 %v3144, 23
  %v3146 = vor.u32 4788187, %v3145
  %v3147 = vand.u32 2147483647, %v3146
  %v3149 = vcvt.s32.f32 %v3142
  %v3150 = vmul.f32 %v3149, %v3147
  %v3151 = vxor.u32 %v3150, 2147483648
  %v3152 = vsel %vm3069, %v3151, %v3150
  %v3153 = vsub.s32 4, %v3129
  %v3154 = vsel %vm3069, %v3153, %v3129
  %v3155 = vsel %vm3068, %v163, %v3152
  %v3156 = vsel %vm3068, 0, %v3154
  %v3157 = vcosq.f32.pop %v3155
  %v3158 = vsinq.f32.pop %v3155
  %vm3159 = vweird.f32 %v163
  %v3160 = vand.u32 %v3156, 3
  %vm3161 = vcmp.lt.s32.totalorder %v3160, 2
  %vm3162 = vcmp.eq.s32.totalorder %v3160, 0
  %v3163 = vxor.u32 %v3158, 2147483648
  %v3164 = vsel %vm3162, %v3157, %v3163
  %vm3165 = vcmp.eq.s32.totalorder %v3160, 2
  %v3166 = vxor.u32 %v3157, 2147483648
  %v3167 = vsel %vm3165, %v3166, %v3158
  %v3168 = vsel %vm3161, %v3164, %v3167
  %v3169 = vsel %vm3159, nan, %v3168
  %v3170 = vand.u32 2147483647, %v164
  %vm3171 = vcmp.le.f32.partialorder %v3170, 0.7853982
  %vm3172 = vcmp.lt.s32.totalorder %v164, 0
  %v3173 = vand.u32 %v164, 2139095040
  %v3174 = vshrl.u32 %v3173, 23
  %v3175 = vsub.s32 %v3174, 127
  %v3176 = vand.u32 2147483647, %v164
  %v3177 = vand.u32 %v3176, 8388607
  %v3178 = vor.u32 %v3177, 8388608
  %v3179 = vsub.s32 0, %v3178
  %v3180 = vadd.s32 %v3175, 1
  %vm3181 = vcmp.gt.s32.totalorder %v3180, 0
  %v3182 = vsel %vm3181, %v3180, 0
  %v3183 = vshrl.u32 %v3182, 5
  %v3184 = vand.u32 %v3182, 31
  %v3185 = vsub.s32 32, %v3184
  %v3186 = vshrl.u32 683565275, %v3185
  %v3187 = vshll.u32 683565275, %v3184
  %v3188 = vshrl.u32 2475754826, %v3185
  %v3189 = vor.u32 %v3187, %v3188
  %v3190 = vshll.u32 2475754826, %v3184
  %v3191 = vshrl.u32 2131351028, %v3185
  %v3192 = vor.u32 %v3190, %v3191
  %v3193 = vshll.u32 2131351028, %v3184
  %v3194 = vshrl.u32 2102212464, %v3185
  %v3195 = vor.u32 %v3193, %v3194
  %v3196 = vshll.u32 2102212464, %v3184
  %v3197 = vshrl.u32 920167782, %v3185
  %v3198 = vor.u32 %v3196, %v3197
  %v3199 = vshll.u32 920167782, %v3184
  %v3200 = vshrl.u32 1326507024, %v3185
  %v3201 = vor.u32 %v3199, %v3200
  %vm3202 = vcmp.lt.s32.totalorder %v3183, 1
  %vm3203 = vcmp.lt.s32.totalorder %v3183, 2
  %vm3204 = vcmp.lt.s32.totalorder %v3183, 3
  %vm3205 = vcmp.lt.s32.totalorder %v3183, 4
  %v3206 = vsel %vm3202, %v3186, %v3189
  %v3207 = vsel %vm3205, %v3195, 2102212464
  %v3208 = vsel %vm3204, %v3192, %v3207
  %v3209 = vsel %vm3203, %v3206, %v3208
  %v3210 = vsel %vm3202, %v3189, %v3192
  %v3211 = vsel %vm3205, %v3198, 920167782
  %v3212 = vsel %vm3204, %v3195, %v3211
  %v3213 = vsel %vm3203, %v3210, %v3212
  %v3214 = vsel %vm3202, %v3192, %v3195
  %v3215 = vsel %vm3205, %v3201, 1326507024
  %v3216 = vsel %vm3204, %v3198, %v3215
  %v3217 = vsel %vm3203, %v3214, %v3216
  %v3218 = vshll.u32 %v3178, 8
  %v3219 = vmul.u32.u64.compose %v3218, %v3217
  %v3220 = vextract.low.u32 %v3219
  %v3221 = vextract.high.u32 %v3219
  %v3222 = vmul.u32.u64.compose %v3218, %v3213
  %v3223 = vextract.low.u32 %v3222
  %v3224 = vextract.high.u32 %v3222
  %v3225 = vmul.u32 %v3218, %v3209
  %v3226 = vadd.s32 %v3221, %v3223
  %vm3227 = vc.u32 %v3221, %v3223
  %v3228 = vadd.s32 %v3224, 1
  %v3229 = vsel %vm3227, %v3228, %v3224
  %v3230 = vadd.s32 %v3225, %v3229
  %v3231 = vadd.s32 %v3230, 536870912
  %v3232 = vshrl.u32 %v3231, 30
  %v3233 = vshll.u32 %v3232, 30
  %v3234 = vsub.s32 %v3230, %v3233
  %vm3235 = vcmp.lt.s32.totalorder %v3234, 0
  %v3236 = vsub.s32 0, %v3234
  %v3237 = vsel %vm3235, %v3236, %v3234
  %v3238 = vclz %v3237
  %v3239 = vsub.s32 %v3238, 2
  %vm3240 = vcmp.gt.s32.totalorder 0, %v3239
  %v3241 = vsel %vm3240, 0, %v3239
  %v3242 = vsub.s32 32, %v3241
  %v3243 = vshll.u32 %v3234, %v3241
  %v3244 = vshrl.u32 %v3226, %v3242
  %v3245 = vor.u32 %v3243, %v3244
  %v3246 = vsub.s32 4294967266, %v3241
  %v3247 = vadd.s32 %v3246, 127
  %v3248 = vshll.u32 %v3247, 23
  %v3249 = vor.u32 4788187, %v3248
  %v3250 = vand.u32 2147483647, %v3249
  %v3252 = vcvt.s32.f32 %v3245
  %v3253 = vmul.f32 %v3252, %v3250
  %v3254 = vxor.u32 %v3253, 2147483648
  %v3255 = vsel %vm3172, %v3254, %v3253
  %v3256 = vsub.s32 4, %v3232
  %v3257 = vsel %vm3172, %v3256, %v3232
  %v3258 = vsel %vm3171, %v164, %v3255
  %v3259 = vsel %vm3171, 0, %v3257
  %v3260 = vcosq.f32.pop %v3258
  %v3261 = vsinq.f32.pop %v3258
  %vm3262 = vweird.f32 %v164
  %v3263 = vand.u32 %v3259, 3
  %vm3264 = vcmp.lt.s32.totalorder %v3263, 2
  %vm3265 = vcmp.eq.s32.totalorder %v3263, 0
  %v3266 = vxor.u32 %v3261, 2147483648
  %v3267 = vsel %vm3265, %v3260, %v3266
  %vm3268 = vcmp.eq.s32.totalorder %v3263, 2
  %v3269 = vxor.u32 %v3260, 2147483648
  %v3270 = vsel %vm3268, %v3269, %v3261
  %v3271 = vsel %vm3264, %v3267, %v3270
  %v3272 = vsel %vm3262, nan, %v3271
  %v3273 = vand.u32 2147483647, %v165
  %vm3274 = vcmp.le.f32.partialorder %v3273, 0.7853982
  %vm3275 = vcmp.lt.s32.totalorder %v165, 0
  %v3276 = vand.u32 %v165, 2139095040
  %v3277 = vshrl.u32 %v3276, 23
  %v3278 = vsub.s32 %v3277, 127
  %v3279 = vand.u32 2147483647, %v165
  %v3280 = vand.u32 %v3279, 8388607
  %v3281 = vor.u32 %v3280, 8388608
  %v3282 = vsub.s32 0, %v3281
  %v3283 = vadd.s32 %v3278, 1
  %vm3284 = vcmp.gt.s32.totalorder %v3283, 0
  %v3285 = vsel %vm3284, %v3283, 0
  %v3286 = vshrl.u32 %v3285, 5
  %v3287 = vand.u32 %v3285, 31
  %v3288 = vsub.s32 32, %v3287
  %v3289 = vshrl.u32 683565275, %v3288
  %v3290 = vshll.u32 683565275, %v3287
  %v3291 = vshrl.u32 2475754826, %v3288
  %v3292 = vor.u32 %v3290, %v3291
  %v3293 = vshll.u32 2475754826, %v3287
  %v3294 = vshrl.u32 2131351028, %v3288
  %v3295 = vor.u32 %v3293, %v3294
  %v3296 = vshll.u32 2131351028, %v3287
  %v3297 = vshrl.u32 2102212464, %v3288
  %v3298 = vor.u32 %v3296, %v3297
  %v3299 = vshll.u32 2102212464, %v3287
  %v3300 = vshrl.u32 920167782, %v3288
  %v3301 = vor.u32 %v3299, %v3300
  %v3302 = vshll.u32 920167782, %v3287
  %v3303 = vshrl.u32 1326507024, %v3288
  %v3304 = vor.u32 %v3302, %v3303
  %vm3305 = vcmp.lt.s32.totalorder %v3286, 1
  %vm3306 = vcmp.lt.s32.totalorder %v3286, 2
  %vm3307 = vcmp.lt.s32.totalorder %v3286, 3
  %vm3308 = vcmp.lt.s32.totalorder %v3286, 4
  %v3309 = vsel %vm3305, %v3289, %v3292
  %v3310 = vsel %vm3308, %v3298, 2102212464
  %v3311 = vsel %vm3307, %v3295, %v3310
  %v3312 = vsel %vm3306, %v3309, %v3311
  %v3313 = vsel %vm3305, %v3292, %v3295
  %v3314 = vsel %vm3308, %v3301, 920167782
  %v3315 = vsel %vm3307, %v3298, %v3314
  %v3316 = vsel %vm3306, %v3313, %v3315
  %v3317 = vsel %vm3305, %v3295, %v3298
  %v3318 = vsel %vm3308, %v3304, 1326507024
  %v3319 = vsel %vm3307, %v3301, %v3318
  %v3320 = vsel %vm3306, %v3317, %v3319
  %v3321 = vshll.u32 %v3281, 8
  %v3322 = vmul.u32.u64.compose %v3321, %v3320
  %v3323 = vextract.low.u32 %v3322
  %v3324 = vextract.high.u32 %v3322
  %v3325 = vmul.u32.u64.compose %v3321, %v3316
  %v3326 = vextract.low.u32 %v3325
  %v3327 = vextract.high.u32 %v3325
  %v3328 = vmul.u32 %v3321, %v3312
  %v3329 = vadd.s32 %v3324, %v3326
  %vm3330 = vc.u32 %v3324, %v3326
  %v3331 = vadd.s32 %v3327, 1
  %v3332 = vsel %vm3330, %v3331, %v3327
  %v3333 = vadd.s32 %v3328, %v3332
  %v3334 = vadd.s32 %v3333, 536870912
  %v3335 = vshrl.u32 %v3334, 30
  %v3336 = vshll.u32 %v3335, 30
  %v3337 = vsub.s32 %v3333, %v3336
  %vm3338 = vcmp.lt.s32.totalorder %v3337, 0
  %v3339 = vsub.s32 0, %v3337
  %v3340 = vsel %vm3338, %v3339, %v3337
  %v3341 = vclz %v3340
  %v3342 = vsub.s32 %v3341, 2
  %vm3343 = vcmp.gt.s32.totalorder 0, %v3342
  %v3344 = vsel %vm3343, 0, %v3342
  %v3345 = vsub.s32 32, %v3344
  %v3346 = vshll.u32 %v3337, %v3344
  %v3347 = vshrl.u32 %v3329, %v3345
  %v3348 = vor.u32 %v3346, %v3347
  %v3349 = vsub.s32 4294967266, %v3344
  %v3350 = vadd.s32 %v3349, 127
  %v3351 = vshll.u32 %v3350, 23
  %v3352 = vor.u32 4788187, %v3351
  %v3353 = vand.u32 2147483647, %v3352
  %v3355 = vcvt.s32.f32 %v3348
  %v3356 = vmul.f32 %v3355, %v3353
  %v3357 = vxor.u32 %v3356, 2147483648
  %v3358 = vsel %vm3275, %v3357, %v3356
  %v3359 = vsub.s32 4, %v3335
  %v3360 = vsel %vm3275, %v3359, %v3335
  %v3361 = vsel %vm3274, %v165, %v3358
  %v3362 = vsel %vm3274, 0, %v3360
  %v3363 = vcosq.f32.pop %v3361
  %v3364 = vsinq.f32.pop %v3361
  %vm3365 = vweird.f32 %v165
  %v3366 = vand.u32 %v3362, 3
  %vm3367 = vcmp.lt.s32.totalorder %v3366, 2
  %vm3368 = vcmp.eq.s32.totalorder %v3366, 0
  %v3369 = vxor.u32 %v3364, 2147483648
  %v3370 = vsel %vm3368, %v3363, %v3369
  %vm3371 = vcmp.eq.s32.totalorder %v3366, 2
  %v3372 = vxor.u32 %v3363, 2147483648
  %v3373 = vsel %vm3371, %v3372, %v3364
  %v3374 = vsel %vm3367, %v3370, %v3373
  %v3375 = vsel %vm3365, nan, %v3374
  %v3376 = vand.u32 2147483647, %v166
  %vm3377 = vcmp.le.f32.partialorder %v3376, 0.7853982
  %vm3378 = vcmp.lt.s32.totalorder %v166, 0
  %v3379 = vand.u32 %v166, 2139095040
  %v3380 = vshrl.u32 %v3379, 23
  %v3381 = vsub.s32 %v3380, 127
  %v3382 = vand.u32 2147483647, %v166
  %v3383 = vand.u32 %v3382, 8388607
  %v3384 = vor.u32 %v3383, 8388608
  %v3385 = vsub.s32 0, %v3384
  %v3386 = vadd.s32 %v3381, 1
  %vm3387 = vcmp.gt.s32.totalorder %v3386, 0
  %v3388 = vsel %vm3387, %v3386, 0
  %v3389 = vshrl.u32 %v3388, 5
  %v3390 = vand.u32 %v3388, 31
  %v3391 = vsub.s32 32, %v3390
  %v3392 = vshrl.u32 683565275, %v3391
  %v3393 = vshll.u32 683565275, %v3390
  %v3394 = vshrl.u32 2475754826, %v3391
  %v3395 = vor.u32 %v3393, %v3394
  %v3396 = vshll.u32 2475754826, %v3390
  %v3397 = vshrl.u32 2131351028, %v3391
  %v3398 = vor.u32 %v3396, %v3397
  %v3399 = vshll.u32 2131351028, %v3390
  %v3400 = vshrl.u32 2102212464, %v3391
  %v3401 = vor.u32 %v3399, %v3400
  %v3402 = vshll.u32 2102212464, %v3390
  %v3403 = vshrl.u32 920167782, %v3391
  %v3404 = vor.u32 %v3402, %v3403
  %v3405 = vshll.u32 920167782, %v3390
  %v3406 = vshrl.u32 1326507024, %v3391
  %v3407 = vor.u32 %v3405, %v3406
  %vm3408 = vcmp.lt.s32.totalorder %v3389, 1
  %vm3409 = vcmp.lt.s32.totalorder %v3389, 2
  %vm3410 = vcmp.lt.s32.totalorder %v3389, 3
  %vm3411 = vcmp.lt.s32.totalorder %v3389, 4
  %v3412 = vsel %vm3408, %v3392, %v3395
  %v3413 = vsel %vm3411, %v3401, 2102212464
  %v3414 = vsel %vm3410, %v3398, %v3413
  %v3415 = vsel %vm3409, %v3412, %v3414
  %v3416 = vsel %vm3408, %v3395, %v3398
  %v3417 = vsel %vm3411, %v3404, 920167782
  %v3418 = vsel %vm3410, %v3401, %v3417
  %v3419 = vsel %vm3409, %v3416, %v3418
  %v3420 = vsel %vm3408, %v3398, %v3401
  %v3421 = vsel %vm3411, %v3407, 1326507024
  %v3422 = vsel %vm3410, %v3404, %v3421
  %v3423 = vsel %vm3409, %v3420, %v3422
  %v3424 = vshll.u32 %v3384, 8
  %v3425 = vmul.u32.u64.compose %v3424, %v3423
  %v3426 = vextract.low.u32 %v3425
  %v3427 = vextract.high.u32 %v3425
  %v3428 = vmul.u32.u64.compose %v3424, %v3419
  %v3429 = vextract.low.u32 %v3428
  %v3430 = vextract.high.u32 %v3428
  %v3431 = vmul.u32 %v3424, %v3415
  %v3432 = vadd.s32 %v3427, %v3429
  %vm3433 = vc.u32 %v3427, %v3429
  %v3434 = vadd.s32 %v3430, 1
  %v3435 = vsel %vm3433, %v3434, %v3430
  %v3436 = vadd.s32 %v3431, %v3435
  %v3437 = vadd.s32 %v3436, 536870912
  %v3438 = vshrl.u32 %v3437, 30
  %v3439 = vshll.u32 %v3438, 30
  %v3440 = vsub.s32 %v3436, %v3439
  %vm3441 = vcmp.lt.s32.totalorder %v3440, 0
  %v3442 = vsub.s32 0, %v3440
  %v3443 = vsel %vm3441, %v3442, %v3440
  %v3444 = vclz %v3443
  %v3445 = vsub.s32 %v3444, 2
  %vm3446 = vcmp.gt.s32.totalorder 0, %v3445
  %v3447 = vsel %vm3446, 0, %v3445
  %v3448 = vsub.s32 32, %v3447
  %v3449 = vshll.u32 %v3440, %v3447
  %v3450 = vshrl.u32 %v3432, %v3448
  %v3451 = vor.u32 %v3449, %v3450
  %v3452 = vsub.s32 4294967266, %v3447
  %v3453 = vadd.s32 %v3452, 127
  %v3454 = vshll.u32 %v3453, 23
  %v3455 = vor.u32 4788187, %v3454
  %v3456 = vand.u32 2147483647, %v3455
  %v3458 = vcvt.s32.f32 %v3451
  %v3459 = vmul.f32 %v3458, %v3456
  %v3460 = vxor.u32 %v3459, 2147483648
  %v3461 = vsel %vm3378, %v3460, %v3459
  %v3462 = vsub.s32 4, %v3438
  %v3463 = vsel %vm3378, %v3462, %v3438
  %v3464 = vsel %vm3377, %v166, %v3461
  %v3465 = vsel %vm3377, 0, %v3463
  %v3466 = vcosq.f32.pop %v3464
  %v3467 = vsinq.f32.pop %v3464
  %vm3468 = vweird.f32 %v166
  %v3469 = vand.u32 %v3465, 3
  %vm3470 = vcmp.lt.s32.totalorder %v3469, 2
  %vm3471 = vcmp.eq.s32.totalorder %v3469, 0
  %v3472 = vxor.u32 %v3467, 2147483648
  %v3473 = vsel %vm3471, %v3466, %v3472
  %vm3474 = vcmp.eq.s32.totalorder %v3469, 2
  %v3475 = vxor.u32 %v3466, 2147483648
  %v3476 = vsel %vm3474, %v3475, %v3467
  %v3477 = vsel %vm3470, %v3473, %v3476
  %v3478 = vsel %vm3468, nan, %v3477
  %3495 = vrot.lane.b32.xlu0 %v1933, 64
  %v3496 = vpop.permute.xlu0 %3495
  %3497 = vrot.lane.b32.xlu0 %v2036, 64
  %v3498 = vpop.permute.xlu0 %3497
  %3499 = vrot.lane.b32.xlu0 %v2139, 64
  %v3500 = vpop.permute.xlu0 %3499
  %3501 = vrot.lane.b32.xlu0 %v2242, 64
  %v3502 = vpop.permute.xlu0 %3501
  %3503 = vrot.lane.b32.xlu0 %v2345, 64
  %v3504 = vpop.permute.xlu0 %3503
  %3505 = vrot.lane.b32.xlu0 %v2448, 64
  %v3506 = vpop.permute.xlu0 %3505
  %3507 = vrot.lane.b32.xlu0 %v2551, 64
  %v3508 = vpop.permute.xlu0 %3507
  %3509 = vrot.lane.b32.xlu0 %v2654, 64
  %v3510 = vpop.permute.xlu0 %3509
  %3511 = vrot.lane.b32.xlu0 %v2757, 64
  %v3512 = vpop.permute.xlu0 %3511
  %3513 = vrot.lane.b32.xlu0 %v2860, 64
  %v3514 = vpop.permute.xlu0 %3513
  %3515 = vrot.lane.b32.xlu0 %v2963, 64
  %v3516 = vpop.permute.xlu0 %3515
  %3517 = vrot.lane.b32.xlu0 %v3066, 64
  %v3518 = vpop.permute.xlu0 %3517
  %3519 = vrot.lane.b32.xlu0 %v3169, 64
  %v3520 = vpop.permute.xlu0 %3519
  %3521 = vrot.lane.b32.xlu0 %v3272, 64
  %v3522 = vpop.permute.xlu0 %3521
  %3523 = vrot.lane.b32.xlu0 %v3375, 64
  %v3524 = vpop.permute.xlu0 %3523
  %3525 = vrot.lane.b32.xlu0 %v3478, 64
  %v3526 = vpop.permute.xlu0 %3525
  %vm3543 = vcmask 523264
  %v3544 = vsel %vm3543, %v270, %v3496
  %v3545 = vsel %vm3543, %v374, %v3498
  %v3546 = vsel %vm3543, %v478, %v3500
  %v3547 = vsel %vm3543, %v582, %v3502
  %v3548 = vsel %vm3543, %v686, %v3504
  %v3549 = vsel %vm3543, %v790, %v3506
  %v3550 = vsel %vm3543, %v894, %v3508
  %v3551 = vsel %vm3543, %v998, %v3510
  %v3552 = vsel %vm3543, %v1102, %v3512
  %v3553 = vsel %vm3543, %v1206, %v3514
  %v3554 = vsel %vm3543, %v1310, %v3516
  %v3555 = vsel %vm3543, %v1414, %v3518
  %v3556 = vsel %vm3543, %v1518, %v3520
  %v3557 = vsel %vm3543, %v1622, %v3522
  %v3558 = vsel %vm3543, %v1726, %v3524
  %v3559 = vsel %vm3543, %v1830, %v3526
  %v3560 = vpack.c.bf16 %v3545, %v3544
  %v3561 = vpack.c.bf16 %v3547, %v3546
  %v3562 = vpack.c.bf16 %v3549, %v3548
  %v3563 = vpack.c.bf16 %v3551, %v3550
  %v3564 = vpack.c.bf16 %v3553, %v3552
  %v3565 = vpack.c.bf16 %v3555, %v3554
  %v3566 = vpack.c.bf16 %v3557, %v3556
  %v3567 = vpack.c.bf16 %v3559, %v3558
  %v3568 = vld [vmem:[%s4] sm:$0xf]
  %v3569 = vld [vmem:[%s4 + $0x4] sm:$0xf]
  %v3570 = vld [vmem:[%s4 + $0x8] sm:$0xf]
  %v3571 = vld [vmem:[%s4 + $0xc] sm:$0xf]
  %v3572 = vld [vmem:[%s4 + $0x10] sm:$0xf]
  %v3573 = vld [vmem:[%s4 + $0x14] sm:$0xf]
  %v3574 = vld [vmem:[%s4 + $0x18] sm:$0xf]
  %v3575 = vld [vmem:[%s4 + $0x1c] sm:$0xf]
  %v3576 = vld [vmem:[%s4 + $0x20] sm:$0xf]
  %v3577 = vld [vmem:[%s4 + $0x24] sm:$0xf]
  %v3578 = vld [vmem:[%s4 + $0x28] sm:$0xf]
  %v3579 = vld [vmem:[%s4 + $0x2c] sm:$0xf]
  %v3580 = vld [vmem:[%s4 + $0x30] sm:$0xf]
  %v3581 = vld [vmem:[%s4 + $0x34] sm:$0xf]
  %v3582 = vld [vmem:[%s4 + $0x38] sm:$0xf]
  %v3583 = vld [vmem:[%s4 + $0x3c] sm:$0xf]
  %v3584 = vld [vmem:[%s5] sm:$0x1]
  %v3586 = vlaneseq
  %v3587 = vshrl.u32 %v3586, 7
  %v3588 = vsub.s32 0, %v3587
  %v3589 = vrot.slane %v3584, %v3588
  %v3607 = vunpack.c.l.b16 %v3568
  %v3608 = vunpack.c.l.b16 %v3569
  %v3609 = vunpack.c.l.b16 %v3570
  %v3610 = vunpack.c.l.b16 %v3571
  %v3611 = vunpack.c.l.b16 %v3572
  %v3612 = vunpack.c.l.b16 %v3573
  %v3613 = vunpack.c.l.b16 %v3574
  %v3614 = vunpack.c.l.b16 %v3575
  %v3615 = vunpack.c.l.b16 %v3576
  %v3616 = vunpack.c.l.b16 %v3577
  %v3617 = vunpack.c.l.b16 %v3578
  %v3618 = vunpack.c.l.b16 %v3579
  %v3619 = vunpack.c.l.b16 %v3580
  %v3620 = vunpack.c.l.b16 %v3581
  %v3621 = vunpack.c.l.b16 %v3582
  %v3622 = vunpack.c.l.b16 %v3583
  %v3623 = vpack.c.b16 %v3608, %v3607
  %v3624 = vpack.c.b16 %v3610, %v3609
  %v3625 = vpack.c.b16 %v3612, %v3611
  %v3626 = vpack.c.b16 %v3614, %v3613
  %v3627 = vpack.c.b16 %v3616, %v3615
  %v3628 = vpack.c.b16 %v3618, %v3617
  %v3629 = vpack.c.b16 %v3620, %v3619
  %v3630 = vpack.c.b16 %v3622, %v3621
  %3639 = vmatprep.subr.bf16.mxu0 0
  %3640 = vmatpush1.bf16.msra.mxu0 %v3630
  %3641 = vmatprep.subr.bf16.mxu0 0
  %3642 = vmatpush1.bf16.msra.mxu0 %v3629
  %3643 = vmatprep.subr.bf16.mxu0 0
  %3644 = vmatpush1.bf16.msra.mxu0 %v3628
  %3645 = vmatprep.subr.bf16.mxu0 0
  %3646 = vmatpush1.bf16.msra.mxu0 %v3627
  %3647 = vmatprep.subr.bf16.mxu0 0
  %3648 = vmatpush1.bf16.msra.mxu0 %v3626
  %3649 = vmatprep.subr.bf16.mxu0 0
  %3650 = vmatpush1.bf16.msra.mxu0 %v3625
  %3651 = vmatprep.subr.bf16.mxu0 0
  %3652 = vmatpush1.bf16.msra.mxu0 %v3624
  %3653 = vmatprep.subr.bf16.mxu0 0
  %3654 = vmatpush1.bf16.msra.mxu0 %v3623
  %3655 = vmatprep.subr.bf16.mxu0 0
  %3656 = vmatpush2.bf16.msra.mxu0 0
  %3657 = vmatprep.subr.bf16.mxu0 0
  %3658 = vmatpush2.bf16.msra.mxu0 0
  %3659 = vmatprep.subr.bf16.mxu0 0
  %3660 = vmatpush2.bf16.msra.mxu0 0
  %3661 = vmatprep.subr.bf16.mxu0 0
  %3662 = vmatpush2.bf16.msra.mxu0 0
  %3663 = vmatprep.subr.bf16.mxu0 0
  %3664 = vmatpush2.bf16.msra.mxu0 0
  %3665 = vmatprep.subr.bf16.mxu0 0
  %3666 = vmatpush2.bf16.msra.mxu0 0
  %3667 = vmatprep.subr.bf16.mxu0 0
  %3668 = vmatpush2.bf16.msra.mxu0 0
  %3669 = vmatprep.subr.bf16.mxu0 0
  %3670 = vmatpush2.bf16.msra.mxu0 0
  %3671 = vmatprep.mubr.bf16.mxu0 0
  %3672 = vmatmul.mubr.bf16.gmra.mxu0 %v3560
  %v3673 = vpop.f32.mrf.mxu0
  %v3674 = vadd.f32 %v3589, %v3673
  %v3675 = vpop.f32.mrf.mxu0
  %v3676 = vpop.f32.mrf.mxu0
  %v3677 = vadd.f32 %v3589, %v3676
  %v3678 = vpop.f32.mrf.mxu0
  %3679 = vmatprep.mubr.bf16.mxu0 0
  %3680 = vmatmul.mubr.bf16.gmra.mxu0 %v3561
  %v3681 = vpop.f32.mrf.mxu0
  %v3682 = vadd.f32 %v3589, %v3681
  %v3683 = vpop.f32.mrf.mxu0
  %v3684 = vpop.f32.mrf.mxu0
  %v3685 = vadd.f32 %v3589, %v3684
  %v3686 = vpop.f32.mrf.mxu0
  %3687 = vmatprep.mubr.bf16.mxu0 0
  %3688 = vmatmul.mubr.bf16.gmra.mxu0 %v3562
  %v3689 = vpop.f32.mrf.mxu0
  %v3690 = vadd.f32 %v3589, %v3689
  %v3691 = vpop.f32.mrf.mxu0
  %v3692 = vpop.f32.mrf.mxu0
  %v3693 = vadd.f32 %v3589, %v3692
  %v3694 = vpop.f32.mrf.mxu0
  %3695 = vmatprep.mubr.bf16.mxu0 0
  %3696 = vmatmul.mubr.bf16.gmra.mxu0 %v3563
  %v3697 = vpop.f32.mrf.mxu0
  %v3698 = vadd.f32 %v3589, %v3697
  %v3699 = vpop.f32.mrf.mxu0
  %v3700 = vpop.f32.mrf.mxu0
  %v3701 = vadd.f32 %v3589, %v3700
  %v3702 = vpop.f32.mrf.mxu0
  %3703 = vmatprep.mubr.bf16.mxu0 0
  %3704 = vmatmul.mubr.bf16.gmra.mxu0 %v3564
  %v3705 = vpop.f32.mrf.mxu0
  %v3706 = vadd.f32 %v3589, %v3705
  %v3707 = vpop.f32.mrf.mxu0
  %v3708 = vpop.f32.mrf.mxu0
  %v3709 = vadd.f32 %v3589, %v3708
  %v3710 = vpop.f32.mrf.mxu0
  %3711 = vmatprep.mubr.bf16.mxu0 0
  %3712 = vmatmul.mubr.bf16.gmra.mxu0 %v3565
  %v3713 = vpop.f32.mrf.mxu0
  %v3714 = vadd.f32 %v3589, %v3713
  %v3715 = vpop.f32.mrf.mxu0
  %v3716 = vpop.f32.mrf.mxu0
  %v3717 = vadd.f32 %v3589, %v3716
  %v3718 = vpop.f32.mrf.mxu0
  %3719 = vmatprep.mubr.bf16.mxu0 0
  %3720 = vmatmul.mubr.bf16.gmra.mxu0 %v3566
  %v3721 = vpop.f32.mrf.mxu0
  %v3722 = vadd.f32 %v3589, %v3721
  %v3723 = vpop.f32.mrf.mxu0
  %v3724 = vpop.f32.mrf.mxu0
  %v3725 = vadd.f32 %v3589, %v3724
  %v3726 = vpop.f32.mrf.mxu0
  %3727 = vmatprep.mubr.bf16.mxu0 0
  %3728 = vmatmul.mubr.bf16.gmra.mxu0 %v3567
  %v3729 = vpop.f32.mrf.mxu0
  %v3730 = vadd.f32 %v3589, %v3729
  %v3731 = vpop.f32.mrf.mxu0
  %v3732 = vpop.f32.mrf.mxu0
  %v3733 = vadd.f32 %v3589, %v3732
  %v3734 = vpop.f32.mrf.mxu0
  %3735 = vdwg.mxu0
  %vm3736 = vcmp.gt.f32.partialorder %v3674, 0.0
  %vm3737 = vcmp.gt.f32.partialorder %v3677, 0.0
  %vm3738 = vcmp.gt.f32.partialorder %v3682, 0.0
  %vm3739 = vcmp.gt.f32.partialorder %v3685, 0.0
  %vm3740 = vcmp.gt.f32.partialorder %v3690, 0.0
  %vm3741 = vcmp.gt.f32.partialorder %v3693, 0.0
  %vm3742 = vcmp.gt.f32.partialorder %v3698, 0.0
  %vm3743 = vcmp.gt.f32.partialorder %v3701, 0.0
  %vm3744 = vcmp.gt.f32.partialorder %v3706, 0.0
  %vm3745 = vcmp.gt.f32.partialorder %v3709, 0.0
  %vm3746 = vcmp.gt.f32.partialorder %v3714, 0.0
  %vm3747 = vcmp.gt.f32.partialorder %v3717, 0.0
  %vm3748 = vcmp.gt.f32.partialorder %v3722, 0.0
  %vm3749 = vcmp.gt.f32.partialorder %v3725, 0.0
  %vm3750 = vcmp.gt.f32.partialorder %v3730, 0.0
  %vm3751 = vcmp.gt.f32.partialorder %v3733, 0.0
  %v3752 = vmin.f32 %v3674, 0.0
  %v3753 = vmin.f32 %v3677, 0.0
  %v3754 = vmin.f32 %v3682, 0.0
  %v3755 = vmin.f32 %v3685, 0.0
  %v3756 = vmin.f32 %v3690, 0.0
  %v3757 = vmin.f32 %v3693, 0.0
  %v3758 = vmin.f32 %v3698, 0.0
  %v3759 = vmin.f32 %v3701, 0.0
  %v3760 = vmin.f32 %v3706, 0.0
  %v3761 = vmin.f32 %v3709, 0.0
  %v3762 = vmin.f32 %v3714, 0.0
  %v3763 = vmin.f32 %v3717, 0.0
  %v3764 = vmin.f32 %v3722, 0.0
  %v3765 = vmin.f32 %v3725, 0.0
  %v3766 = vmin.f32 %v3730, 0.0
  %v3767 = vmin.f32 %v3733, 0.0
  %v3768 = vmul.f32 %v3752, 1.442695
  %v3769 = vpow.pop %v3768
  %v3770 = vmul.f32 %v3753, 1.442695
  %v3771 = vpow.pop %v3770
  %v3772 = vmul.f32 %v3754, 1.442695
  %v3773 = vpow.pop %v3772
  %v3774 = vmul.f32 %v3755, 1.442695
  %v3775 = vpow.pop %v3774
  %v3776 = vmul.f32 %v3756, 1.442695
  %v3777 = vpow.pop %v3776
  %v3778 = vmul.f32 %v3757, 1.442695
  %v3779 = vpow.pop %v3778
  %v3780 = vmul.f32 %v3758, 1.442695
  %v3781 = vpow.pop %v3780
  %v3782 = vmul.f32 %v3759, 1.442695
  %v3783 = vpow.pop %v3782
  %v3784 = vmul.f32 %v3760, 1.442695
  %v3785 = vpow.pop %v3784
  %v3786 = vmul.f32 %v3761, 1.442695
  %v3787 = vpow.pop %v3786
  %v3788 = vmul.f32 %v3762, 1.442695
  %v3789 = vpow.pop %v3788
  %v3790 = vmul.f32 %v3763, 1.442695
  %v3791 = vpow.pop %v3790
  %v3792 = vmul.f32 %v3764, 1.442695
  %v3793 = vpow.pop %v3792
  %v3794 = vmul.f32 %v3765, 1.442695
  %v3795 = vpow.pop %v3794
  %v3796 = vmul.f32 %v3766, 1.442695
  %v3797 = vpow.pop %v3796
  %v3798 = vmul.f32 %v3767, 1.442695
  %v3799 = vpow.pop %v3798
  %v3800 = vsub.f32 %v3769, 1.0
  %v3801 = vsub.f32 %v3771, 1.0
  %v3802 = vsub.f32 %v3773, 1.0
  %v3803 = vsub.f32 %v3775, 1.0
  %v3804 = vsub.f32 %v3777, 1.0
  %v3805 = vsub.f32 %v3779, 1.0
  %v3806 = vsub.f32 %v3781, 1.0
  %v3807 = vsub.f32 %v3783, 1.0
  %v3808 = vsub.f32 %v3785, 1.0
  %v3809 = vsub.f32 %v3787, 1.0
  %v3810 = vsub.f32 %v3789, 1.0
  %v3811 = vsub.f32 %v3791, 1.0
  %v3812 = vsub.f32 %v3793, 1.0
  %v3813 = vsub.f32 %v3795, 1.0
  %v3814 = vsub.f32 %v3797, 1.0
  %v3815 = vsub.f32 %v3799, 1.0
  %v3816 = vsel %vm3736, %v3674, %v3800
  %v3817 = vsel %vm3737, %v3677, %v3801
  %v3818 = vsel %vm3738, %v3682, %v3802
  %v3819 = vsel %vm3739, %v3685, %v3803
  %v3820 = vsel %vm3740, %v3690, %v3804
  %v3821 = vsel %vm3741, %v3693, %v3805
  %v3822 = vsel %vm3742, %v3698, %v3806
  %v3823 = vsel %vm3743, %v3701, %v3807
  %v3824 = vsel %vm3744, %v3706, %v3808
  %v3825 = vsel %vm3745, %v3709, %v3809
  %v3826 = vsel %vm3746, %v3714, %v3810
  %v3827 = vsel %vm3747, %v3717, %v3811
  %v3828 = vsel %vm3748, %v3722, %v3812
  %v3829 = vsel %vm3749, %v3725, %v3813
  %v3830 = vsel %vm3750, %v3730, %v3814
  %v3831 = vsel %vm3751, %v3733, %v3815
  %v3832 = vpack.c.bf16 %v3817, %v3816
  %v3833 = vpack.c.bf16 %v3819, %v3818
  %v3834 = vpack.c.bf16 %v3821, %v3820
  %v3835 = vpack.c.bf16 %v3823, %v3822
  %v3836 = vpack.c.bf16 %v3825, %v3824
  %v3837 = vpack.c.bf16 %v3827, %v3826
  %v3838 = vpack.c.bf16 %v3829, %v3828
  %v3839 = vpack.c.bf16 %v3831, %v3830
  %v3840 = vld [vmem:[%s6] sm:$0xf]
  %v3841 = vld [vmem:[%s6 + $0x4] sm:$0xf]
  %v3842 = vld [vmem:[%s6 + $0x8] sm:$0xf]
  %v3843 = vld [vmem:[%s6 + $0xc] sm:$0xf]
  %v3844 = vld [vmem:[%s6 + $0x10] sm:$0xf]
  %v3845 = vld [vmem:[%s6 + $0x14] sm:$0xf]
  %v3846 = vld [vmem:[%s6 + $0x18] sm:$0xf]
  %v3847 = vld [vmem:[%s6 + $0x1c] sm:$0xf]
  %v3848 = vld [vmem:[%s6 + $0x20] sm:$0xf]
  %v3849 = vld [vmem:[%s6 + $0x24] sm:$0xf]
  %v3850 = vld [vmem:[%s6 + $0x28] sm:$0xf]
  %v3851 = vld [vmem:[%s6 + $0x2c] sm:$0xf]
  %v3852 = vld [vmem:[%s6 + $0x30] sm:$0xf]
  %v3853 = vld [vmem:[%s6 + $0x34] sm:$0xf]
  %v3854 = vld [vmem:[%s6 + $0x38] sm:$0xf]
  %v3855 = vld [vmem:[%s6 + $0x3c] sm:$0xf]
  %v3856 = vld [vmem:[%s7] sm:$0x1]
  %v3858 = vlaneseq
  %v3859 = vshrl.u32 %v3858, 7
  %v3860 = vsub.s32 0, %v3859
  %v3861 = vrot.slane %v3856, %v3860
  %v3879 = vunpack.c.l.b16 %v3840
  %v3880 = vunpack.c.l.b16 %v3841
  %v3881 = vunpack.c.l.b16 %v3842
  %v3882 = vunpack.c.l.b16 %v3843
  %v3883 = vunpack.c.l.b16 %v3844
  %v3884 = vunpack.c.l.b16 %v3845
  %v3885 = vunpack.c.l.b16 %v3846
  %v3886 = vunpack.c.l.b16 %v3847
  %v3887 = vunpack.c.l.b16 %v3848
  %v3888 = vunpack.c.l.b16 %v3849
  %v3889 = vunpack.c.l.b16 %v3850
  %v3890 = vunpack.c.l.b16 %v3851
  %v3891 = vunpack.c.l.b16 %v3852
  %v3892 = vunpack.c.l.b16 %v3853
  %v3893 = vunpack.c.l.b16 %v3854
  %v3894 = vunpack.c.l.b16 %v3855
  %v3895 = vpack.c.b16 %v3880, %v3879
  %v3896 = vpack.c.b16 %v3882, %v3881
  %v3897 = vpack.c.b16 %v3884, %v3883
  %v3898 = vpack.c.b16 %v3886, %v3885
  %v3899 = vpack.c.b16 %v3888, %v3887
  %v3900 = vpack.c.b16 %v3890, %v3889
  %v3901 = vpack.c.b16 %v3892, %v3891
  %v3902 = vpack.c.b16 %v3894, %v3893
  %3911 = vmatprep.subr.bf16.mxu0 0
  %3912 = vmatpush1.bf16.msra.mxu0 %v3902
  %3913 = vmatprep.subr.bf16.mxu0 0
  %3914 = vmatpush1.bf16.msra.mxu0 %v3901
  %3915 = vmatprep.subr.bf16.mxu0 0
  %3916 = vmatpush1.bf16.msra.mxu0 %v3900
  %3917 = vmatprep.subr.bf16.mxu0 0
  %3918 = vmatpush1.bf16.msra.mxu0 %v3899
  %3919 = vmatprep.subr.bf16.mxu0 0
  %3920 = vmatpush1.bf16.msra.mxu0 %v3898
  %3921 = vmatprep.subr.bf16.mxu0 0
  %3922 = vmatpush1.bf16.msra.mxu0 %v3897
  %3923 = vmatprep.subr.bf16.mxu0 0
  %3924 = vmatpush1.bf16.msra.mxu0 %v3896
  %3925 = vmatprep.subr.bf16.mxu0 0
  %3926 = vmatpush1.bf16.msra.mxu0 %v3895
  %3927 = vmatprep.subr.bf16.mxu0 0
  %3928 = vmatpush2.bf16.msra.mxu0 0
  %3929 = vmatprep.subr.bf16.mxu0 0
  %3930 = vmatpush2.bf16.msra.mxu0 0
  %3931 = vmatprep.subr.bf16.mxu0 0
  %3932 = vmatpush2.bf16.msra.mxu0 0
  %3933 = vmatprep.subr.bf16.mxu0 0
  %3934 = vmatpush2.bf16.msra.mxu0 0
  %3935 = vmatprep.subr.bf16.mxu0 0
  %3936 = vmatpush2.bf16.msra.mxu0 0
  %3937 = vmatprep.subr.bf16.mxu0 0
  %3938 = vmatpush2.bf16.msra.mxu0 0
  %3939 = vmatprep.subr.bf16.mxu0 0
  %3940 = vmatpush2.bf16.msra.mxu0 0
  %3941 = vmatprep.subr.bf16.mxu0 0
  %3942 = vmatpush2.bf16.msra.mxu0 0
  %3943 = vmatprep.mubr.bf16.mxu0 0
  %3944 = vmatmul.mubr.bf16.gmra.mxu0 %v3832
  %v3945 = vpop.f32.mrf.mxu0
  %v3946 = vadd.f32 %v3861, %v3945
  %v3947 = vpop.f32.mrf.mxu0
  %v3948 = vpop.f32.mrf.mxu0
  %v3949 = vadd.f32 %v3861, %v3948
  %v3950 = vpop.f32.mrf.mxu0
  %3951 = vmatprep.mubr.bf16.mxu0 0
  %3952 = vmatmul.mubr.bf16.gmra.mxu0 %v3833
  %v3953 = vpop.f32.mrf.mxu0
  %v3954 = vadd.f32 %v3861, %v3953
  %v3955 = vpop.f32.mrf.mxu0
  %v3956 = vpop.f32.mrf.mxu0
  %v3957 = vadd.f32 %v3861, %v3956
  %v3958 = vpop.f32.mrf.mxu0
  %3959 = vmatprep.mubr.bf16.mxu0 0
  %3960 = vmatmul.mubr.bf16.gmra.mxu0 %v3834
  %v3961 = vpop.f32.mrf.mxu0
  %v3962 = vadd.f32 %v3861, %v3961
  %v3963 = vpop.f32.mrf.mxu0
  %v3964 = vpop.f32.mrf.mxu0
  %v3965 = vadd.f32 %v3861, %v3964
  %v3966 = vpop.f32.mrf.mxu0
  %3967 = vmatprep.mubr.bf16.mxu0 0
  %3968 = vmatmul.mubr.bf16.gmra.mxu0 %v3835
  %v3969 = vpop.f32.mrf.mxu0
  %v3970 = vadd.f32 %v3861, %v3969
  %v3971 = vpop.f32.mrf.mxu0
  %v3972 = vpop.f32.mrf.mxu0
  %v3973 = vadd.f32 %v3861, %v3972
  %v3974 = vpop.f32.mrf.mxu0
  %3975 = vmatprep.mubr.bf16.mxu0 0
  %3976 = vmatmul.mubr.bf16.gmra.mxu0 %v3836
  %v3977 = vpop.f32.mrf.mxu0
  %v3978 = vadd.f32 %v3861, %v3977
  %v3979 = vpop.f32.mrf.mxu0
  %v3980 = vpop.f32.mrf.mxu0
  %v3981 = vadd.f32 %v3861, %v3980
  %v3982 = vpop.f32.mrf.mxu0
  %3983 = vmatprep.mubr.bf16.mxu0 0
  %3984 = vmatmul.mubr.bf16.gmra.mxu0 %v3837
  %v3985 = vpop.f32.mrf.mxu0
  %v3986 = vadd.f32 %v3861, %v3985
  %v3987 = vpop.f32.mrf.mxu0
  %v3988 = vpop.f32.mrf.mxu0
  %v3989 = vadd.f32 %v3861, %v3988
  %v3990 = vpop.f32.mrf.mxu0
  %3991 = vmatprep.mubr.bf16.mxu0 0
  %3992 = vmatmul.mubr.bf16.gmra.mxu0 %v3838
  %v3993 = vpop.f32.mrf.mxu0
  %v3994 = vadd.f32 %v3861, %v3993
  %v3995 = vpop.f32.mrf.mxu0
  %v3996 = vpop.f32.mrf.mxu0
  %v3997 = vadd.f32 %v3861, %v3996
  %v3998 = vpop.f32.mrf.mxu0
  %3999 = vmatprep.mubr.bf16.mxu0 0
  %4000 = vmatmul.mubr.bf16.gmra.mxu0 %v3839
  %v4001 = vpop.f32.mrf.mxu0
  %v4002 = vadd.f32 %v3861, %v4001
  %v4003 = vpop.f32.mrf.mxu0
  %v4004 = vpop.f32.mrf.mxu0
  %v4005 = vadd.f32 %v3861, %v4004
  %v4006 = vpop.f32.mrf.mxu0
  %4007 = vdwg.mxu0
  %v4008 = vld [vmem:[%s1] sm:$0xf]
  %v4009 = vld [vmem:[%s1 + $0x4] sm:$0xf]
  %v4010 = vld [vmem:[%s1 + $0x8] sm:$0xf]
  %v4011 = vld [vmem:[%s1 + $0xc] sm:$0xf]
  %v4012 = vld [vmem:[%s1 + $0x10] sm:$0xf]
  %v4013 = vld [vmem:[%s1 + $0x14] sm:$0xf]
  %v4014 = vld [vmem:[%s1 + $0x18] sm:$0xf]
  %v4015 = vld [vmem:[%s1 + $0x1c] sm:$0xf]
  %v4016 = vld [vmem:[%s1 + $0x20] sm:$0xf]
  %v4017 = vld [vmem:[%s1 + $0x24] sm:$0xf]
  %v4018 = vld [vmem:[%s1 + $0x28] sm:$0xf]
  %v4019 = vld [vmem:[%s1 + $0x2c] sm:$0xf]
  %v4020 = vld [vmem:[%s1 + $0x30] sm:$0xf]
  %v4021 = vld [vmem:[%s1 + $0x34] sm:$0xf]
  %v4022 = vld [vmem:[%s1 + $0x38] sm:$0xf]
  %v4023 = vld [vmem:[%s1 + $0x3c] sm:$0xf]
  %v4024 = vld [vmem:[%s2] sm:$0xf]
  %v4025 = vld [vmem:[%s2 + $0x4] sm:$0xf]
  %v4026 = vld [vmem:[%s2 + $0x8] sm:$0xf]
  %v4027 = vld [vmem:[%s2 + $0xc] sm:$0xf]
  %v4028 = vld [vmem:[%s2 + $0x10] sm:$0xf]
  %v4029 = vld [vmem:[%s2 + $0x14] sm:$0xf]
  %v4030 = vld [vmem:[%s2 + $0x18] sm:$0xf]
  %v4031 = vld [vmem:[%s2 + $0x1c] sm:$0xf]
  %v4032 = vld [vmem:[%s2 + $0x20] sm:$0xf]
  %v4033 = vld [vmem:[%s2 + $0x24] sm:$0xf]
  %v4034 = vld [vmem:[%s2 + $0x28] sm:$0xf]
  %v4035 = vld [vmem:[%s2 + $0x2c] sm:$0xf]
  %v4036 = vld [vmem:[%s2 + $0x30] sm:$0xf]
  %v4037 = vld [vmem:[%s2 + $0x34] sm:$0xf]
  %v4038 = vld [vmem:[%s2 + $0x38] sm:$0xf]
  %v4039 = vld [vmem:[%s2 + $0x3c] sm:$0xf]
  %v4040 = vld [vmem:[%s9] sm:$0xf]
  %v4041 = vld [vmem:[%s9 + $0x4] sm:$0xf]
  %v4042 = vld [vmem:[%s9 + $0x8] sm:$0xf]
  %v4043 = vld [vmem:[%s9 + $0xc] sm:$0xf]
  %v4060 = vunpack.c.l.b16 %v4024
  %v4061 = vunpack.c.l.b16 %v4025
  %v4062 = vunpack.c.l.b16 %v4026
  %v4063 = vunpack.c.l.b16 %v4027
  %v4064 = vunpack.c.l.b16 %v4028
  %v4065 = vunpack.c.l.b16 %v4029
  %v4066 = vunpack.c.l.b16 %v4030
  %v4067 = vunpack.c.l.b16 %v4031
  %v4068 = vunpack.c.l.b16 %v4032
  %v4069 = vunpack.c.l.b16 %v4033
  %v4070 = vunpack.c.l.b16 %v4034
  %v4071 = vunpack.c.l.b16 %v4035
  %v4072 = vunpack.c.l.b16 %v4036
  %v4073 = vunpack.c.l.b16 %v4037
  %v4074 = vunpack.c.l.b16 %v4038
  %v4075 = vunpack.c.l.b16 %v4039
  %v4076 = vpack.c.b16 %v4061, %v4060
  %v4077 = vpack.c.b16 %v4063, %v4062
  %v4078 = vpack.c.b16 %v4065, %v4064
  %v4079 = vpack.c.b16 %v4067, %v4066
  %v4080 = vpack.c.b16 %v4069, %v4068
  %v4081 = vpack.c.b16 %v4071, %v4070
  %v4082 = vpack.c.b16 %v4073, %v4072
  %v4083 = vpack.c.b16 %v4075, %v4074
  %v4088 = vunpack.c.l.b16 %v4040
  %v4089 = vunpack.c.l.b16 %v4041
  %v4090 = vunpack.c.l.b16 %v4042
  %v4091 = vunpack.c.l.b16 %v4043
  %v4092 = vpack.c.b16 %v4089, %v4088
  %v4093 = vpack.c.b16 %v4091, %v4090
  %vm4096 = vcmask 261120
  %v4098 = vsel %vm4096, %v4076, 0
  %v4101 = vsel %vm4096, %v4077, 0
  %v4104 = vsel %vm4096, %v4078, 0
  %v4107 = vsel %vm4096, %v4079, 0
  %v4110 = vsel %vm4096, %v4080, 0
  %v4113 = vsel %vm4096, %v4081, 0
  %v4116 = vsel %vm4096, %v4082, 0
  %v4119 = vsel %vm4096, %v4083, 0
  %4121 = vmatprep.subr.bf16.mxu0 0
  %4122 = vmatpush1.bf16.msra.mxu0 0
  %4123 = vmatprep.subr.bf16.mxu0 0
  %4124 = vmatpush1.bf16.msra.mxu0 0
  %4125 = vmatprep.subr.bf16.mxu0 0
  %4126 = vmatpush1.bf16.msra.mxu0 0
  %4127 = vmatprep.subr.bf16.mxu0 0
  %4128 = vmatpush1.bf16.msra.mxu0 0
  %4129 = vmatprep.subr.bf16.mxu0 0
  %4130 = vmatpush1.bf16.msra.mxu0 0
  %4131 = vmatprep.subr.bf16.mxu0 0
  %4132 = vmatpush1.bf16.msra.mxu0 0
  %4133 = vmatprep.subr.bf16.mxu0 0
  %4134 = vmatpush1.bf16.msra.mxu0 %v4093
  %4135 = vmatprep.subr.bf16.mxu0 0
  %4136 = vmatpush1.bf16.msra.mxu0 %v4092
  %4137 = vmatprep.subr.bf16.mxu0 0
  %4138 = vmatpush2.bf16.msra.mxu0 0
  %4139 = vmatprep.subr.bf16.mxu0 0
  %4140 = vmatpush2.bf16.msra.mxu0 0
  %4141 = vmatprep.subr.bf16.mxu0 0
  %4142 = vmatpush2.bf16.msra.mxu0 0
  %4143 = vmatprep.subr.bf16.mxu0 0
  %4144 = vmatpush2.bf16.msra.mxu0 0
  %4145 = vmatprep.subr.bf16.mxu0 0
  %4146 = vmatpush2.bf16.msra.mxu0 0
  %4147 = vmatprep.subr.bf16.mxu0 0
  %4148 = vmatpush2.bf16.msra.mxu0 0
  %4149 = vmatprep.subr.bf16.mxu0 0
  %4150 = vmatpush2.bf16.msra.mxu0 0
  %4151 = vmatprep.subr.bf16.mxu0 0
  %4152 = vmatpush2.bf16.msra.mxu0 0
  %4153 = vmatprep.mubr.bf16.mxu0 0
  %4154 = vmatmul.mubr.bf16.gmra.mxu0 %v4098
  %v4155 = vpop.f32.mrf.mxu0
  %v4156 = vadd.f32 0.0, %v4155
  %v4157 = vpop.f32.mrf.mxu0
  %v4158 = vpop.f32.mrf.mxu0
  %v4159 = vadd.f32 0.0, %v4158
  %v4160 = vpop.f32.mrf.mxu0
  %4161 = vmatprep.mubr.bf16.mxu0 0
  %4162 = vmatmul.mubr.bf16.gmra.mxu0 %v4101
  %v4163 = vpop.f32.mrf.mxu0
  %v4164 = vadd.f32 0.0, %v4163
  %v4165 = vpop.f32.mrf.mxu0
  %v4166 = vpop.f32.mrf.mxu0
  %v4167 = vadd.f32 0.0, %v4166
  %v4168 = vpop.f32.mrf.mxu0
  %4169 = vmatprep.mubr.bf16.mxu0 0
  %4170 = vmatmul.mubr.bf16.gmra.mxu0 %v4104
  %v4171 = vpop.f32.mrf.mxu0
  %v4172 = vadd.f32 0.0, %v4171
  %v4173 = vpop.f32.mrf.mxu0
  %v4174 = vpop.f32.mrf.mxu0
  %v4175 = vadd.f32 0.0, %v4174
  %v4176 = vpop.f32.mrf.mxu0
  %4177 = vmatprep.mubr.bf16.mxu0 0
  %4178 = vmatmul.mubr.bf16.gmra.mxu0 %v4107
  %v4179 = vpop.f32.mrf.mxu0
  %v4180 = vadd.f32 0.0, %v4179
  %v4181 = vpop.f32.mrf.mxu0
  %v4182 = vpop.f32.mrf.mxu0
  %v4183 = vadd.f32 0.0, %v4182
  %v4184 = vpop.f32.mrf.mxu0
  %4185 = vmatprep.mubr.bf16.mxu0 0
  %4186 = vmatmul.mubr.bf16.gmra.mxu0 %v4110
  %v4187 = vpop.f32.mrf.mxu0
  %v4188 = vadd.f32 0.0, %v4187
  %v4189 = vpop.f32.mrf.mxu0
  %v4190 = vpop.f32.mrf.mxu0
  %v4191 = vadd.f32 0.0, %v4190
  %v4192 = vpop.f32.mrf.mxu0
  %4193 = vmatprep.mubr.bf16.mxu0 0
  %4194 = vmatmul.mubr.bf16.gmra.mxu0 %v4113
  %v4195 = vpop.f32.mrf.mxu0
  %v4196 = vadd.f32 0.0, %v4195
  %v4197 = vpop.f32.mrf.mxu0
  %v4198 = vpop.f32.mrf.mxu0
  %v4199 = vadd.f32 0.0, %v4198
  %v4200 = vpop.f32.mrf.mxu0
  %4201 = vmatprep.mubr.bf16.mxu0 0
  %4202 = vmatmul.mubr.bf16.gmra.mxu0 %v4116
  %v4203 = vpop.f32.mrf.mxu0
  %v4204 = vadd.f32 0.0, %v4203
  %v4205 = vpop.f32.mrf.mxu0
  %v4206 = vpop.f32.mrf.mxu0
  %v4207 = vadd.f32 0.0, %v4206
  %v4208 = vpop.f32.mrf.mxu0
  %4209 = vmatprep.mubr.bf16.mxu0 0
  %4210 = vmatmul.mubr.bf16.gmra.mxu0 %v4119
  %v4211 = vpop.f32.mrf.mxu0
  %v4212 = vadd.f32 0.0, %v4211
  %v4213 = vpop.f32.mrf.mxu0
  %v4214 = vpop.f32.mrf.mxu0
  %v4215 = vadd.f32 0.0, %v4214
  %v4216 = vpop.f32.mrf.mxu0
  %4217 = vdwg.mxu0
  %v4218 = vld [vmem:[%s10] sm:$0xf]
  %v4219 = vld [vmem:[%s10 + $0x4] sm:$0xf]
  %v4220 = vld [vmem:[%s10 + $0x8] sm:$0xf]
  %v4221 = vld [vmem:[%s10 + $0xc] sm:$0xf]
  %v4222 = vld [vmem:[%s10 + $0x10] sm:$0xf]
  %v4223 = vld [vmem:[%s10 + $0x14] sm:$0xf]
  %v4224 = vld [vmem:[%s10 + $0x18] sm:$0xf]
  %v4225 = vld [vmem:[%s10 + $0x1c] sm:$0xf]
  %v4242 = vunpack.c.l.b16 %v4008
  %v4243 = vunpack.c.l.b16 %v4009
  %v4244 = vunpack.c.l.b16 %v4010
  %v4245 = vunpack.c.l.b16 %v4011
  %v4246 = vunpack.c.l.b16 %v4012
  %v4247 = vunpack.c.l.b16 %v4013
  %v4248 = vunpack.c.l.b16 %v4014
  %v4249 = vunpack.c.l.b16 %v4015
  %v4250 = vunpack.c.l.b16 %v4016
  %v4251 = vunpack.c.l.b16 %v4017
  %v4252 = vunpack.c.l.b16 %v4018
  %v4253 = vunpack.c.l.b16 %v4019
  %v4254 = vunpack.c.l.b16 %v4020
  %v4255 = vunpack.c.l.b16 %v4021
  %v4256 = vunpack.c.l.b16 %v4022
  %v4257 = vunpack.c.l.b16 %v4023
  %v4258 = vpack.c.b16 %v4243, %v4242
  %v4259 = vpack.c.b16 %v4245, %v4244
  %v4260 = vpack.c.b16 %v4247, %v4246
  %v4261 = vpack.c.b16 %v4249, %v4248
  %v4262 = vpack.c.b16 %v4251, %v4250
  %v4263 = vpack.c.b16 %v4253, %v4252
  %v4264 = vpack.c.b16 %v4255, %v4254
  %v4265 = vpack.c.b16 %v4257, %v4256
  %4266 = vrot.lane.b32.xlu0 %v4258, 96
  %v4267 = vpop.permute.xlu0 %4266
  %4268 = vrot.lane.b32.xlu0 %v4259, 96
  %v4269 = vpop.permute.xlu0 %4268
  %4270 = vrot.lane.b32.xlu0 %v4260, 96
  %v4271 = vpop.permute.xlu0 %4270
  %4272 = vrot.lane.b32.xlu0 %v4261, 96
  %v4273 = vpop.permute.xlu0 %4272
  %4274 = vrot.lane.b32.xlu0 %v4262, 96
  %v4275 = vpop.permute.xlu0 %4274
  %4276 = vrot.lane.b32.xlu0 %v4263, 96
  %v4277 = vpop.permute.xlu0 %4276
  %4278 = vrot.lane.b32.xlu0 %v4264, 96
  %v4279 = vpop.permute.xlu0 %4278
  %4280 = vrot.lane.b32.xlu0 %v4265, 96
  %v4281 = vpop.permute.xlu0 %4280
  %v4290 = vunpack.c.l.b16 %v4218
  %v4291 = vunpack.c.l.b16 %v4219
  %v4292 = vunpack.c.l.b16 %v4220
  %v4293 = vunpack.c.l.b16 %v4221
  %v4294 = vunpack.c.l.b16 %v4222
  %v4295 = vunpack.c.l.b16 %v4223
  %v4296 = vunpack.c.l.b16 %v4224
  %v4297 = vunpack.c.l.b16 %v4225
  %v4298 = vpack.c.b16 %v4291, %v4290
  %v4299 = vpack.c.b16 %v4293, %v4292
  %v4300 = vpack.c.b16 %v4295, %v4294
  %v4301 = vpack.c.b16 %v4297, %v4296
  %v4307 = vsel %vm3543, %v4267, 0
  %v4310 = vsel %vm3543, %v4269, 0
  %v4313 = vsel %vm3543, %v4271, 0
  %v4316 = vsel %vm3543, %v4273, 0
  %v4319 = vsel %vm3543, %v4275, 0
  %v4322 = vsel %vm3543, %v4277, 0
  %v4325 = vsel %vm3543, %v4279, 0
  %v4328 = vsel %vm3543, %v4281, 0
  %4330 = vmatprep.subr.bf16.mxu0 0
  %4331 = vmatpush1.bf16.msra.mxu0 0
  %4332 = vmatprep.subr.bf16.mxu0 0
  %4333 = vmatpush1.bf16.msra.mxu0 0
  %4334 = vmatprep.subr.bf16.mxu0 0
  %4335 = vmatpush1.bf16.msra.mxu0 0
  %4336 = vmatprep.subr.bf16.mxu0 0
  %4337 = vmatpush1.bf16.msra.mxu0 0
  %4338 = vmatprep.subr.bf16.mxu0 0
  %4339 = vmatpush1.bf16.msra.mxu0 %v4301
  %4340 = vmatprep.subr.bf16.mxu0 0
  %4341 = vmatpush1.bf16.msra.mxu0 %v4300
  %4342 = vmatprep.subr.bf16.mxu0 0
  %4343 = vmatpush1.bf16.msra.mxu0 %v4299
  %4344 = vmatprep.subr.bf16.mxu0 0
  %4345 = vmatpush1.bf16.msra.mxu0 %v4298
  %4346 = vmatprep.subr.bf16.mxu0 0
  %4347 = vmatpush2.bf16.msra.mxu0 0
  %4348 = vmatprep.subr.bf16.mxu0 0
  %4349 = vmatpush2.bf16.msra.mxu0 0
  %4350 = vmatprep.subr.bf16.mxu0 0
  %4351 = vmatpush2.bf16.msra.mxu0 0
  %4352 = vmatprep.subr.bf16.mxu0 0
  %4353 = vmatpush2.bf16.msra.mxu0 0
  %4354 = vmatprep.subr.bf16.mxu0 0
  %4355 = vmatpush2.bf16.msra.mxu0 0
  %4356 = vmatprep.subr.bf16.mxu0 0
  %4357 = vmatpush2.bf16.msra.mxu0 0
  %4358 = vmatprep.subr.bf16.mxu0 0
  %4359 = vmatpush2.bf16.msra.mxu0 0
  %4360 = vmatprep.subr.bf16.mxu0 0
  %4361 = vmatpush2.bf16.msra.mxu0 0
  %4362 = vmatprep.mubr.bf16.mxu0 0
  %4363 = vmatmul.mubr.bf16.gmra.mxu0 %v4307
  %v4364 = vpop.f32.mrf.mxu0
  %v4365 = vadd.f32 0.0, %v4364
  %v4366 = vpop.f32.mrf.mxu0
  %v4367 = vpop.f32.mrf.mxu0
  %v4368 = vadd.f32 0.0, %v4367
  %v4369 = vpop.f32.mrf.mxu0
  %4370 = vmatprep.mubr.bf16.mxu0 0
  %4371 = vmatmul.mubr.bf16.gmra.mxu0 %v4310
  %v4372 = vpop.f32.mrf.mxu0
  %v4373 = vadd.f32 0.0, %v4372
  %v4374 = vpop.f32.mrf.mxu0
  %v4375 = vpop.f32.mrf.mxu0
  %v4376 = vadd.f32 0.0, %v4375
  %v4377 = vpop.f32.mrf.mxu0
  %4378 = vmatprep.mubr.bf16.mxu0 0
  %4379 = vmatmul.mubr.bf16.gmra.mxu0 %v4313
  %v4380 = vpop.f32.mrf.mxu0
  %v4381 = vadd.f32 0.0, %v4380
  %v4382 = vpop.f32.mrf.mxu0
  %v4383 = vpop.f32.mrf.mxu0
  %v4384 = vadd.f32 0.0, %v4383
  %v4385 = vpop.f32.mrf.mxu0
  %4386 = vmatprep.mubr.bf16.mxu0 0
  %4387 = vmatmul.mubr.bf16.gmra.mxu0 %v4316
  %v4388 = vpop.f32.mrf.mxu0
  %v4389 = vadd.f32 0.0, %v4388
  %v4390 = vpop.f32.mrf.mxu0
  %v4391 = vpop.f32.mrf.mxu0
  %v4392 = vadd.f32 0.0, %v4391
  %v4393 = vpop.f32.mrf.mxu0
  %4394 = vmatprep.mubr.bf16.mxu0 0
  %4395 = vmatmul.mubr.bf16.gmra.mxu0 %v4319
  %v4396 = vpop.f32.mrf.mxu0
  %v4397 = vadd.f32 0.0, %v4396
  %v4398 = vpop.f32.mrf.mxu0
  %v4399 = vpop.f32.mrf.mxu0
  %v4400 = vadd.f32 0.0, %v4399
  %v4401 = vpop.f32.mrf.mxu0
  %4402 = vmatprep.mubr.bf16.mxu0 0
  %4403 = vmatmul.mubr.bf16.gmra.mxu0 %v4322
  %v4404 = vpop.f32.mrf.mxu0
  %v4405 = vadd.f32 0.0, %v4404
  %v4406 = vpop.f32.mrf.mxu0
  %v4407 = vpop.f32.mrf.mxu0
  %v4408 = vadd.f32 0.0, %v4407
  %v4409 = vpop.f32.mrf.mxu0
  %4410 = vmatprep.mubr.bf16.mxu0 0
  %4411 = vmatmul.mubr.bf16.gmra.mxu0 %v4325
  %v4412 = vpop.f32.mrf.mxu0
  %v4413 = vadd.f32 0.0, %v4412
  %v4414 = vpop.f32.mrf.mxu0
  %v4415 = vpop.f32.mrf.mxu0
  %v4416 = vadd.f32 0.0, %v4415
  %v4417 = vpop.f32.mrf.mxu0
  %4418 = vmatprep.mubr.bf16.mxu0 0
  %4419 = vmatmul.mubr.bf16.gmra.mxu0 %v4328
  %v4420 = vpop.f32.mrf.mxu0
  %v4421 = vadd.f32 0.0, %v4420
  %v4422 = vpop.f32.mrf.mxu0
  %v4423 = vpop.f32.mrf.mxu0
  %v4424 = vadd.f32 0.0, %v4423
  %v4425 = vpop.f32.mrf.mxu0
  %4426 = vdwg.mxu0
  %v4427 = vld [vmem:[%s11] sm:$0x1]
  %v4428 = vadd.f32 %v4156, %v4365
  %v4429 = vadd.f32 %v4159, %v4368
  %v4430 = vadd.f32 %v4164, %v4373
  %v4431 = vadd.f32 %v4167, %v4376
  %v4432 = vadd.f32 %v4172, %v4381
  %v4433 = vadd.f32 %v4175, %v4384
  %v4434 = vadd.f32 %v4180, %v4389
  %v4435 = vadd.f32 %v4183, %v4392
  %v4436 = vadd.f32 %v4188, %v4397
  %v4437 = vadd.f32 %v4191, %v4400
  %v4438 = vadd.f32 %v4196, %v4405
  %v4439 = vadd.f32 %v4199, %v4408
  %v4440 = vadd.f32 %v4204, %v4413
  %v4441 = vadd.f32 %v4207, %v4416
  %v4442 = vadd.f32 %v4212, %v4421
  %v4443 = vadd.f32 %v4215, %v4424
  %v4445 = vlaneseq
  %v4446 = vshrl.u32 %v4445, 7
  %v4447 = vsub.s32 0, %v4446
  %v4448 = vrot.slane %v4427, %v4447
  %v4450 = vadd.f32 %v4428, %v4448
  %v4451 = vadd.f32 %v4429, %v4448
  %v4452 = vadd.f32 %v4430, %v4448
  %v4453 = vadd.f32 %v4431, %v4448
  %v4454 = vadd.f32 %v4432, %v4448
  %v4455 = vadd.f32 %v4433, %v4448
  %v4456 = vadd.f32 %v4434, %v4448
  %v4457 = vadd.f32 %v4435, %v4448
  %v4458 = vadd.f32 %v4436, %v4448
  %v4459 = vadd.f32 %v4437, %v4448
  %v4460 = vadd.f32 %v4438, %v4448
  %v4461 = vadd.f32 %v4439, %v4448
  %v4462 = vadd.f32 %v4440, %v4448
  %v4463 = vadd.f32 %v4441, %v4448
  %v4464 = vadd.f32 %v4442, %v4448
  %v4465 = vadd.f32 %v4443, %v4448
  %v4466 = vadd.f32 %v4156, %v4448
  %v4467 = vadd.f32 %v4159, %v4448
  %v4468 = vadd.f32 %v4164, %v4448
  %v4469 = vadd.f32 %v4167, %v4448
  %v4470 = vadd.f32 %v4172, %v4448
  %v4471 = vadd.f32 %v4175, %v4448
  %v4472 = vadd.f32 %v4180, %v4448
  %v4473 = vadd.f32 %v4183, %v4448
  %v4474 = vadd.f32 %v4188, %v4448
  %v4475 = vadd.f32 %v4191, %v4448
  %v4476 = vadd.f32 %v4196, %v4448
  %v4477 = vadd.f32 %v4199, %v4448
  %v4478 = vadd.f32 %v4204, %v4448
  %v4479 = vadd.f32 %v4207, %v4448
  %v4480 = vadd.f32 %v4212, %v4448
  %v4481 = vadd.f32 %v4215, %v4448
  %v4482 = vld [vmem:[%s8] sm:$0xf]
  %v4483 = vld [vmem:[%s8 + $0x4] sm:$0xf]
  %v4484 = vld [vmem:[%s8 + $0x8] sm:$0xf]
  %v4485 = vld [vmem:[%s8 + $0xc] sm:$0xf]
  %v4490 = vunpack.c.l.b16 %v4482
  %v4491 = vunpack.c.l.b16 %v4483
  %v4492 = vunpack.c.l.b16 %v4484
  %v4493 = vunpack.c.l.b16 %v4485
  %v4494 = vpack.c.b16 %v4491, %v4490
  %v4495 = vpack.c.b16 %v4493, %v4492
  %v4499 = vsel %vm4096, %v4258, 0
  %v4502 = vsel %vm4096, %v4259, 0
  %v4505 = vsel %vm4096, %v4260, 0
  %v4508 = vsel %vm4096, %v4261, 0
  %v4511 = vsel %vm4096, %v4262, 0
  %v4514 = vsel %vm4096, %v4263, 0
  %v4517 = vsel %vm4096, %v4264, 0
  %v4520 = vsel %vm4096, %v4265, 0
  %4522 = vmatprep.subr.bf16.mxu0 0
  %4523 = vmatpush1.bf16.msra.mxu0 0
  %4524 = vmatprep.subr.bf16.mxu0 0
  %4525 = vmatpush1.bf16.msra.mxu0 0
  %4526 = vmatprep.subr.bf16.mxu0 0
  %4527 = vmatpush1.bf16.msra.mxu0 0
  %4528 = vmatprep.subr.bf16.mxu0 0
  %4529 = vmatpush1.bf16.msra.mxu0 0
  %4530 = vmatprep.subr.bf16.mxu0 0
  %4531 = vmatpush1.bf16.msra.mxu0 0
  %4532 = vmatprep.subr.bf16.mxu0 0
  %4533 = vmatpush1.bf16.msra.mxu0 0
  %4534 = vmatprep.subr.bf16.mxu0 0
  %4535 = vmatpush1.bf16.msra.mxu0 %v4495
  %4536 = vmatprep.subr.bf16.mxu0 0
  %4537 = vmatpush1.bf16.msra.mxu0 %v4494
  %4538 = vmatprep.subr.bf16.mxu0 0
  %4539 = vmatpush2.bf16.msra.mxu0 0
  %4540 = vmatprep.subr.bf16.mxu0 0
  %4541 = vmatpush2.bf16.msra.mxu0 0
  %4542 = vmatprep.subr.bf16.mxu0 0
  %4543 = vmatpush2.bf16.msra.mxu0 0
  %4544 = vmatprep.subr.bf16.mxu0 0
  %4545 = vmatpush2.bf16.msra.mxu0 0
  %4546 = vmatprep.subr.bf16.mxu0 0
  %4547 = vmatpush2.bf16.msra.mxu0 0
  %4548 = vmatprep.subr.bf16.mxu0 0
  %4549 = vmatpush2.bf16.msra.mxu0 0
  %4550 = vmatprep.subr.bf16.mxu0 0
  %4551 = vmatpush2.bf16.msra.mxu0 0
  %4552 = vmatprep.subr.bf16.mxu0 0
  %4553 = vmatpush2.bf16.msra.mxu0 0
  %4554 = vmatprep.mubr.bf16.mxu0 0
  %4555 = vmatmul.mubr.bf16.gmra.mxu0 %v4499
  %v4556 = vpop.f32.mrf.mxu0
  %v4557 = vadd.f32 %v4450, %v4556
  %v4558 = vpop.f32.mrf.mxu0
  %v4559 = vpop.f32.mrf.mxu0
  %v4560 = vadd.f32 %v4451, %v4559
  %v4561 = vpop.f32.mrf.mxu0
  %4562 = vmatprep.mubr.bf16.mxu0 0
  %4563 = vmatmul.mubr.bf16.gmra.mxu0 %v4502
  %v4564 = vpop.f32.mrf.mxu0
  %v4565 = vadd.f32 %v4452, %v4564
  %v4566 = vpop.f32.mrf.mxu0
  %v4567 = vpop.f32.mrf.mxu0
  %v4568 = vadd.f32 %v4453, %v4567
  %v4569 = vpop.f32.mrf.mxu0
  %4570 = vmatprep.mubr.bf16.mxu0 0
  %4571 = vmatmul.mubr.bf16.gmra.mxu0 %v4505
  %v4572 = vpop.f32.mrf.mxu0
  %v4573 = vadd.f32 %v4454, %v4572
  %v4574 = vpop.f32.mrf.mxu0
  %v4575 = vpop.f32.mrf.mxu0
  %v4576 = vadd.f32 %v4455, %v4575
  %v4577 = vpop.f32.mrf.mxu0
  %4578 = vmatprep.mubr.bf16.mxu0 0
  %4579 = vmatmul.mubr.bf16.gmra.mxu0 %v4508
  %v4580 = vpop.f32.mrf.mxu0
  %v4581 = vadd.f32 %v4456, %v4580
  %v4582 = vpop.f32.mrf.mxu0
  %v4583 = vpop.f32.mrf.mxu0
  %v4584 = vadd.f32 %v4457, %v4583
  %v4585 = vpop.f32.mrf.mxu0
  %4586 = vmatprep.mubr.bf16.mxu0 0
  %4587 = vmatmul.mubr.bf16.gmra.mxu0 %v4511
  %v4588 = vpop.f32.mrf.mxu0
  %v4589 = vadd.f32 %v4458, %v4588
  %v4590 = vpop.f32.mrf.mxu0
  %v4591 = vpop.f32.mrf.mxu0
  %v4592 = vadd.f32 %v4459, %v4591
  %v4593 = vpop.f32.mrf.mxu0
  %4594 = vmatprep.mubr.bf16.mxu0 0
  %4595 = vmatmul.mubr.bf16.gmra.mxu0 %v4514
  %v4596 = vpop.f32.mrf.mxu0
  %v4597 = vadd.f32 %v4460, %v4596
  %v4598 = vpop.f32.mrf.mxu0
  %v4599 = vpop.f32.mrf.mxu0
  %v4600 = vadd.f32 %v4461, %v4599
  %v4601 = vpop.f32.mrf.mxu0
  %4602 = vmatprep.mubr.bf16.mxu0 0
  %4603 = vmatmul.mubr.bf16.gmra.mxu0 %v4517
  %v4604 = vpop.f32.mrf.mxu0
  %v4605 = vadd.f32 %v4462, %v4604
  %v4606 = vpop.f32.mrf.mxu0
  %v4607 = vpop.f32.mrf.mxu0
  %v4608 = vadd.f32 %v4463, %v4607
  %v4609 = vpop.f32.mrf.mxu0
  %4610 = vmatprep.mubr.bf16.mxu0 0
  %4611 = vmatmul.mubr.bf16.gmra.mxu0 %v4520
  %v4612 = vpop.f32.mrf.mxu0
  %v4613 = vadd.f32 %v4464, %v4612
  %v4614 = vpop.f32.mrf.mxu0
  %v4615 = vpop.f32.mrf.mxu0
  %v4616 = vadd.f32 %v4465, %v4615
  %v4617 = vpop.f32.mrf.mxu0
  %4618 = vdwg.mxu0
  %v4619 = vadd.f32 %v4557, %v3946
  %v4620 = vadd.f32 %v4560, %v3949
  %v4621 = vadd.f32 %v4565, %v3954
  %v4622 = vadd.f32 %v4568, %v3957
  %v4623 = vadd.f32 %v4573, %v3962
  %v4624 = vadd.f32 %v4576, %v3965
  %v4625 = vadd.f32 %v4581, %v3970
  %v4626 = vadd.f32 %v4584, %v3973
  %v4627 = vadd.f32 %v4589, %v3978
  %v4628 = vadd.f32 %v4592, %v3981
  %v4629 = vadd.f32 %v4597, %v3986
  %v4630 = vadd.f32 %v4600, %v3989
  %v4631 = vadd.f32 %v4605, %v3994
  %v4632 = vadd.f32 %v4608, %v3997
  %v4633 = vadd.f32 %v4613, %v4002
  %v4634 = vadd.f32 %v4616, %v4005
  %v4635 = vadd.f32 %v4466, %v3946
  %v4636 = vadd.f32 %v4467, %v3949
  %v4637 = vadd.f32 %v4468, %v3954
  %v4638 = vadd.f32 %v4469, %v3957
  %v4639 = vadd.f32 %v4470, %v3962
  %v4640 = vadd.f32 %v4471, %v3965
  %v4641 = vadd.f32 %v4472, %v3970
  %v4642 = vadd.f32 %v4473, %v3973
  %v4643 = vadd.f32 %v4474, %v3978
  %v4644 = vadd.f32 %v4475, %v3981
  %v4645 = vadd.f32 %v4476, %v3986
  %v4646 = vadd.f32 %v4477, %v3989
  %v4647 = vadd.f32 %v4478, %v3994
  %v4648 = vadd.f32 %v4479, %v3997
  %v4649 = vadd.f32 %v4480, %v4002
  %v4650 = vadd.f32 %v4481, %v4005
  %v4651 = vpack.c.bf16 %v4620, %v4619
  %v4652 = vpack.c.bf16 %v4622, %v4621
  %v4653 = vpack.c.bf16 %v4624, %v4623
  %v4654 = vpack.c.bf16 %v4626, %v4625
  %v4655 = vpack.c.bf16 %v4628, %v4627
  %v4656 = vpack.c.bf16 %v4630, %v4629
  %v4657 = vpack.c.bf16 %v4632, %v4631
  %v4658 = vpack.c.bf16 %v4634, %v4633
  %v4659 = vpack.c.bf16 %v4636, %v4635
  %v4660 = vpack.c.bf16 %v4638, %v4637
  %v4661 = vpack.c.bf16 %v4640, %v4639
  %v4662 = vpack.c.bf16 %v4642, %v4641
  %v4663 = vpack.c.bf16 %v4644, %v4643
  %v4664 = vpack.c.bf16 %v4646, %v4645
  %v4665 = vpack.c.bf16 %v4648, %v4647
  %v4666 = vpack.c.bf16 %v4650, %v4649
  %v4667 = vld [vmem:[%s12] sm:$0xf]
  %v4668 = vld [vmem:[%s12 + $0x4] sm:$0xf]
  %v4669 = vld [vmem:[%s12 + $0x8] sm:$0xf]
  %v4670 = vld [vmem:[%s12 + $0xc] sm:$0xf]
  %v4675 = vunpack.c.l.b16 %v4667
  %v4676 = vunpack.c.l.b16 %v4668
  %v4677 = vunpack.c.l.b16 %v4669
  %v4678 = vunpack.c.l.b16 %v4670
  %v4679 = vpack.c.b16 %v4676, %v4675
  %v4680 = vpack.c.b16 %v4678, %v4677
  %4715 = vrot.lane.b32.xlu0 %v4450, 96
  %v4716 = vpop.permute.xlu0 %4715
  %4717 = vrot.lane.b32.xlu0 %v4451, 96
  %v4718 = vpop.permute.xlu0 %4717
  %4719 = vrot.lane.b32.xlu0 %v4452, 96
  %v4720 = vpop.permute.xlu0 %4719
  %4721 = vrot.lane.b32.xlu0 %v4453, 96
  %v4722 = vpop.permute.xlu0 %4721
  %4723 = vrot.lane.b32.xlu0 %v4454, 96
  %v4724 = vpop.permute.xlu0 %4723
  %4725 = vrot.lane.b32.xlu0 %v4455, 96
  %v4726 = vpop.permute.xlu0 %4725
  %4727 = vrot.lane.b32.xlu0 %v4456, 96
  %v4728 = vpop.permute.xlu0 %4727
  %4729 = vrot.lane.b32.xlu0 %v4457, 96
  %v4730 = vpop.permute.xlu0 %4729
  %4731 = vrot.lane.b32.xlu0 %v4458, 96
  %v4732 = vpop.permute.xlu0 %4731
  %4733 = vrot.lane.b32.xlu0 %v4459, 96
  %v4734 = vpop.permute.xlu0 %4733
  %4735 = vrot.lane.b32.xlu0 %v4460, 96
  %v4736 = vpop.permute.xlu0 %4735
  %4737 = vrot.lane.b32.xlu0 %v4461, 96
  %v4738 = vpop.permute.xlu0 %4737
  %4739 = vrot.lane.b32.xlu0 %v4462, 96
  %v4740 = vpop.permute.xlu0 %4739
  %4741 = vrot.lane.b32.xlu0 %v4463, 96
  %v4742 = vpop.permute.xlu0 %4741
  %4743 = vrot.lane.b32.xlu0 %v4464, 96
  %v4744 = vpop.permute.xlu0 %4743
  %4745 = vrot.lane.b32.xlu0 %v4465, 96
  %v4746 = vpop.permute.xlu0 %4745
  %4747 = vrot.lane.b32.xlu0 %v4466, 96
  %v4748 = vpop.permute.xlu0 %4747
  %4749 = vrot.lane.b32.xlu0 %v4467, 96
  %v4750 = vpop.permute.xlu0 %4749
  %4751 = vrot.lane.b32.xlu0 %v4468, 96
  %v4752 = vpop.permute.xlu0 %4751
  %4753 = vrot.lane.b32.xlu0 %v4469, 96
  %v4754 = vpop.permute.xlu0 %4753
  %4755 = vrot.lane.b32.xlu0 %v4470, 96
  %v4756 = vpop.permute.xlu0 %4755
  %4757 = vrot.lane.b32.xlu0 %v4471, 96
  %v4758 = vpop.permute.xlu0 %4757
  %4759 = vrot.lane.b32.xlu0 %v4472, 96
  %v4760 = vpop.permute.xlu0 %4759
  %4761 = vrot.lane.b32.xlu0 %v4473, 96
  %v4762 = vpop.permute.xlu0 %4761
  %4763 = vrot.lane.b32.xlu0 %v4474, 96
  %v4764 = vpop.permute.xlu0 %4763
  %4765 = vrot.lane.b32.xlu0 %v4475, 96
  %v4766 = vpop.permute.xlu0 %4765
  %4767 = vrot.lane.b32.xlu0 %v4476, 96
  %v4768 = vpop.permute.xlu0 %4767
  %4769 = vrot.lane.b32.xlu0 %v4477, 96
  %v4770 = vpop.permute.xlu0 %4769
  %4771 = vrot.lane.b32.xlu0 %v4478, 96
  %v4772 = vpop.permute.xlu0 %4771
  %4773 = vrot.lane.b32.xlu0 %v4479, 96
  %v4774 = vpop.permute.xlu0 %4773
  %4775 = vrot.lane.b32.xlu0 %v4480, 96
  %v4776 = vpop.permute.xlu0 %4775
  %4777 = vrot.lane.b32.xlu0 %v4481, 96
  %v4778 = vpop.permute.xlu0 %4777
  %v4812 = vsel %vm4096, %v4651, 0
  %v4815 = vsel %vm4096, %v4652, 0
  %v4818 = vsel %vm4096, %v4653, 0
  %v4821 = vsel %vm4096, %v4654, 0
  %v4824 = vsel %vm4096, %v4655, 0
  %v4827 = vsel %vm4096, %v4656, 0
  %v4830 = vsel %vm4096, %v4657, 0
  %v4833 = vsel %vm4096, %v4658, 0
  %v4836 = vsel %vm4096, %v4659, 0
  %v4839 = vsel %vm4096, %v4660, 0
  %v4842 = vsel %vm4096, %v4661, 0
  %v4845 = vsel %vm4096, %v4662, 0
  %v4848 = vsel %vm4096, %v4663, 0
  %v4851 = vsel %vm4096, %v4664, 0
  %v4854 = vsel %vm4096, %v4665, 0
  %v4857 = vsel %vm4096, %v4666, 0
  %4859 = vmatprep.subr.bf16.mxu0 0
  %4860 = vmatpush1.bf16.msra.mxu0 0
  %4861 = vmatprep.subr.bf16.mxu0 0
  %4862 = vmatpush1.bf16.msra.mxu0 0
  %4863 = vmatprep.subr.bf16.mxu0 0
  %4864 = vmatpush1.bf16.msra.mxu0 0
  %4865 = vmatprep.subr.bf16.mxu0 0
  %4866 = vmatpush1.bf16.msra.mxu0 0
  %4867 = vmatprep.subr.bf16.mxu0 0
  %4868 = vmatpush1.bf16.msra.mxu0 0
  %4869 = vmatprep.subr.bf16.mxu0 0
  %4870 = vmatpush1.bf16.msra.mxu0 0
  %4871 = vmatprep.subr.bf16.mxu0 0
  %4872 = vmatpush1.bf16.msra.mxu0 %v4680
  %4873 = vmatprep.subr.bf16.mxu0 0
  %4874 = vmatpush1.bf16.msra.mxu0 %v4679
  %4875 = vmatprep.subr.bf16.mxu0 0
  %4876 = vmatpush2.bf16.msra.mxu0 0
  %4877 = vmatprep.subr.bf16.mxu0 0
  %4878 = vmatpush2.bf16.msra.mxu0 0
  %4879 = vmatprep.subr.bf16.mxu0 0
  %4880 = vmatpush2.bf16.msra.mxu0 0
  %4881 = vmatprep.subr.bf16.mxu0 0
  %4882 = vmatpush2.bf16.msra.mxu0 0
  %4883 = vmatprep.subr.bf16.mxu0 0
  %4884 = vmatpush2.bf16.msra.mxu0 0
  %4885 = vmatprep.subr.bf16.mxu0 0
  %4886 = vmatpush2.bf16.msra.mxu0 0
  %4887 = vmatprep.subr.bf16.mxu0 0
  %4888 = vmatpush2.bf16.msra.mxu0 0
  %4889 = vmatprep.subr.bf16.mxu0 0
  %4890 = vmatpush2.bf16.msra.mxu0 0
  %4891 = vmatprep.mubr.bf16.mxu0 0
  %4892 = vmatmul.mubr.bf16.gmra.mxu0 %v4812
  %v4893 = vpop.f32.mrf.mxu0
  %v4894 = vadd.f32 %v4716, %v4893
  %v4895 = vpop.f32.mrf.mxu0
  %v4896 = vpop.f32.mrf.mxu0
  %v4897 = vadd.f32 %v4718, %v4896
  %v4898 = vpop.f32.mrf.mxu0
  %4899 = vmatprep.mubr.bf16.mxu0 0
  %4900 = vmatmul.mubr.bf16.gmra.mxu0 %v4815
  %v4901 = vpop.f32.mrf.mxu0
  %v4902 = vadd.f32 %v4720, %v4901
  %v4903 = vpop.f32.mrf.mxu0
  %v4904 = vpop.f32.mrf.mxu0
  %v4905 = vadd.f32 %v4722, %v4904
  %v4906 = vpop.f32.mrf.mxu0
  %4907 = vmatprep.mubr.bf16.mxu0 0
  %4908 = vmatmul.mubr.bf16.gmra.mxu0 %v4818
  %v4909 = vpop.f32.mrf.mxu0
  %v4910 = vadd.f32 %v4724, %v4909
  %v4911 = vpop.f32.mrf.mxu0
  %v4912 = vpop.f32.mrf.mxu0
  %v4913 = vadd.f32 %v4726, %v4912
  %v4914 = vpop.f32.mrf.mxu0
  %4915 = vmatprep.mubr.bf16.mxu0 0
  %4916 = vmatmul.mubr.bf16.gmra.mxu0 %v4821
  %v4917 = vpop.f32.mrf.mxu0
  %v4918 = vadd.f32 %v4728, %v4917
  %v4919 = vpop.f32.mrf.mxu0
  %v4920 = vpop.f32.mrf.mxu0
  %v4921 = vadd.f32 %v4730, %v4920
  %v4922 = vpop.f32.mrf.mxu0
  %4923 = vmatprep.mubr.bf16.mxu0 0
  %4924 = vmatmul.mubr.bf16.gmra.mxu0 %v4824
  %v4925 = vpop.f32.mrf.mxu0
  %v4926 = vadd.f32 %v4732, %v4925
  %v4927 = vpop.f32.mrf.mxu0
  %v4928 = vpop.f32.mrf.mxu0
  %v4929 = vadd.f32 %v4734, %v4928
  %v4930 = vpop.f32.mrf.mxu0
  %4931 = vmatprep.mubr.bf16.mxu0 0
  %4932 = vmatmul.mubr.bf16.gmra.mxu0 %v4827
  %v4933 = vpop.f32.mrf.mxu0
  %v4934 = vadd.f32 %v4736, %v4933
  %v4935 = vpop.f32.mrf.mxu0
  %v4936 = vpop.f32.mrf.mxu0
  %v4937 = vadd.f32 %v4738, %v4936
  %v4938 = vpop.f32.mrf.mxu0
  %4939 = vmatprep.mubr.bf16.mxu0 0
  %4940 = vmatmul.mubr.bf16.gmra.mxu0 %v4830
  %v4941 = vpop.f32.mrf.mxu0
  %v4942 = vadd.f32 %v4740, %v4941
  %v4943 = vpop.f32.mrf.mxu0
  %v4944 = vpop.f32.mrf.mxu0
  %v4945 = vadd.f32 %v4742, %v4944
  %v4946 = vpop.f32.mrf.mxu0
  %4947 = vmatprep.mubr.bf16.mxu0 0
  %4948 = vmatmul.mubr.bf16.gmra.mxu0 %v4833
  %v4949 = vpop.f32.mrf.mxu0
  %v4950 = vadd.f32 %v4744, %v4949
  %v4951 = vpop.f32.mrf.mxu0
  %v4952 = vpop.f32.mrf.mxu0
  %v4953 = vadd.f32 %v4746, %v4952
  %v4954 = vpop.f32.mrf.mxu0
  %4955 = vmatprep.mubr.bf16.mxu0 0
  %4956 = vmatmul.mubr.bf16.gmra.mxu0 %v4836
  %v4957 = vpop.f32.mrf.mxu0
  %v4958 = vadd.f32 %v4748, %v4957
  %v4959 = vpop.f32.mrf.mxu0
  %v4960 = vpop.f32.mrf.mxu0
  %v4961 = vadd.f32 %v4750, %v4960
  %v4962 = vpop.f32.mrf.mxu0
  %4963 = vmatprep.mubr.bf16.mxu0 0
  %4964 = vmatmul.mubr.bf16.gmra.mxu0 %v4839
  %v4965 = vpop.f32.mrf.mxu0
  %v4966 = vadd.f32 %v4752, %v4965
  %v4967 = vpop.f32.mrf.mxu0
  %v4968 = vpop.f32.mrf.mxu0
  %v4969 = vadd.f32 %v4754, %v4968
  %v4970 = vpop.f32.mrf.mxu0
  %4971 = vmatprep.mubr.bf16.mxu0 0
  %4972 = vmatmul.mubr.bf16.gmra.mxu0 %v4842
  %v4973 = vpop.f32.mrf.mxu0
  %v4974 = vadd.f32 %v4756, %v4973
  %v4975 = vpop.f32.mrf.mxu0
  %v4976 = vpop.f32.mrf.mxu0
  %v4977 = vadd.f32 %v4758, %v4976
  %v4978 = vpop.f32.mrf.mxu0
  %4979 = vmatprep.mubr.bf16.mxu0 0
  %4980 = vmatmul.mubr.bf16.gmra.mxu0 %v4845
  %v4981 = vpop.f32.mrf.mxu0
  %v4982 = vadd.f32 %v4760, %v4981
  %v4983 = vpop.f32.mrf.mxu0
  %v4984 = vpop.f32.mrf.mxu0
  %v4985 = vadd.f32 %v4762, %v4984
  %v4986 = vpop.f32.mrf.mxu0
  %4987 = vmatprep.mubr.bf16.mxu0 0
  %4988 = vmatmul.mubr.bf16.gmra.mxu0 %v4848
  %v4989 = vpop.f32.mrf.mxu0
  %v4990 = vadd.f32 %v4764, %v4989
  %v4991 = vpop.f32.mrf.mxu0
  %v4992 = vpop.f32.mrf.mxu0
  %v4993 = vadd.f32 %v4766, %v4992
  %v4994 = vpop.f32.mrf.mxu0
  %4995 = vmatprep.mubr.bf16.mxu0 0
  %4996 = vmatmul.mubr.bf16.gmra.mxu0 %v4851
  %v4997 = vpop.f32.mrf.mxu0
  %v4998 = vadd.f32 %v4768, %v4997
  %v4999 = vpop.f32.mrf.mxu0
  %v5000 = vpop.f32.mrf.mxu0
  %v5001 = vadd.f32 %v4770, %v5000
  %v5002 = vpop.f32.mrf.mxu0
  %5003 = vmatprep.mubr.bf16.mxu0 0
  %5004 = vmatmul.mubr.bf16.gmra.mxu0 %v4854
  %v5005 = vpop.f32.mrf.mxu0
  %v5006 = vadd.f32 %v4772, %v5005
  %v5007 = vpop.f32.mrf.mxu0
  %v5008 = vpop.f32.mrf.mxu0
  %v5009 = vadd.f32 %v4774, %v5008
  %v5010 = vpop.f32.mrf.mxu0
  %5011 = vmatprep.mubr.bf16.mxu0 0
  %5012 = vmatmul.mubr.bf16.gmra.mxu0 %v4857
  %v5013 = vpop.f32.mrf.mxu0
  %v5014 = vadd.f32 %v4776, %v5013
  %v5015 = vpop.f32.mrf.mxu0
  %v5016 = vpop.f32.mrf.mxu0
  %v5017 = vadd.f32 %v4778, %v5016
  %v5018 = vpop.f32.mrf.mxu0
  %5019 = vdwg.mxu0
  %v5020 = vadd.f32 %v4894, %v3946
  %v5021 = vadd.f32 %v4897, %v3949
  %v5022 = vadd.f32 %v4902, %v3954
  %v5023 = vadd.f32 %v4905, %v3957
  %v5024 = vadd.f32 %v4910, %v3962
  %v5025 = vadd.f32 %v4913, %v3965
  %v5026 = vadd.f32 %v4918, %v3970
  %v5027 = vadd.f32 %v4921, %v3973
  %v5028 = vadd.f32 %v4926, %v3978
  %v5029 = vadd.f32 %v4929, %v3981
  %v5030 = vadd.f32 %v4934, %v3986
  %v5031 = vadd.f32 %v4937, %v3989
  %v5032 = vadd.f32 %v4942, %v3994
  %v5033 = vadd.f32 %v4945, %v3997
  %v5034 = vadd.f32 %v4950, %v4002
  %v5035 = vadd.f32 %v4953, %v4005
  %v5036 = vadd.f32 %v4958, %v3946
  %v5037 = vadd.f32 %v4961, %v3949
  %v5038 = vadd.f32 %v4966, %v3954
  %v5039 = vadd.f32 %v4969, %v3957
  %v5040 = vadd.f32 %v4974, %v3962
  %v5041 = vadd.f32 %v4977, %v3965
  %v5042 = vadd.f32 %v4982, %v3970
  %v5043 = vadd.f32 %v4985, %v3973
  %v5044 = vadd.f32 %v4990, %v3978
  %v5045 = vadd.f32 %v4993, %v3981
  %v5046 = vadd.f32 %v4998, %v3986
  %v5047 = vadd.f32 %v5001, %v3989
  %v5048 = vadd.f32 %v5006, %v3994
  %v5049 = vadd.f32 %v5009, %v3997
  %v5050 = vadd.f32 %v5014, %v4002
  %v5051 = vadd.f32 %v5017, %v4005
  %v5052 = vpack.c.bf16 %v5021, %v5020
  %v5053 = vpack.c.bf16 %v5023, %v5022
  %v5054 = vpack.c.bf16 %v5025, %v5024
  %v5055 = vpack.c.bf16 %v5027, %v5026
  %v5056 = vpack.c.bf16 %v5029, %v5028
  %v5057 = vpack.c.bf16 %v5031, %v5030
  %v5058 = vpack.c.bf16 %v5033, %v5032
  %v5059 = vpack.c.bf16 %v5035, %v5034
  %v5060 = vpack.c.bf16 %v5037, %v5036
  %v5061 = vpack.c.bf16 %v5039, %v5038
  %v5062 = vpack.c.bf16 %v5041, %v5040
  %v5063 = vpack.c.bf16 %v5043, %v5042
  %v5064 = vpack.c.bf16 %v5045, %v5044
  %v5065 = vpack.c.bf16 %v5047, %v5046
  %v5066 = vpack.c.bf16 %v5049, %v5048
  %v5067 = vpack.c.bf16 %v5051, %v5050
  %v5068 = vld [vmem:[%s13] sm:$0xf]
  %v5069 = vld [vmem:[%s13 + $0x4] sm:$0xf]
  %v5070 = vld [vmem:[%s13 + $0x8] sm:$0xf]
  %v5071 = vld [vmem:[%s13 + $0xc] sm:$0xf]
  %v5076 = vunpack.c.l.b16 %v5068
  %v5077 = vunpack.c.l.b16 %v5069
  %v5078 = vunpack.c.l.b16 %v5070
  %v5079 = vunpack.c.l.b16 %v5071
  %v5080 = vpack.c.b16 %v5077, %v5076
  %v5081 = vpack.c.b16 %v5079, %v5078
  %5084 = vrot.lane.b32.xlu0 %v4450, 64
  %v5085 = vpop.permute.xlu0 %5084
  %5086 = vrot.lane.b32.xlu0 %v4451, 64
  %v5087 = vpop.permute.xlu0 %5086
  %5088 = vrot.lane.b32.xlu0 %v4452, 64
  %v5089 = vpop.permute.xlu0 %5088
  %5090 = vrot.lane.b32.xlu0 %v4453, 64
  %v5091 = vpop.permute.xlu0 %5090
  %5092 = vrot.lane.b32.xlu0 %v4454, 64
  %v5093 = vpop.permute.xlu0 %5092
  %5094 = vrot.lane.b32.xlu0 %v4455, 64
  %v5095 = vpop.permute.xlu0 %5094
  %5096 = vrot.lane.b32.xlu0 %v4456, 64
  %v5097 = vpop.permute.xlu0 %5096
  %5098 = vrot.lane.b32.xlu0 %v4457, 64
  %v5099 = vpop.permute.xlu0 %5098
  %5100 = vrot.lane.b32.xlu0 %v4458, 64
  %v5101 = vpop.permute.xlu0 %5100
  %5102 = vrot.lane.b32.xlu0 %v4459, 64
  %v5103 = vpop.permute.xlu0 %5102
  %5104 = vrot.lane.b32.xlu0 %v4460, 64
  %v5105 = vpop.permute.xlu0 %5104
  %5106 = vrot.lane.b32.xlu0 %v4461, 64
  %v5107 = vpop.permute.xlu0 %5106
  %5108 = vrot.lane.b32.xlu0 %v4462, 64
  %v5109 = vpop.permute.xlu0 %5108
  %5110 = vrot.lane.b32.xlu0 %v4463, 64
  %v5111 = vpop.permute.xlu0 %5110
  %5112 = vrot.lane.b32.xlu0 %v4464, 64
  %v5113 = vpop.permute.xlu0 %5112
  %5114 = vrot.lane.b32.xlu0 %v4465, 64
  %v5115 = vpop.permute.xlu0 %5114
  %5116 = vrot.lane.b32.xlu0 %v4466, 64
  %v5117 = vpop.permute.xlu0 %5116
  %5118 = vrot.lane.b32.xlu0 %v4467, 64
  %v5119 = vpop.permute.xlu0 %5118
  %5120 = vrot.lane.b32.xlu0 %v4468, 64
  %v5121 = vpop.permute.xlu0 %5120
  %5122 = vrot.lane.b32.xlu0 %v4469, 64
  %v5123 = vpop.permute.xlu0 %5122
  %5124 = vrot.lane.b32.xlu0 %v4470, 64
  %v5125 = vpop.permute.xlu0 %5124
  %5126 = vrot.lane.b32.xlu0 %v4471, 64
  %v5127 = vpop.permute.xlu0 %5126
  %5128 = vrot.lane.b32.xlu0 %v4472, 64
  %v5129 = vpop.permute.xlu0 %5128
  %5130 = vrot.lane.b32.xlu0 %v4473, 64
  %v5131 = vpop.permute.xlu0 %5130
  %5132 = vrot.lane.b32.xlu0 %v4474, 64
  %v5133 = vpop.permute.xlu0 %5132
  %5134 = vrot.lane.b32.xlu0 %v4475, 64
  %v5135 = vpop.permute.xlu0 %5134
  %5136 = vrot.lane.b32.xlu0 %v4476, 64
  %v5137 = vpop.permute.xlu0 %5136
  %5138 = vrot.lane.b32.xlu0 %v4477, 64
  %v5139 = vpop.permute.xlu0 %5138
  %5140 = vrot.lane.b32.xlu0 %v4478, 64
  %v5141 = vpop.permute.xlu0 %5140
  %5142 = vrot.lane.b32.xlu0 %v4479, 64
  %v5143 = vpop.permute.xlu0 %5142
  %5144 = vrot.lane.b32.xlu0 %v4480, 64
  %v5145 = vpop.permute.xlu0 %5144
  %5146 = vrot.lane.b32.xlu0 %v4481, 64
  %v5147 = vpop.permute.xlu0 %5146
  %v5181 = vsel %vm4096, %v5052, 0
  %v5184 = vsel %vm4096, %v5053, 0
  %v5187 = vsel %vm4096, %v5054, 0
  %v5190 = vsel %vm4096, %v5055, 0
  %v5193 = vsel %vm4096, %v5056, 0
  %v5196 = vsel %vm4096, %v5057, 0
  %v5199 = vsel %vm4096, %v5058, 0
  %v5202 = vsel %vm4096, %v5059, 0
  %v5205 = vsel %vm4096, %v5060, 0
  %v5208 = vsel %vm4096, %v5061, 0
  %v5211 = vsel %vm4096, %v5062, 0
  %v5214 = vsel %vm4096, %v5063, 0
  %v5217 = vsel %vm4096, %v5064, 0
  %v5220 = vsel %vm4096, %v5065, 0
  %v5223 = vsel %vm4096, %v5066, 0
  %v5226 = vsel %vm4096, %v5067, 0
  %5228 = vmatprep.subr.bf16.mxu0 0
  %5229 = vmatpush1.bf16.msra.mxu0 0
  %5230 = vmatprep.subr.bf16.mxu0 0
  %5231 = vmatpush1.bf16.msra.mxu0 0
  %5232 = vmatprep.subr.bf16.mxu0 0
  %5233 = vmatpush1.bf16.msra.mxu0 0
  %5234 = vmatprep.subr.bf16.mxu0 0
  %5235 = vmatpush1.bf16.msra.mxu0 0
  %5236 = vmatprep.subr.bf16.mxu0 0
  %5237 = vmatpush1.bf16.msra.mxu0 0
  %5238 = vmatprep.subr.bf16.mxu0 0
  %5239 = vmatpush1.bf16.msra.mxu0 0
  %5240 = vmatprep.subr.bf16.mxu0 0
  %5241 = vmatpush1.bf16.msra.mxu0 %v5081
  %5242 = vmatprep.subr.bf16.mxu0 0
  %5243 = vmatpush1.bf16.msra.mxu0 %v5080
  %5244 = vmatprep.subr.bf16.mxu0 0
  %5245 = vmatpush2.bf16.msra.mxu0 0
  %5246 = vmatprep.subr.bf16.mxu0 0
  %5247 = vmatpush2.bf16.msra.mxu0 0
  %5248 = vmatprep.subr.bf16.mxu0 0
  %5249 = vmatpush2.bf16.msra.mxu0 0
  %5250 = vmatprep.subr.bf16.mxu0 0
  %5251 = vmatpush2.bf16.msra.mxu0 0
  %5252 = vmatprep.subr.bf16.mxu0 0
  %5253 = vmatpush2.bf16.msra.mxu0 0
  %5254 = vmatprep.subr.bf16.mxu0 0
  %5255 = vmatpush2.bf16.msra.mxu0 0
  %5256 = vmatprep.subr.bf16.mxu0 0
  %5257 = vmatpush2.bf16.msra.mxu0 0
  %5258 = vmatprep.subr.bf16.mxu0 0
  %5259 = vmatpush2.bf16.msra.mxu0 0
  %5260 = vmatprep.mubr.bf16.mxu0 0
  %5261 = vmatmul.mubr.bf16.gmra.mxu0 %v5181
  %v5262 = vpop.f32.mrf.mxu0
  %v5263 = vadd.f32 %v5085, %v5262
  %v5264 = vpop.f32.mrf.mxu0
  %v5265 = vpop.f32.mrf.mxu0
  %v5266 = vadd.f32 %v5087, %v5265
  %v5267 = vpop.f32.mrf.mxu0
  %5268 = vmatprep.mubr.bf16.mxu0 0
  %5269 = vmatmul.mubr.bf16.gmra.mxu0 %v5184
  %v5270 = vpop.f32.mrf.mxu0
  %v5271 = vadd.f32 %v5089, %v5270
  %v5272 = vpop.f32.mrf.mxu0
  %v5273 = vpop.f32.mrf.mxu0
  %v5274 = vadd.f32 %v5091, %v5273
  %v5275 = vpop.f32.mrf.mxu0
  %5276 = vmatprep.mubr.bf16.mxu0 0
  %5277 = vmatmul.mubr.bf16.gmra.mxu0 %v5187
  %v5278 = vpop.f32.mrf.mxu0
  %v5279 = vadd.f32 %v5093, %v5278
  %v5280 = vpop.f32.mrf.mxu0
  %v5281 = vpop.f32.mrf.mxu0
  %v5282 = vadd.f32 %v5095, %v5281
  %v5283 = vpop.f32.mrf.mxu0
  %5284 = vmatprep.mubr.bf16.mxu0 0
  %5285 = vmatmul.mubr.bf16.gmra.mxu0 %v5190
  %v5286 = vpop.f32.mrf.mxu0
  %v5287 = vadd.f32 %v5097, %v5286
  %v5288 = vpop.f32.mrf.mxu0
  %v5289 = vpop.f32.mrf.mxu0
  %v5290 = vadd.f32 %v5099, %v5289
  %v5291 = vpop.f32.mrf.mxu0
  %5292 = vmatprep.mubr.bf16.mxu0 0
  %5293 = vmatmul.mubr.bf16.gmra.mxu0 %v5193
  %v5294 = vpop.f32.mrf.mxu0
  %v5295 = vadd.f32 %v5101, %v5294
  %v5296 = vpop.f32.mrf.mxu0
  %v5297 = vpop.f32.mrf.mxu0
  %v5298 = vadd.f32 %v5103, %v5297
  %v5299 = vpop.f32.mrf.mxu0
  %5300 = vmatprep.mubr.bf16.mxu0 0
  %5301 = vmatmul.mubr.bf16.gmra.mxu0 %v5196
  %v5302 = vpop.f32.mrf.mxu0
  %v5303 = vadd.f32 %v5105, %v5302
  %v5304 = vpop.f32.mrf.mxu0
  %v5305 = vpop.f32.mrf.mxu0
  %v5306 = vadd.f32 %v5107, %v5305
  %v5307 = vpop.f32.mrf.mxu0
  %5308 = vmatprep.mubr.bf16.mxu0 0
  %5309 = vmatmul.mubr.bf16.gmra.mxu0 %v5199
  %v5310 = vpop.f32.mrf.mxu0
  %v5311 = vadd.f32 %v5109, %v5310
  %v5312 = vpop.f32.mrf.mxu0
  %v5313 = vpop.f32.mrf.mxu0
  %v5314 = vadd.f32 %v5111, %v5313
  %v5315 = vpop.f32.mrf.mxu0
  %5316 = vmatprep.mubr.bf16.mxu0 0
  %5317 = vmatmul.mubr.bf16.gmra.mxu0 %v5202
  %v5318 = vpop.f32.mrf.mxu0
  %v5319 = vadd.f32 %v5113, %v5318
  %v5320 = vpop.f32.mrf.mxu0
  %v5321 = vpop.f32.mrf.mxu0
  %v5322 = vadd.f32 %v5115, %v5321
  %v5323 = vpop.f32.mrf.mxu0
  %5324 = vmatprep.mubr.bf16.mxu0 0
  %5325 = vmatmul.mubr.bf16.gmra.mxu0 %v5205
  %v5326 = vpop.f32.mrf.mxu0
  %v5327 = vadd.f32 %v5117, %v5326
  %v5328 = vpop.f32.mrf.mxu0
  %v5329 = vpop.f32.mrf.mxu0
  %v5330 = vadd.f32 %v5119, %v5329
  %v5331 = vpop.f32.mrf.mxu0
  %5332 = vmatprep.mubr.bf16.mxu0 0
  %5333 = vmatmul.mubr.bf16.gmra.mxu0 %v5208
  %v5334 = vpop.f32.mrf.mxu0
  %v5335 = vadd.f32 %v5121, %v5334
  %v5336 = vpop.f32.mrf.mxu0
  %v5337 = vpop.f32.mrf.mxu0
  %v5338 = vadd.f32 %v5123, %v5337
  %v5339 = vpop.f32.mrf.mxu0
  %5340 = vmatprep.mubr.bf16.mxu0 0
  %5341 = vmatmul.mubr.bf16.gmra.mxu0 %v5211
  %v5342 = vpop.f32.mrf.mxu0
  %v5343 = vadd.f32 %v5125, %v5342
  %v5344 = vpop.f32.mrf.mxu0
  %v5345 = vpop.f32.mrf.mxu0
  %v5346 = vadd.f32 %v5127, %v5345
  %v5347 = vpop.f32.mrf.mxu0
  %5348 = vmatprep.mubr.bf16.mxu0 0
  %5349 = vmatmul.mubr.bf16.gmra.mxu0 %v5214
  %v5350 = vpop.f32.mrf.mxu0
  %v5351 = vadd.f32 %v5129, %v5350
  %v5352 = vpop.f32.mrf.mxu0
  %v5353 = vpop.f32.mrf.mxu0
  %v5354 = vadd.f32 %v5131, %v5353
  %v5355 = vpop.f32.mrf.mxu0
  %5356 = vmatprep.mubr.bf16.mxu0 0
  %5357 = vmatmul.mubr.bf16.gmra.mxu0 %v5217
  %v5358 = vpop.f32.mrf.mxu0
  %v5359 = vadd.f32 %v5133, %v5358
  %v5360 = vpop.f32.mrf.mxu0
  %v5361 = vpop.f32.mrf.mxu0
  %v5362 = vadd.f32 %v5135, %v5361
  %v5363 = vpop.f32.mrf.mxu0
  %5364 = vmatprep.mubr.bf16.mxu0 0
  %5365 = vmatmul.mubr.bf16.gmra.mxu0 %v5220
  %v5366 = vpop.f32.mrf.mxu0
  %v5367 = vadd.f32 %v5137, %v5366
  %v5368 = vpop.f32.mrf.mxu0
  %v5369 = vpop.f32.mrf.mxu0
  %v5370 = vadd.f32 %v5139, %v5369
  %v5371 = vpop.f32.mrf.mxu0
  %5372 = vmatprep.mubr.bf16.mxu0 0
  %5373 = vmatmul.mubr.bf16.gmra.mxu0 %v5223
  %v5374 = vpop.f32.mrf.mxu0
  %v5375 = vadd.f32 %v5141, %v5374
  %v5376 = vpop.f32.mrf.mxu0
  %v5377 = vpop.f32.mrf.mxu0
  %v5378 = vadd.f32 %v5143, %v5377
  %v5379 = vpop.f32.mrf.mxu0
  %5380 = vmatprep.mubr.bf16.mxu0 0
  %5381 = vmatmul.mubr.bf16.gmra.mxu0 %v5226
  %v5382 = vpop.f32.mrf.mxu0
  %v5383 = vadd.f32 %v5145, %v5382
  %v5384 = vpop.f32.mrf.mxu0
  %v5385 = vpop.f32.mrf.mxu0
  %v5386 = vadd.f32 %v5147, %v5385
  %v5387 = vpop.f32.mrf.mxu0
  %5388 = vdwg.mxu0
  %v5389 = vmul.f32 %v5263, 2.0
  %v5390 = vmul.f32 %v5266, 2.0
  %v5391 = vmul.f32 %v5271, 2.0
  %v5392 = vmul.f32 %v5274, 2.0
  %v5393 = vmul.f32 %v5279, 2.0
  %v5394 = vmul.f32 %v5282, 2.0
  %v5395 = vmul.f32 %v5287, 2.0
  %v5396 = vmul.f32 %v5290, 2.0
  %v5397 = vmul.f32 %v5295, 2.0
  %v5398 = vmul.f32 %v5298, 2.0
  %v5399 = vmul.f32 %v5303, 2.0
  %v5400 = vmul.f32 %v5306, 2.0
  %v5401 = vmul.f32 %v5311, 2.0
  %v5402 = vmul.f32 %v5314, 2.0
  %v5403 = vmul.f32 %v5319, 2.0
  %v5404 = vmul.f32 %v5322, 2.0
  %v5405 = vsub.f32 %v5389, %v5327
  %v5406 = vsub.f32 %v5390, %v5330
  %v5407 = vsub.f32 %v5391, %v5335
  %v5408 = vsub.f32 %v5392, %v5338
  %v5409 = vsub.f32 %v5393, %v5343
  %v5410 = vsub.f32 %v5394, %v5346
  %v5411 = vsub.f32 %v5395, %v5351
  %v5412 = vsub.f32 %v5396, %v5354
  %v5413 = vsub.f32 %v5397, %v5359
  %v5414 = vsub.f32 %v5398, %v5362
  %v5415 = vsub.f32 %v5399, %v5367
  %v5416 = vsub.f32 %v5400, %v5370
  %v5417 = vsub.f32 %v5401, %v5375
  %v5418 = vsub.f32 %v5402, %v5378
  %v5419 = vsub.f32 %v5403, %v5383
  %v5420 = vsub.f32 %v5404, %v5386
  %5421 = vst.msk [vmem:[%s14] sm:$0xff] %vm4096, %v5405
  %5422 = vst.msk [vmem:[%s14 + $0x8] sm:$0xff] %vm4096, %v5406
  %5423 = vst.msk [vmem:[%s14 + $0x10] sm:$0xff] %vm4096, %v5407
  %5424 = vst.msk [vmem:[%s14 + $0x18] sm:$0xff] %vm4096, %v5408
  %5425 = vst.msk [vmem:[%s14 + $0x20] sm:$0xff] %vm4096, %v5409
  %5426 = vst.msk [vmem:[%s14 + $0x28] sm:$0xff] %vm4096, %v5410
  %5427 = vst.msk [vmem:[%s14 + $0x30] sm:$0xff] %vm4096, %v5411
  %5428 = vst.msk [vmem:[%s14 + $0x38] sm:$0xff] %vm4096, %v5412
  %5429 = vst.msk [vmem:[%s14 + $0x40] sm:$0xff] %vm4096, %v5413
  %5430 = vst.msk [vmem:[%s14 + $0x48] sm:$0xff] %vm4096, %v5414
  %5431 = vst.msk [vmem:[%s14 + $0x50] sm:$0xff] %vm4096, %v5415
  %5432 = vst.msk [vmem:[%s14 + $0x58] sm:$0xff] %vm4096, %v5416
  %5433 = vst.msk [vmem:[%s14 + $0x60] sm:$0xff] %vm4096, %v5417
  %5434 = vst.msk [vmem:[%s14 + $0x68] sm:$0xff] %vm4096, %v5418
  %5435 = vst.msk [vmem:[%s14 + $0x70] sm:$0xff] %vm4096, %v5419
  %5436 = vst.msk [vmem:[%s14 + $0x78] sm:$0xff] %vm4096, %v5420
  // Predicated region
  $region58: #{tpu_custom_call.1} parent=0 // pred_check
    _
  $region59: #{tpu_custom_call.1} parent=0 // pred_check_branch
    %5438 = sbr.rel (0) target = $region61
  $region60: #{tpu_custom_call.1} parent=0 // pred_region
    _
  $region61: #{tpu_custom_call.1} parent=0 // pred_fallthru
    _
  // Predicated region
  $region62: #{tpu_custom_call.1} parent=0 // pred_check
    _
  $region63: #{tpu_custom_call.1} parent=0 // pred_check_branch
    %5440 = sbr.rel (0) target = $region65
  $region64: #{tpu_custom_call.1} parent=0 // pred_region
    _
  $region65: #{tpu_custom_call.1} parent=0 // pred_fallthru
    _

</llo_original>
